<compile_context>
chip_gen: v7x
topology: tpu7x:2x2x1
jax: 0.10.0
libtpu: 0.0.40
codegen_flags: <defaults>
</compile_context>

<pallas_src>
import functools

import jax
import jax.numpy as jnp
import numpy as np
from jax.experimental import pallas as pl
from jax.experimental.pallas import tpu as pltpu


# ----------------------------- in-kernel helpers -----------------------------

def _layer_norm(v, g, b):
    """v: (L, E) f32, g/b: (1, E). eps matches nn.LayerNorm default."""
    mu = jnp.mean(v, axis=-1, keepdims=True)
    c = v - mu
    var = jnp.mean(c * c, axis=-1, keepdims=True)
    return c * jax.lax.rsqrt(var + 1e-5) * g + b


def _mha(q_in, k_in, v_in, w_ref, b_ref, wo_ref, *, num_heads, mxu_dtype):
    """Multi-head attention for one batch element.

    q_in: (Lq, E) f32, k_in/v_in: (Lk, E) f32
    w_ref:  (3, E, E)  stacked [Wq*scale | Wk | Wv] in x @ W layout (mxu_dtype)
    b_ref:  (4, 1, E)  stacked [bq*scale, bk, bv, bo] (f32)
    wo_ref: (E, E)     output projection in x @ W layout (mxu_dtype)
    """
    H = num_heads
    Lq, E = q_in.shape
    Dh = E // H
    f32 = jnp.float32

    qc = q_in.astype(mxu_dtype)
    kc = k_in.astype(mxu_dtype)
    vc = v_in.astype(mxu_dtype)

    # Lane-dense projections: full (L, E) @ (E, E) matmuls, f32 accumulation.
    # Softmax 1/sqrt(Dh) scale is pre-folded into w_ref[0] / b_ref[0].
    Q = jnp.dot(qc, w_ref[0], preferred_element_type=f32) + b_ref[0]   # (Lq, E)
    K = jnp.dot(kc, w_ref[1], preferred_element_type=f32) + b_ref[1]   # (Lk, E)
    V = jnp.dot(vc, w_ref[2], preferred_element_type=f32) + b_ref[2]   # (Lk, E)

    # Head split: static lane slices stacked along a new leading (major) axis.
    def split(m):
        return jnp.stack([m[:, h * Dh:(h + 1) * Dh] for h in range(H)], axis=0)

    Qh, Kh, Vh = split(Q), split(K), split(V)                           # (H, L, Dh)

    # Scores + numerically stable softmax (denominator reciprocal on the EUP).
    s = jnp.einsum('hqd,hkd->hqk', Qh.astype(mxu_dtype), Kh.astype(mxu_dtype),
                   preferred_element_type=f32)
    s = s - jnp.max(s, axis=-1, keepdims=True)
    p = jnp.exp(s)
    p = p * pl.reciprocal(jnp.sum(p, axis=-1, keepdims=True), approx=True)

    # Context, merge heads along lanes, then a single (E, E) output projection.
    ctx = jnp.einsum('hqk,hkd->hqd', p.astype(mxu_dtype), Vh.astype(mxu_dtype),
                     preferred_element_type=f32)                        # (H, Lq, Dh)
    ctx2d = jnp.concatenate([ctx[h] for h in range(H)], axis=-1)        # (Lq, E)
    return jnp.dot(ctx2d.astype(mxu_dtype), wo_ref[...],
                   preferred_element_type=f32) + b_ref[3]


# ----------------------------- fused decoder kernel -----------------------------

def _decoder_layer_kernel(*refs, num_heads, has_qpos, has_pos, mxu_dtype):
    refs = list(refs)
    o_ref = refs.pop()                       # single output, no scratch
    q_ref = refs.pop(0)                      # (Nb, Lq, E)
    m_ref = refs.pop(0)                      # (Nb, Lk, E)
    qp_ref = refs.pop(0) if has_qpos else None
    p_ref = refs.pop(0) if has_pos else None
    (ln_ref,
     sa_w_ref, sa_b_ref, sa_wo_ref,
     ca_w_ref, ca_b_ref, ca_wo_ref,
     w1_ref, b1_ref, w2_ref, b2_ref) = refs

    f32 = jnp.float32
    Nb = q_ref.shape[0]

    def ln(v, i):
        return _layer_norm(v, ln_ref[i:i + 1, :], ln_ref[i + 1:i + 2, :])

    # Static unroll over the batch sub-block (Nb is small: 1-2).
    for nb in range(Nb):
        x = q_ref[nb].astype(f32)            # (Lq, E)
        mem = m_ref[nb].astype(f32)          # (Lk, E)
        qp = qp_ref[nb].astype(f32) if has_qpos else None
        pp = p_ref[nb].astype(f32) if has_pos else None

        # ---- self-attention block (pre-norm), pos-add folded in ----
        xn = ln(x, 0)
        qk_in = (xn + qp) if has_qpos else xn
        att = _mha(qk_in, qk_in, xn, sa_w_ref, sa_b_ref, sa_wo_ref,
                   num_heads=num_heads, mxu_dtype=mxu_dtype)
        src1 = x + att                       # drop1 = identity (eval)

        # ---- cross-attention block ----
        s2 = ln(src1, 2)
        q_in = (s2 + qp) if has_qpos else s2
        k_in = (mem + pp) if has_pos else mem
        att2 = _mha(q_in, k_in, mem, ca_w_ref, ca_b_ref, ca_wo_ref,
                    num_heads=num_heads, mxu_dtype=mxu_dtype)
        src3 = src1 + att2                   # drop2 = identity (eval)

        # ---- MLP block (weights already in x @ W layout) ----
        s4 = ln(src3, 4)
        h = jnp.dot(s4.astype(mxu_dtype), w1_ref[...],
                    preferred_element_type=f32) + b1_ref[...]
        h = jnp.maximum(h, 0.0)              # relu
        y = jnp.dot(h.astype(mxu_dtype), w2_ref[...],
                    preferred_element_type=f32) + b2_ref[...]

        o_ref[nb] = (y + src3).astype(o_ref.dtype)


# ----------------------------- wrapper -----------------------------

def decoder_layer_forward(prepared, query_obj, memory, query_pos=None, pos=None,
                          num_heads=4, batch_block=None):
    """forward_pre semantics of the PyTorch DecoderLayer (norm_pre=True).

    query_obj: (Lq, N, E), memory: (Lk, N, E)  -- seq-first like nn.MultiheadAttention.
    Returns (Lq, N, E).
    """
    Lq, N, E = query_obj.shape
    Lk = memory.shape[0]
    dt = query_obj.dtype
    has_qpos = query_pos is not None
    has_pos = pos is not None
    mxu_dtype = prepared['attn'][0].dtype    # weight dtype decides the MXU operand dtype

    # Batch sub-block per grid step: amortizes per-step pipeline overhead while keeping
    # >=2 grid steps (when possible) so v7x's two TensorCores both get work.
    if batch_block is None:
        batch_block = N // 2 if (N >= 2 and N % 2 == 0) else 1
    if N % batch_block != 0:
        batch_block = 1
    Nb = batch_block

    # Present batch-first views so batch becomes the (parallel) grid axis.
    qb = jnp.transpose(query_obj, (1, 0, 2))
    mb = jnp.transpose(memory, (1, 0, 2))

    sa_w, sa_b, sa_wo = prepared['attn']
    ca_w, ca_b, ca_wo = prepared['multi']
    w1, b1, w2, b2 = prepared['mlp']
    weights = (prepared['ln'], sa_w, sa_b, sa_wo, ca_w, ca_b, ca_wo, w1, b1, w2, b2)

    def rep(arr):   # whole-array (replicated) block; resident across the grid
        nd = arr.ndim
        return pl.BlockSpec(arr.shape, lambda n, _nd=nd: (0,) * _nd)

    act_q = pl.BlockSpec((Nb, Lq, E), lambda n: (n, 0, 0))
    act_m = pl.BlockSpec((Nb, Lk, E), lambda n: (n, 0, 0))

    inputs = [qb, mb]
    in_specs = [act_q, act_m]
    if has_qpos:
        inputs.append(jnp.transpose(query_pos, (1, 0, 2)))
        in_specs.append(act_q)
    if has_pos:
        inputs.append(jnp.transpose(pos, (1, 0, 2)))
        in_specs.append(act_m)
    inputs += list(weights)
    in_specs += [rep(w) for w in weights]

    kern = functools.partial(_decoder_layer_kernel, num_heads=num_heads,
                             has_qpos=has_qpos, has_pos=has_pos, mxu_dtype=mxu_dtype)

    out = pl.pallas_call(
        kern,
        out_shape=jax.ShapeDtypeStruct((N, Lq, E), dt),
        grid=(N // Nb,),
        in_specs=in_specs,
        out_specs=act_q,
        compiler_params=pltpu.CompilerParams(
            dimension_semantics=("parallel",),       # v7x: 2 TCs split the batch
            vmem_limit_bytes=32 * 1024 * 1024),
    )(*inputs)

    return jnp.transpose(out, (1, 0, 2))             # back to (Lq, N, E)


# ----------------------------- param prep (one-time, host side) -----------------------------

def prepare_params(params, num_heads, mxu_dtype=jnp.bfloat16):
    """Convert PyTorch-convention params into kernel layout:
       * weights pre-transposed to x @ W layout and stored in the MXU operand dtype,
       * Q/K/V weights stacked as (3, E, E) with the 1/sqrt(Dh) scale folded into Q,
       * per-attention biases packed as (4, 1, E) = [bq*scale, bk, bv, bo] (f32),
       * 6 LayerNorm vectors packed as one (6, E) array (f32)."""
    E = params['ln1_g'].shape[0]
    Dh = E // num_heads
    scale = 1.0 / float(np.sqrt(Dh))

    def prep_attn(p):
        wq, wk, wv, wo, bq, bk, bv, bo = p
        w_in = jnp.stack([wq.T * scale, wk.T, wv.T]).astype(mxu_dtype)       # (3, E, E)
        b_in = jnp.stack([bq * scale, bk, bv, bo]).reshape(4, 1, E).astype(jnp.float32)
        return w_in, b_in, wo.T.astype(mxu_dtype)

    ln = jnp.stack([params['ln1_g'], params['ln1_b'],
                    params['ln2_g'], params['ln2_b'],
                    params['ln3_g'], params['ln3_b']]).astype(jnp.float32)   # (6, E)

    w1, b1, w2, b2 = params['mlp']
    return {
        'attn': prep_attn(params['attn']),
        'multi': prep_attn(params['multi']),
        'ln': ln,
        'mlp': (w1.T.astype(mxu_dtype), b1.reshape(1, -1).astype(jnp.float32),
                w2.T.astype(mxu_dtype), b2.reshape(1, -1).astype(jnp.float32)),
    }


# ----------------------------- pure-JAX reference (f32) -----------------------------

def _ref_ln(x, g, b):
    m = x.mean(-1, keepdims=True)
    v = ((x - m) ** 2).mean(-1, keepdims=True)
    return (x - m) / jnp.sqrt(v + 1e-5) * g + b


def _ref_mha(q, k, v, params, H):
    wq, wk, wv, wo, bq, bk, bv, bo = params
    N, Lq, E = q.shape
    Dh = E // H
    Q = (q @ wq.T + bq).reshape(N, Lq, H, Dh).transpose(0, 2, 1, 3)
    K = (k @ wk.T + bk).reshape(N, -1, H, Dh).transpose(0, 2, 1, 3)
    V = (v @ wv.T + bv).reshape(N, -1, H, Dh).transpose(0, 2, 1, 3)
    s = jnp.einsum('nhqd,nhkd->nhqk', Q, K) / jnp.sqrt(Dh)
    p = jax.nn.softmax(s, axis=-1)
    o = jnp.einsum('nhqk,nhkd->nhqd', p, V).transpose(0, 2, 1, 3).reshape(N, Lq, E)
    return o @ wo.T + bo


def _ref_forward(params, query_obj, memory, query_pos, pos, H):
    qb = jnp.transpose(query_obj, (1, 0, 2))
    mb = jnp.transpose(memory, (1, 0, 2))
    qpb = jnp.transpose(query_pos, (1, 0, 2))
    pb = jnp.transpose(pos, (1, 0, 2))
    qn = _ref_ln(qb, params['ln1_g'], params['ln1_b'])
    att = _ref_mha(qn + qpb, qn + qpb, qn, params['attn'], H)
    src1 = qb + att
    src2 = _ref_ln(src1, params['ln2_g'], params['ln2_b'])
    att2 = _ref_mha(src2 + qpb, mb + pb, mb, params['multi'], H)
    src3 = src1 + att2
    src4 = _ref_ln(src3, params['ln3_g'], params['ln3_b'])
    w1, b1, w2, b2 = params['mlp']
    out = jnp.maximum(src4 @ w1.T + b1, 0.0) @ w2.T + b2 + src3
    return jnp.transpose(out, (1, 0, 2))


# ----------------------------- param init / main -----------------------------

def init_params(key, E, mlp_dim):
    ks = jax.random.split(key, 32)
    w = lambda k, shape, s=0.1: (s * jax.random.normal(k, shape)).astype(jnp.float32)

    def mha_params(kset):
        return (w(kset[0], (E, E)), w(kset[1], (E, E)), w(kset[2], (E, E)),
                w(kset[3], (E, E)),
                w(kset[4], (E,)), w(kset[5], (E,)), w(kset[6], (E,)), w(kset[7], (E,)))

    return {
        'attn': mha_params(ks[0:8]),
        'multi': mha_params(ks[8:16]),
        'ln1_g': jnp.ones((E,), jnp.float32), 'ln1_b': jnp.zeros((E,), jnp.float32),
        'ln2_g': jnp.ones((E,), jnp.float32), 'ln2_b': jnp.zeros((E,), jnp.float32),
        'ln3_g': jnp.ones((E,), jnp.float32), 'ln3_b': jnp.zeros((E,), jnp.float32),
        'mlp': (w(ks[16], (mlp_dim, E)), w(ks[17], (mlp_dim,)),
                w(ks[18], (E, mlp_dim)), w(ks[19], (E,))),
    }


if __name__ == "__main__":
    E, H, MLP = 32, 4, 64
    Lq, Lk, N = 8, 16, 4

    key = jax.random.PRNGKey(0)
    kp, k1, k2, k3, k4 = jax.random.split(key, 5)
    params = init_params(kp, E, MLP)
    prepared = prepare_params(params, H, mxu_dtype=jnp.bfloat16)

    query_obj = jax.random.normal(k1, (Lq, N, E), jnp.float32)
    memory = jax.random.normal(k2, (Lk, N, E), jnp.float32)
    query_pos = 0.1 * jax.random.normal(k3, (Lq, N, E), jnp.float32)
    pos = 0.1 * jax.random.normal(k4, (Lk, N, E), jnp.float32)

    fwd = jax.jit(functools.partial(decoder_layer_forward, num_heads=H))
    out = fwd(prepared, query_obj, memory, query_pos, pos)
    out = jax.block_until_ready(out)

    # bf16 MXU operands (f32 accumulation) -> tolerance relaxed vs. the pure-f32 reference.
    ref = _ref_forward(params, query_obj, memory, query_pos, pos, H)
    np.testing.assert_allclose(np.asarray(out), np.asarray(ref), rtol=2e-2, atol=2e-2)

    print("KERNEL_OK")
</pallas_src>

<mosaic_0001>
module attributes {stable_mosaic.version = 11 : i64} {
  func.func @_decoder_layer_kernel(%arg0: i32, %arg1: memref<2x8x32xf32, #tpu.memory_space<vmem>>, %arg2: memref<2x16x32xf32, #tpu.memory_space<vmem>>, %arg3: memref<2x8x32xf32, #tpu.memory_space<vmem>>, %arg4: memref<2x16x32xf32, #tpu.memory_space<vmem>>, %arg5: memref<6x32xf32, #tpu.memory_space<vmem>>, %arg6: memref<3x32x32xbf16, #tpu.memory_space<vmem>>, %arg7: memref<4x1x32xf32, #tpu.memory_space<vmem>>, %arg8: memref<32x32xbf16, #tpu.memory_space<vmem>>, %arg9: memref<3x32x32xbf16, #tpu.memory_space<vmem>>, %arg10: memref<4x1x32xf32, #tpu.memory_space<vmem>>, %arg11: memref<32x32xbf16, #tpu.memory_space<vmem>>, %arg12: memref<32x64xbf16, #tpu.memory_space<vmem>>, %arg13: memref<1x64xf32, #tpu.memory_space<vmem>>, %arg14: memref<64x32xbf16, #tpu.memory_space<vmem>>, %arg15: memref<1x32xf32, #tpu.memory_space<vmem>>, %arg16: memref<2x8x32xf32, #tpu.memory_space<vmem>>) attributes {dimension_semantics = [#tpu.dimension_semantics<parallel>], iteration_bounds = array<i64: 2>, scalar_prefetch = 0 : i64, scratch_operands = 0 : i64, tpu.core_type = #tpu.core_type<tc>, window_params = [{transform_indices = @transform_0, window_bounds = array<i64: 2, 8, 32>}, {transform_indices = @transform_1, window_bounds = array<i64: 2, 16, 32>}, {transform_indices = @transform_2, window_bounds = array<i64: 2, 8, 32>}, {transform_indices = @transform_3, window_bounds = array<i64: 2, 16, 32>}, {pipeline_mode = #tpu.pipeline_mode<synchronous>, transform_indices = @transform_4, window_bounds = array<i64: 6, 32>}, {pipeline_mode = #tpu.pipeline_mode<synchronous>, transform_indices = @transform_5, window_bounds = array<i64: 3, 32, 32>}, {pipeline_mode = #tpu.pipeline_mode<synchronous>, transform_indices = @transform_6, window_bounds = array<i64: 4, 1, 32>}, {pipeline_mode = #tpu.pipeline_mode<synchronous>, transform_indices = @transform_7, window_bounds = array<i64: 32, 32>}, {pipeline_mode = #tpu.pipeline_mode<synchronous>, transform_indices = @transform_8, window_bounds = array<i64: 3, 32, 32>}, {pipeline_mode = #tpu.pipeline_mode<synchronous>, transform_indices = @transform_9, window_bounds = array<i64: 4, 1, 32>}, {pipeline_mode = #tpu.pipeline_mode<synchronous>, transform_indices = @transform_10, window_bounds = array<i64: 32, 32>}, {pipeline_mode = #tpu.pipeline_mode<synchronous>, transform_indices = @transform_11, window_bounds = array<i64: 32, 64>}, {pipeline_mode = #tpu.pipeline_mode<synchronous>, transform_indices = @transform_12, window_bounds = array<i64: 1, 64>}, {pipeline_mode = #tpu.pipeline_mode<synchronous>, transform_indices = @transform_13, window_bounds = array<i64: 64, 32>}, {pipeline_mode = #tpu.pipeline_mode<synchronous>, transform_indices = @transform_14, window_bounds = array<i64: 1, 32>}, {transform_indices = @transform_15, window_bounds = array<i64: 2, 8, 32>}]} {
    %c0 = arith.constant 0 : index
    %c0_0 = arith.constant 0 : index
    %c0_1 = arith.constant 0 : index
    %0 = vector.load %arg1[%c0, %c0_0, %c0_1] : memref<2x8x32xf32, #tpu.memory_space<vmem>>, vector<1x8x32xf32>
    %1 = vector.shape_cast %0 : vector<1x8x32xf32> to vector<8x32xf32>
    %c0_2 = arith.constant 0 : index
    %c0_3 = arith.constant 0 : index
    %c0_4 = arith.constant 0 : index
    %2 = vector.load %arg2[%c0_2, %c0_3, %c0_4] : memref<2x16x32xf32, #tpu.memory_space<vmem>>, vector<1x16x32xf32>
    %3 = vector.shape_cast %2 : vector<1x16x32xf32> to vector<16x32xf32>
    %c0_5 = arith.constant 0 : index
    %c0_6 = arith.constant 0 : index
    %c0_7 = arith.constant 0 : index
    %4 = vector.load %arg3[%c0_5, %c0_6, %c0_7] : memref<2x8x32xf32, #tpu.memory_space<vmem>>, vector<1x8x32xf32>
    %5 = vector.shape_cast %4 : vector<1x8x32xf32> to vector<8x32xf32>
    %c0_8 = arith.constant 0 : index
    %c0_9 = arith.constant 0 : index
    %c0_10 = arith.constant 0 : index
    %6 = vector.load %arg4[%c0_8, %c0_9, %c0_10] : memref<2x16x32xf32, #tpu.memory_space<vmem>>, vector<1x16x32xf32>
    %7 = vector.shape_cast %6 : vector<1x16x32xf32> to vector<16x32xf32>
    %c0_11 = arith.constant 0 : index
    %c0_12 = arith.constant 0 : index
    %8 = vector.load %arg5[%c0_11, %c0_12] : memref<6x32xf32, #tpu.memory_space<vmem>>, vector<1x32xf32>
    %c1 = arith.constant 1 : index
    %c0_13 = arith.constant 0 : index
    %9 = vector.load %arg5[%c1, %c0_13] : memref<6x32xf32, #tpu.memory_space<vmem>>, vector<1x32xf32>
    %cst = arith.constant dense<0.000000e+00> : vector<8xf32>
    %10 = vector.multi_reduction <add>, %1, %cst [1] : vector<8x32xf32> to vector<8xf32>
    %11 = vector.shape_cast %10 : vector<8xf32> to vector<8x1xf32>
    %cst_14 = arith.constant 3.200000e+01 : f32
    %12 = vector.broadcast %cst_14 : f32 to vector<8x1xf32>
    %13 = arith.divf %11, %12 : vector<8x1xf32>
    %14 = vector.broadcast %13 : vector<8x1xf32> to vector<8x32xf32>
    %15 = arith.subf %1, %14 : vector<8x32xf32>
    %16 = arith.mulf %15, %15 : vector<8x32xf32>
    %cst_15 = arith.constant dense<0.000000e+00> : vector<8xf32>
    %17 = vector.multi_reduction <add>, %16, %cst_15 [1] : vector<8x32xf32> to vector<8xf32>
    %18 = vector.shape_cast %17 : vector<8xf32> to vector<8x1xf32>
    %cst_16 = arith.constant 3.200000e+01 : f32
    %19 = vector.broadcast %cst_16 : f32 to vector<8x1xf32>
    %20 = arith.divf %18, %19 : vector<8x1xf32>
    %cst_17 = arith.constant 9.99999974E-6 : f32
    %21 = vector.broadcast %cst_17 : f32 to vector<8x1xf32>
    %22 = arith.addf %20, %21 : vector<8x1xf32>
    %23 = math.rsqrt %22 : vector<8x1xf32>
    %24 = vector.broadcast %23 : vector<8x1xf32> to vector<8x32xf32>
    %25 = arith.mulf %15, %24 : vector<8x32xf32>
    %26 = vector.broadcast %8 : vector<1x32xf32> to vector<8x32xf32>
    %27 = arith.mulf %25, %26 : vector<8x32xf32>
    %28 = vector.broadcast %9 : vector<1x32xf32> to vector<8x32xf32>
    %29 = arith.addf %27, %28 : vector<8x32xf32>
    %30 = arith.addf %29, %5 : vector<8x32xf32>
    %31 = arith.truncf %30 : vector<8x32xf32> to vector<8x32xbf16>
    %32 = arith.truncf %30 : vector<8x32xf32> to vector<8x32xbf16>
    %33 = arith.truncf %29 : vector<8x32xf32> to vector<8x32xbf16>
    %c0_18 = arith.constant 0 : index
    %c0_19 = arith.constant 0 : index
    %c0_20 = arith.constant 0 : index
    %34 = vector.load %arg6[%c0_18, %c0_19, %c0_20] : memref<3x32x32xbf16, #tpu.memory_space<vmem>>, vector<1x32x32xbf16>
    %35 = vector.shape_cast %34 : vector<1x32x32xbf16> to vector<32x32xbf16>
    %cst_21 = arith.constant dense<0.000000e+00> : vector<8x32xf32>
    %36 = tpu.matmul %31, %35, %cst_21 {dimension_numbers = #tpu.dot_dimension_numbers<[1], [0], [0], [1], [0, 0, 1, 1], [], []>} : vector<8x32xbf16>, vector<32x32xbf16>, vector<8x32xf32> -> vector<8x32xf32>
    %c0_22 = arith.constant 0 : index
    %c0_23 = arith.constant 0 : index
    %c0_24 = arith.constant 0 : index
    %37 = vector.load %arg7[%c0_22, %c0_23, %c0_24] : memref<4x1x32xf32, #tpu.memory_space<vmem>>, vector<1x1x32xf32>
    %38 = vector.shape_cast %37 : vector<1x1x32xf32> to vector<1x32xf32>
    %39 = vector.broadcast %38 : vector<1x32xf32> to vector<8x32xf32>
    %40 = arith.addf %36, %39 : vector<8x32xf32>
    %c1_25 = arith.constant 1 : index
    %c0_26 = arith.constant 0 : index
    %c0_27 = arith.constant 0 : index
    %41 = vector.load %arg6[%c1_25, %c0_26, %c0_27] : memref<3x32x32xbf16, #tpu.memory_space<vmem>>, vector<1x32x32xbf16>
    %42 = vector.shape_cast %41 : vector<1x32x32xbf16> to vector<32x32xbf16>
    %cst_28 = arith.constant dense<0.000000e+00> : vector<8x32xf32>
    %43 = tpu.matmul %32, %42, %cst_28 {dimension_numbers = #tpu.dot_dimension_numbers<[1], [0], [0], [1], [0, 0, 1, 1], [], []>} : vector<8x32xbf16>, vector<32x32xbf16>, vector<8x32xf32> -> vector<8x32xf32>
    %c1_29 = arith.constant 1 : index
    %c0_30 = arith.constant 0 : index
    %c0_31 = arith.constant 0 : index
    %44 = vector.load %arg7[%c1_29, %c0_30, %c0_31] : memref<4x1x32xf32, #tpu.memory_space<vmem>>, vector<1x1x32xf32>
    %45 = vector.shape_cast %44 : vector<1x1x32xf32> to vector<1x32xf32>
    %46 = vector.broadcast %45 : vector<1x32xf32> to vector<8x32xf32>
    %47 = arith.addf %43, %46 : vector<8x32xf32>
    %c2 = arith.constant 2 : index
    %c0_32 = arith.constant 0 : index
    %c0_33 = arith.constant 0 : index
    %48 = vector.load %arg6[%c2, %c0_32, %c0_33] : memref<3x32x32xbf16, #tpu.memory_space<vmem>>, vector<1x32x32xbf16>
    %49 = vector.shape_cast %48 : vector<1x32x32xbf16> to vector<32x32xbf16>
    %cst_34 = arith.constant dense<0.000000e+00> : vector<8x32xf32>
    %50 = tpu.matmul %33, %49, %cst_34 {dimension_numbers = #tpu.dot_dimension_numbers<[1], [0], [0], [1], [0, 0, 1, 1], [], []>} : vector<8x32xbf16>, vector<32x32xbf16>, vector<8x32xf32> -> vector<8x32xf32>
    %c2_35 = arith.constant 2 : index
    %c0_36 = arith.constant 0 : index
    %c0_37 = arith.constant 0 : index
    %51 = vector.load %arg7[%c2_35, %c0_36, %c0_37] : memref<4x1x32xf32, #tpu.memory_space<vmem>>, vector<1x1x32xf32>
    %52 = vector.shape_cast %51 : vector<1x1x32xf32> to vector<1x32xf32>
    %53 = vector.broadcast %52 : vector<1x32xf32> to vector<8x32xf32>
    %54 = arith.addf %50, %53 : vector<8x32xf32>
    %55 = vector.extract_strided_slice %40 {offsets = [0, 0], sizes = [8, 8], strides = [1, 1]} : vector<8x32xf32> to vector<8x8xf32>
    %56 = vector.extract_strided_slice %40 {offsets = [0, 8], sizes = [8, 8], strides = [1, 1]} : vector<8x32xf32> to vector<8x8xf32>
    %57 = vector.extract_strided_slice %40 {offsets = [0, 16], sizes = [8, 8], strides = [1, 1]} : vector<8x32xf32> to vector<8x8xf32>
    %58 = vector.extract_strided_slice %40 {offsets = [0, 24], sizes = [8, 8], strides = [1, 1]} : vector<8x32xf32> to vector<8x8xf32>
    %59 = vector.shape_cast %55 : vector<8x8xf32> to vector<1x8x8xf32>
    %60 = vector.shape_cast %56 : vector<8x8xf32> to vector<1x8x8xf32>
    %61 = vector.shape_cast %57 : vector<8x8xf32> to vector<1x8x8xf32>
    %62 = vector.shape_cast %58 : vector<8x8xf32> to vector<1x8x8xf32>
    %63 = tpu.concatenate %59, %60, %61, %62 in 0 : vector<1x8x8xf32>, vector<1x8x8xf32>, vector<1x8x8xf32>, vector<1x8x8xf32> -> vector<4x8x8xf32>
    %64 = vector.extract_strided_slice %47 {offsets = [0, 0], sizes = [8, 8], strides = [1, 1]} : vector<8x32xf32> to vector<8x8xf32>
    %65 = vector.extract_strided_slice %47 {offsets = [0, 8], sizes = [8, 8], strides = [1, 1]} : vector<8x32xf32> to vector<8x8xf32>
    %66 = vector.extract_strided_slice %47 {offsets = [0, 16], sizes = [8, 8], strides = [1, 1]} : vector<8x32xf32> to vector<8x8xf32>
    %67 = vector.extract_strided_slice %47 {offsets = [0, 24], sizes = [8, 8], strides = [1, 1]} : vector<8x32xf32> to vector<8x8xf32>
    %68 = vector.shape_cast %64 : vector<8x8xf32> to vector<1x8x8xf32>
    %69 = vector.shape_cast %65 : vector<8x8xf32> to vector<1x8x8xf32>
    %70 = vector.shape_cast %66 : vector<8x8xf32> to vector<1x8x8xf32>
    %71 = vector.shape_cast %67 : vector<8x8xf32> to vector<1x8x8xf32>
    %72 = tpu.concatenate %68, %69, %70, %71 in 0 : vector<1x8x8xf32>, vector<1x8x8xf32>, vector<1x8x8xf32>, vector<1x8x8xf32> -> vector<4x8x8xf32>
    %73 = vector.extract_strided_slice %54 {offsets = [0, 0], sizes = [8, 8], strides = [1, 1]} : vector<8x32xf32> to vector<8x8xf32>
    %74 = vector.extract_strided_slice %54 {offsets = [0, 8], sizes = [8, 8], strides = [1, 1]} : vector<8x32xf32> to vector<8x8xf32>
    %75 = vector.extract_strided_slice %54 {offsets = [0, 16], sizes = [8, 8], strides = [1, 1]} : vector<8x32xf32> to vector<8x8xf32>
    %76 = vector.extract_strided_slice %54 {offsets = [0, 24], sizes = [8, 8], strides = [1, 1]} : vector<8x32xf32> to vector<8x8xf32>
    %77 = vector.shape_cast %73 : vector<8x8xf32> to vector<1x8x8xf32>
    %78 = vector.shape_cast %74 : vector<8x8xf32> to vector<1x8x8xf32>
    %79 = vector.shape_cast %75 : vector<8x8xf32> to vector<1x8x8xf32>
    %80 = vector.shape_cast %76 : vector<8x8xf32> to vector<1x8x8xf32>
    %81 = tpu.concatenate %77, %78, %79, %80 in 0 : vector<1x8x8xf32>, vector<1x8x8xf32>, vector<1x8x8xf32>, vector<1x8x8xf32> -> vector<4x8x8xf32>
    %82 = arith.truncf %63 : vector<4x8x8xf32> to vector<4x8x8xbf16>
    %83 = arith.truncf %72 : vector<4x8x8xf32> to vector<4x8x8xbf16>
    "tpu.trace_start"() <{level = 10 : i32, message = "hqd,hkd->hqk"}> : () -> ()
    %cst_38 = arith.constant dense<0.000000e+00> : vector<4x8x8xf32>
    %84 = tpu.matmul %82, %83, %cst_38 {dimension_numbers = #tpu.dot_dimension_numbers<[2], [2], [1], [1], [0, 0, 0, 1, 1, 1], [0], [0]>} : vector<4x8x8xbf16>, vector<4x8x8xbf16>, vector<4x8x8xf32> -> vector<4x8x8xf32>
    "tpu.trace_stop"() : () -> ()
    %cst_39 = arith.constant dense<0xFF800000> : vector<4x8xf32>
    %85 = vector.multi_reduction <maximumf>, %84, %cst_39 [2] : vector<4x8x8xf32> to vector<4x8xf32>
    %86 = vector.shape_cast %85 : vector<4x8xf32> to vector<4x8x1xf32>
    %87 = vector.broadcast %86 : vector<4x8x1xf32> to vector<4x8x8xf32>
    %88 = arith.subf %84, %87 : vector<4x8x8xf32>
    %89 = math.exp %88 : vector<4x8x8xf32>
    %cst_40 = arith.constant dense<0.000000e+00> : vector<4x8xf32>
    %90 = vector.multi_reduction <add>, %89, %cst_40 [2] : vector<4x8x8xf32> to vector<4x8xf32>
    %91 = vector.shape_cast %90 : vector<4x8xf32> to vector<4x8x1xf32>
    %92 = tpu.reciprocal %91 {approx = true} : vector<4x8x1xf32> -> vector<4x8x1xf32>
    %93 = vector.broadcast %92 : vector<4x8x1xf32> to vector<4x8x8xf32>
    %94 = arith.mulf %89, %93 : vector<4x8x8xf32>
    %95 = arith.truncf %94 : vector<4x8x8xf32> to vector<4x8x8xbf16>
    %96 = arith.truncf %81 : vector<4x8x8xf32> to vector<4x8x8xbf16>
    "tpu.trace_start"() <{level = 10 : i32, message = "hqk,hkd->hqd"}> : () -> ()
    %cst_41 = arith.constant dense<0.000000e+00> : vector<4x8x8xf32>
    %97 = tpu.matmul %95, %96, %cst_41 {dimension_numbers = #tpu.dot_dimension_numbers<[2], [1], [1], [2], [0, 0, 0, 1, 1, 2], [0], [0]>} : vector<4x8x8xbf16>, vector<4x8x8xbf16>, vector<4x8x8xf32> -> vector<4x8x8xf32>
    "tpu.trace_stop"() : () -> ()
    %98 = vector.extract_strided_slice %97 {offsets = [0, 0, 0], sizes = [1, 8, 8], strides = [1, 1, 1]} : vector<4x8x8xf32> to vector<1x8x8xf32>
    %99 = vector.shape_cast %98 : vector<1x8x8xf32> to vector<8x8xf32>
    %100 = vector.extract_strided_slice %97 {offsets = [1, 0, 0], sizes = [1, 8, 8], strides = [1, 1, 1]} : vector<4x8x8xf32> to vector<1x8x8xf32>
    %101 = vector.shape_cast %100 : vector<1x8x8xf32> to vector<8x8xf32>
    %102 = vector.extract_strided_slice %97 {offsets = [2, 0, 0], sizes = [1, 8, 8], strides = [1, 1, 1]} : vector<4x8x8xf32> to vector<1x8x8xf32>
    %103 = vector.shape_cast %102 : vector<1x8x8xf32> to vector<8x8xf32>
    %104 = vector.extract_strided_slice %97 {offsets = [3, 0, 0], sizes = [1, 8, 8], strides = [1, 1, 1]} : vector<4x8x8xf32> to vector<1x8x8xf32>
    %105 = vector.shape_cast %104 : vector<1x8x8xf32> to vector<8x8xf32>
    %106 = tpu.concatenate %99, %101, %103, %105 in 1 : vector<8x8xf32>, vector<8x8xf32>, vector<8x8xf32>, vector<8x8xf32> -> vector<8x32xf32>
    %107 = arith.truncf %106 : vector<8x32xf32> to vector<8x32xbf16>
    %c0_42 = arith.constant 0 : index
    %c0_43 = arith.constant 0 : index
    %108 = vector.load %arg8[%c0_42, %c0_43] : memref<32x32xbf16, #tpu.memory_space<vmem>>, vector<32x32xbf16>
    %cst_44 = arith.constant dense<0.000000e+00> : vector<8x32xf32>
    %109 = tpu.matmul %107, %108, %cst_44 {dimension_numbers = #tpu.dot_dimension_numbers<[1], [0], [0], [1], [0, 0, 1, 1], [], []>} : vector<8x32xbf16>, vector<32x32xbf16>, vector<8x32xf32> -> vector<8x32xf32>
    %c3 = arith.constant 3 : index
    %c0_45 = arith.constant 0 : index
    %c0_46 = arith.constant 0 : index
    %110 = vector.load %arg7[%c3, %c0_45, %c0_46] : memref<4x1x32xf32, #tpu.memory_space<vmem>>, vector<1x1x32xf32>
    %111 = vector.shape_cast %110 : vector<1x1x32xf32> to vector<1x32xf32>
    %112 = vector.broadcast %111 : vector<1x32xf32> to vector<8x32xf32>
    %113 = arith.addf %109, %112 : vector<8x32xf32>
    %114 = arith.addf %1, %113 : vector<8x32xf32>
    %c2_47 = arith.constant 2 : index
    %c0_48 = arith.constant 0 : index
    %115 = vector.load %arg5[%c2_47, %c0_48] : memref<6x32xf32, #tpu.memory_space<vmem>>, vector<1x32xf32>
    %c3_49 = arith.constant 3 : index
    %c0_50 = arith.constant 0 : index
    %116 = vector.load %arg5[%c3_49, %c0_50] : memref<6x32xf32, #tpu.memory_space<vmem>>, vector<1x32xf32>
    %cst_51 = arith.constant dense<0.000000e+00> : vector<8xf32>
    %117 = vector.multi_reduction <add>, %114, %cst_51 [1] : vector<8x32xf32> to vector<8xf32>
    %118 = vector.shape_cast %117 : vector<8xf32> to vector<8x1xf32>
    %cst_52 = arith.constant 3.200000e+01 : f32
    %119 = vector.broadcast %cst_52 : f32 to vector<8x1xf32>
    %120 = arith.divf %118, %119 : vector<8x1xf32>
    %121 = vector.broadcast %120 : vector<8x1xf32> to vector<8x32xf32>
    %122 = arith.subf %114, %121 : vector<8x32xf32>
    %123 = arith.mulf %122, %122 : vector<8x32xf32>
    %cst_53 = arith.constant dense<0.000000e+00> : vector<8xf32>
    %124 = vector.multi_reduction <add>, %123, %cst_53 [1] : vector<8x32xf32> to vector<8xf32>
    %125 = vector.shape_cast %124 : vector<8xf32> to vector<8x1xf32>
    %cst_54 = arith.constant 3.200000e+01 : f32
    %126 = vector.broadcast %cst_54 : f32 to vector<8x1xf32>
    %127 = arith.divf %125, %126 : vector<8x1xf32>
    %cst_55 = arith.constant 9.99999974E-6 : f32
    %128 = vector.broadcast %cst_55 : f32 to vector<8x1xf32>
    %129 = arith.addf %127, %128 : vector<8x1xf32>
    %130 = math.rsqrt %129 : vector<8x1xf32>
    %131 = vector.broadcast %130 : vector<8x1xf32> to vector<8x32xf32>
    %132 = arith.mulf %122, %131 : vector<8x32xf32>
    %133 = vector.broadcast %115 : vector<1x32xf32> to vector<8x32xf32>
    %134 = arith.mulf %132, %133 : vector<8x32xf32>
    %135 = vector.broadcast %116 : vector<1x32xf32> to vector<8x32xf32>
    %136 = arith.addf %134, %135 : vector<8x32xf32>
    %137 = arith.addf %136, %5 : vector<8x32xf32>
    %138 = arith.addf %3, %7 : vector<16x32xf32>
    %139 = arith.truncf %137 : vector<8x32xf32> to vector<8x32xbf16>
    %140 = arith.truncf %138 : vector<16x32xf32> to vector<16x32xbf16>
    %141 = arith.truncf %3 : vector<16x32xf32> to vector<16x32xbf16>
    %c0_56 = arith.constant 0 : index
    %c0_57 = arith.constant 0 : index
    %c0_58 = arith.constant 0 : index
    %142 = vector.load %arg9[%c0_56, %c0_57, %c0_58] : memref<3x32x32xbf16, #tpu.memory_space<vmem>>, vector<1x32x32xbf16>
    %143 = vector.shape_cast %142 : vector<1x32x32xbf16> to vector<32x32xbf16>
    %cst_59 = arith.constant dense<0.000000e+00> : vector<8x32xf32>
    %144 = tpu.matmul %139, %143, %cst_59 {dimension_numbers = #tpu.dot_dimension_numbers<[1], [0], [0], [1], [0, 0, 1, 1], [], []>} : vector<8x32xbf16>, vector<32x32xbf16>, vector<8x32xf32> -> vector<8x32xf32>
    %c0_60 = arith.constant 0 : index
    %c0_61 = arith.constant 0 : index
    %c0_62 = arith.constant 0 : index
    %145 = vector.load %arg10[%c0_60, %c0_61, %c0_62] : memref<4x1x32xf32, #tpu.memory_space<vmem>>, vector<1x1x32xf32>
    %146 = vector.shape_cast %145 : vector<1x1x32xf32> to vector<1x32xf32>
    %147 = vector.broadcast %146 : vector<1x32xf32> to vector<8x32xf32>
    %148 = arith.addf %144, %147 : vector<8x32xf32>
    %c1_63 = arith.constant 1 : index
    %c0_64 = arith.constant 0 : index
    %c0_65 = arith.constant 0 : index
    %149 = vector.load %arg9[%c1_63, %c0_64, %c0_65] : memref<3x32x32xbf16, #tpu.memory_space<vmem>>, vector<1x32x32xbf16>
    %150 = vector.shape_cast %149 : vector<1x32x32xbf16> to vector<32x32xbf16>
    %cst_66 = arith.constant dense<0.000000e+00> : vector<16x32xf32>
    %151 = tpu.matmul %140, %150, %cst_66 {dimension_numbers = #tpu.dot_dimension_numbers<[1], [0], [0], [1], [0, 0, 1, 1], [], []>} : vector<16x32xbf16>, vector<32x32xbf16>, vector<16x32xf32> -> vector<16x32xf32>
    %c1_67 = arith.constant 1 : index
    %c0_68 = arith.constant 0 : index
    %c0_69 = arith.constant 0 : index
    %152 = vector.load %arg10[%c1_67, %c0_68, %c0_69] : memref<4x1x32xf32, #tpu.memory_space<vmem>>, vector<1x1x32xf32>
    %153 = vector.shape_cast %152 : vector<1x1x32xf32> to vector<1x32xf32>
    %154 = vector.broadcast %153 : vector<1x32xf32> to vector<16x32xf32>
    %155 = arith.addf %151, %154 : vector<16x32xf32>
    %c2_70 = arith.constant 2 : index
    %c0_71 = arith.constant 0 : index
    %c0_72 = arith.constant 0 : index
    %156 = vector.load %arg9[%c2_70, %c0_71, %c0_72] : memref<3x32x32xbf16, #tpu.memory_space<vmem>>, vector<1x32x32xbf16>
    %157 = vector.shape_cast %156 : vector<1x32x32xbf16> to vector<32x32xbf16>
    %cst_73 = arith.constant dense<0.000000e+00> : vector<16x32xf32>
    %158 = tpu.matmul %141, %157, %cst_73 {dimension_numbers = #tpu.dot_dimension_numbers<[1], [0], [0], [1], [0, 0, 1, 1], [], []>} : vector<16x32xbf16>, vector<32x32xbf16>, vector<16x32xf32> -> vector<16x32xf32>
    %c2_74 = arith.constant 2 : index
    %c0_75 = arith.constant 0 : index
    %c0_76 = arith.constant 0 : index
    %159 = vector.load %arg10[%c2_74, %c0_75, %c0_76] : memref<4x1x32xf32, #tpu.memory_space<vmem>>, vector<1x1x32xf32>
    %160 = vector.shape_cast %159 : vector<1x1x32xf32> to vector<1x32xf32>
    %161 = vector.broadcast %160 : vector<1x32xf32> to vector<16x32xf32>
    %162 = arith.addf %158, %161 : vector<16x32xf32>
    %163 = vector.extract_strided_slice %148 {offsets = [0, 0], sizes = [8, 8], strides = [1, 1]} : vector<8x32xf32> to vector<8x8xf32>
    %164 = vector.extract_strided_slice %148 {offsets = [0, 8], sizes = [8, 8], strides = [1, 1]} : vector<8x32xf32> to vector<8x8xf32>
    %165 = vector.extract_strided_slice %148 {offsets = [0, 16], sizes = [8, 8], strides = [1, 1]} : vector<8x32xf32> to vector<8x8xf32>
    %166 = vector.extract_strided_slice %148 {offsets = [0, 24], sizes = [8, 8], strides = [1, 1]} : vector<8x32xf32> to vector<8x8xf32>
    %167 = vector.shape_cast %163 : vector<8x8xf32> to vector<1x8x8xf32>
    %168 = vector.shape_cast %164 : vector<8x8xf32> to vector<1x8x8xf32>
    %169 = vector.shape_cast %165 : vector<8x8xf32> to vector<1x8x8xf32>
    %170 = vector.shape_cast %166 : vector<8x8xf32> to vector<1x8x8xf32>
    %171 = tpu.concatenate %167, %168, %169, %170 in 0 : vector<1x8x8xf32>, vector<1x8x8xf32>, vector<1x8x8xf32>, vector<1x8x8xf32> -> vector<4x8x8xf32>
    %172 = vector.extract_strided_slice %155 {offsets = [0, 0], sizes = [16, 8], strides = [1, 1]} : vector<16x32xf32> to vector<16x8xf32>
    %173 = vector.extract_strided_slice %155 {offsets = [0, 8], sizes = [16, 8], strides = [1, 1]} : vector<16x32xf32> to vector<16x8xf32>
    %174 = vector.extract_strided_slice %155 {offsets = [0, 16], sizes = [16, 8], strides = [1, 1]} : vector<16x32xf32> to vector<16x8xf32>
    %175 = vector.extract_strided_slice %155 {offsets = [0, 24], sizes = [16, 8], strides = [1, 1]} : vector<16x32xf32> to vector<16x8xf32>
    %176 = vector.shape_cast %172 : vector<16x8xf32> to vector<1x16x8xf32>
    %177 = vector.shape_cast %173 : vector<16x8xf32> to vector<1x16x8xf32>
    %178 = vector.shape_cast %174 : vector<16x8xf32> to vector<1x16x8xf32>
    %179 = vector.shape_cast %175 : vector<16x8xf32> to vector<1x16x8xf32>
    %180 = tpu.concatenate %176, %177, %178, %179 in 0 : vector<1x16x8xf32>, vector<1x16x8xf32>, vector<1x16x8xf32>, vector<1x16x8xf32> -> vector<4x16x8xf32>
    %181 = vector.extract_strided_slice %162 {offsets = [0, 0], sizes = [16, 8], strides = [1, 1]} : vector<16x32xf32> to vector<16x8xf32>
    %182 = vector.extract_strided_slice %162 {offsets = [0, 8], sizes = [16, 8], strides = [1, 1]} : vector<16x32xf32> to vector<16x8xf32>
    %183 = vector.extract_strided_slice %162 {offsets = [0, 16], sizes = [16, 8], strides = [1, 1]} : vector<16x32xf32> to vector<16x8xf32>
    %184 = vector.extract_strided_slice %162 {offsets = [0, 24], sizes = [16, 8], strides = [1, 1]} : vector<16x32xf32> to vector<16x8xf32>
    %185 = vector.shape_cast %181 : vector<16x8xf32> to vector<1x16x8xf32>
    %186 = vector.shape_cast %182 : vector<16x8xf32> to vector<1x16x8xf32>
    %187 = vector.shape_cast %183 : vector<16x8xf32> to vector<1x16x8xf32>
    %188 = vector.shape_cast %184 : vector<16x8xf32> to vector<1x16x8xf32>
    %189 = tpu.concatenate %185, %186, %187, %188 in 0 : vector<1x16x8xf32>, vector<1x16x8xf32>, vector<1x16x8xf32>, vector<1x16x8xf32> -> vector<4x16x8xf32>
    %190 = arith.truncf %171 : vector<4x8x8xf32> to vector<4x8x8xbf16>
    %191 = arith.truncf %180 : vector<4x16x8xf32> to vector<4x16x8xbf16>
    "tpu.trace_start"() <{level = 10 : i32, message = "hqd,hkd->hqk"}> : () -> ()
    %cst_77 = arith.constant dense<0.000000e+00> : vector<4x8x16xf32>
    %192 = tpu.matmul %190, %191, %cst_77 {dimension_numbers = #tpu.dot_dimension_numbers<[2], [2], [1], [1], [0, 0, 0, 1, 1, 1], [0], [0]>} : vector<4x8x8xbf16>, vector<4x16x8xbf16>, vector<4x8x16xf32> -> vector<4x8x16xf32>
    "tpu.trace_stop"() : () -> ()
    %cst_78 = arith.constant dense<0xFF800000> : vector<4x8xf32>
    %193 = vector.multi_reduction <maximumf>, %192, %cst_78 [2] : vector<4x8x16xf32> to vector<4x8xf32>
    %194 = vector.shape_cast %193 : vector<4x8xf32> to vector<4x8x1xf32>
    %195 = vector.broadcast %194 : vector<4x8x1xf32> to vector<4x8x16xf32>
    %196 = arith.subf %192, %195 : vector<4x8x16xf32>
    %197 = math.exp %196 : vector<4x8x16xf32>
    %cst_79 = arith.constant dense<0.000000e+00> : vector<4x8xf32>
    %198 = vector.multi_reduction <add>, %197, %cst_79 [2] : vector<4x8x16xf32> to vector<4x8xf32>
    %199 = vector.shape_cast %198 : vector<4x8xf32> to vector<4x8x1xf32>
    %200 = tpu.reciprocal %199 {approx = true} : vector<4x8x1xf32> -> vector<4x8x1xf32>
    %201 = vector.broadcast %200 : vector<4x8x1xf32> to vector<4x8x16xf32>
    %202 = arith.mulf %197, %201 : vector<4x8x16xf32>
    %203 = arith.truncf %202 : vector<4x8x16xf32> to vector<4x8x16xbf16>
    %204 = arith.truncf %189 : vector<4x16x8xf32> to vector<4x16x8xbf16>
    "tpu.trace_start"() <{level = 10 : i32, message = "hqk,hkd->hqd"}> : () -> ()
    %cst_80 = arith.constant dense<0.000000e+00> : vector<4x8x8xf32>
    %205 = tpu.matmul %203, %204, %cst_80 {dimension_numbers = #tpu.dot_dimension_numbers<[2], [1], [1], [2], [0, 0, 0, 1, 1, 2], [0], [0]>} : vector<4x8x16xbf16>, vector<4x16x8xbf16>, vector<4x8x8xf32> -> vector<4x8x8xf32>
    "tpu.trace_stop"() : () -> ()
    %206 = vector.extract_strided_slice %205 {offsets = [0, 0, 0], sizes = [1, 8, 8], strides = [1, 1, 1]} : vector<4x8x8xf32> to vector<1x8x8xf32>
    %207 = vector.shape_cast %206 : vector<1x8x8xf32> to vector<8x8xf32>
    %208 = vector.extract_strided_slice %205 {offsets = [1, 0, 0], sizes = [1, 8, 8], strides = [1, 1, 1]} : vector<4x8x8xf32> to vector<1x8x8xf32>
    %209 = vector.shape_cast %208 : vector<1x8x8xf32> to vector<8x8xf32>
    %210 = vector.extract_strided_slice %205 {offsets = [2, 0, 0], sizes = [1, 8, 8], strides = [1, 1, 1]} : vector<4x8x8xf32> to vector<1x8x8xf32>
    %211 = vector.shape_cast %210 : vector<1x8x8xf32> to vector<8x8xf32>
    %212 = vector.extract_strided_slice %205 {offsets = [3, 0, 0], sizes = [1, 8, 8], strides = [1, 1, 1]} : vector<4x8x8xf32> to vector<1x8x8xf32>
    %213 = vector.shape_cast %212 : vector<1x8x8xf32> to vector<8x8xf32>
    %214 = tpu.concatenate %207, %209, %211, %213 in 1 : vector<8x8xf32>, vector<8x8xf32>, vector<8x8xf32>, vector<8x8xf32> -> vector<8x32xf32>
    %215 = arith.truncf %214 : vector<8x32xf32> to vector<8x32xbf16>
    %c0_81 = arith.constant 0 : index
    %c0_82 = arith.constant 0 : index
    %216 = vector.load %arg11[%c0_81, %c0_82] : memref<32x32xbf16, #tpu.memory_space<vmem>>, vector<32x32xbf16>
    %cst_83 = arith.constant dense<0.000000e+00> : vector<8x32xf32>
    %217 = tpu.matmul %215, %216, %cst_83 {dimension_numbers = #tpu.dot_dimension_numbers<[1], [0], [0], [1], [0, 0, 1, 1], [], []>} : vector<8x32xbf16>, vector<32x32xbf16>, vector<8x32xf32> -> vector<8x32xf32>
    %c3_84 = arith.constant 3 : index
    %c0_85 = arith.constant 0 : index
    %c0_86 = arith.constant 0 : index
    %218 = vector.load %arg10[%c3_84, %c0_85, %c0_86] : memref<4x1x32xf32, #tpu.memory_space<vmem>>, vector<1x1x32xf32>
    %219 = vector.shape_cast %218 : vector<1x1x32xf32> to vector<1x32xf32>
    %220 = vector.broadcast %219 : vector<1x32xf32> to vector<8x32xf32>
    %221 = arith.addf %217, %220 : vector<8x32xf32>
    %222 = arith.addf %114, %221 : vector<8x32xf32>
    %c4 = arith.constant 4 : index
    %c0_87 = arith.constant 0 : index
    %223 = vector.load %arg5[%c4, %c0_87] : memref<6x32xf32, #tpu.memory_space<vmem>>, vector<1x32xf32>
    %c5 = arith.constant 5 : index
    %c0_88 = arith.constant 0 : index
    %224 = vector.load %arg5[%c5, %c0_88] : memref<6x32xf32, #tpu.memory_space<vmem>>, vector<1x32xf32>
    %cst_89 = arith.constant dense<0.000000e+00> : vector<8xf32>
    %225 = vector.multi_reduction <add>, %222, %cst_89 [1] : vector<8x32xf32> to vector<8xf32>
    %226 = vector.shape_cast %225 : vector<8xf32> to vector<8x1xf32>
    %cst_90 = arith.constant 3.200000e+01 : f32
    %227 = vector.broadcast %cst_90 : f32 to vector<8x1xf32>
    %228 = arith.divf %226, %227 : vector<8x1xf32>
    %229 = vector.broadcast %228 : vector<8x1xf32> to vector<8x32xf32>
    %230 = arith.subf %222, %229 : vector<8x32xf32>
    %231 = arith.mulf %230, %230 : vector<8x32xf32>
    %cst_91 = arith.constant dense<0.000000e+00> : vector<8xf32>
    %232 = vector.multi_reduction <add>, %231, %cst_91 [1] : vector<8x32xf32> to vector<8xf32>
    %233 = vector.shape_cast %232 : vector<8xf32> to vector<8x1xf32>
    %cst_92 = arith.constant 3.200000e+01 : f32
    %234 = vector.broadcast %cst_92 : f32 to vector<8x1xf32>
    %235 = arith.divf %233, %234 : vector<8x1xf32>
    %cst_93 = arith.constant 9.99999974E-6 : f32
    %236 = vector.broadcast %cst_93 : f32 to vector<8x1xf32>
    %237 = arith.addf %235, %236 : vector<8x1xf32>
    %238 = math.rsqrt %237 : vector<8x1xf32>
    %239 = vector.broadcast %238 : vector<8x1xf32> to vector<8x32xf32>
    %240 = arith.mulf %230, %239 : vector<8x32xf32>
    %241 = vector.broadcast %223 : vector<1x32xf32> to vector<8x32xf32>
    %242 = arith.mulf %240, %241 : vector<8x32xf32>
    %243 = vector.broadcast %224 : vector<1x32xf32> to vector<8x32xf32>
    %244 = arith.addf %242, %243 : vector<8x32xf32>
    %245 = arith.truncf %244 : vector<8x32xf32> to vector<8x32xbf16>
    %c0_94 = arith.constant 0 : index
    %c0_95 = arith.constant 0 : index
    %246 = vector.load %arg12[%c0_94, %c0_95] : memref<32x64xbf16, #tpu.memory_space<vmem>>, vector<32x64xbf16>
    %cst_96 = arith.constant dense<0.000000e+00> : vector<8x64xf32>
    %247 = tpu.matmul %245, %246, %cst_96 {dimension_numbers = #tpu.dot_dimension_numbers<[1], [0], [0], [1], [0, 0, 1, 1], [], []>} : vector<8x32xbf16>, vector<32x64xbf16>, vector<8x64xf32> -> vector<8x64xf32>
    %c0_97 = arith.constant 0 : index
    %c0_98 = arith.constant 0 : index
    %248 = vector.load %arg13[%c0_97, %c0_98] : memref<1x64xf32, #tpu.memory_space<vmem>>, vector<1x64xf32>
    %249 = vector.broadcast %248 : vector<1x64xf32> to vector<8x64xf32>
    %250 = arith.addf %247, %249 : vector<8x64xf32>
    %cst_99 = arith.constant 0.000000e+00 : f32
    %251 = vector.broadcast %cst_99 : f32 to vector<8x64xf32>
    %252 = arith.maximumf %250, %251 : vector<8x64xf32>
    %253 = arith.truncf %252 : vector<8x64xf32> to vector<8x64xbf16>
    %c0_100 = arith.constant 0 : index
    %c0_101 = arith.constant 0 : index
    %254 = vector.load %arg14[%c0_100, %c0_101] : memref<64x32xbf16, #tpu.memory_space<vmem>>, vector<64x32xbf16>
    %cst_102 = arith.constant dense<0.000000e+00> : vector<8x32xf32>
    %255 = tpu.matmul %253, %254, %cst_102 {dimension_numbers = #tpu.dot_dimension_numbers<[1], [0], [0], [1], [0, 0, 1, 1], [], []>} : vector<8x64xbf16>, vector<64x32xbf16>, vector<8x32xf32> -> vector<8x32xf32>
    %c0_103 = arith.constant 0 : index
    %c0_104 = arith.constant 0 : index
    %256 = vector.load %arg15[%c0_103, %c0_104] : memref<1x32xf32, #tpu.memory_space<vmem>>, vector<1x32xf32>
    %257 = vector.broadcast %256 : vector<1x32xf32> to vector<8x32xf32>
    %258 = arith.addf %255, %257 : vector<8x32xf32>
    %259 = arith.addf %258, %222 : vector<8x32xf32>
    %c0_105 = arith.constant 0 : index
    %c0_106 = arith.constant 0 : index
    %c0_107 = arith.constant 0 : index
    %260 = vector.load %arg16[%c0_105, %c0_106, %c0_107] : memref<2x8x32xf32, #tpu.memory_space<vmem>>, vector<1x8x32xf32>
    %261 = vector.shape_cast %260 : vector<1x8x32xf32> to vector<8x32xf32>
    %262 = vector.shape_cast %259 : vector<8x32xf32> to vector<1x8x32xf32>
    tpu.vector_store %arg16[%c0_105, %c0_106, %c0_107], %262 {strides = array<i32>} : memref<2x8x32xf32, #tpu.memory_space<vmem>>, vector<1x8x32xf32>,
    %c1_108 = arith.constant 1 : index
    %c0_109 = arith.constant 0 : index
    %c0_110 = arith.constant 0 : index
    %263 = vector.load %arg1[%c1_108, %c0_109, %c0_110] : memref<2x8x32xf32, #tpu.memory_space<vmem>>, vector<1x8x32xf32>
    %264 = vector.shape_cast %263 : vector<1x8x32xf32> to vector<8x32xf32>
    %c1_111 = arith.constant 1 : index
    %c0_112 = arith.constant 0 : index
    %c0_113 = arith.constant 0 : index
    %265 = vector.load %arg2[%c1_111, %c0_112, %c0_113] : memref<2x16x32xf32, #tpu.memory_space<vmem>>, vector<1x16x32xf32>
    %266 = vector.shape_cast %265 : vector<1x16x32xf32> to vector<16x32xf32>
    %c1_114 = arith.constant 1 : index
    %c0_115 = arith.constant 0 : index
    %c0_116 = arith.constant 0 : index
    %267 = vector.load %arg3[%c1_114, %c0_115, %c0_116] : memref<2x8x32xf32, #tpu.memory_space<vmem>>, vector<1x8x32xf32>
    %268 = vector.shape_cast %267 : vector<1x8x32xf32> to vector<8x32xf32>
    %c1_117 = arith.constant 1 : index
    %c0_118 = arith.constant 0 : index
    %c0_119 = arith.constant 0 : index
    %269 = vector.load %arg4[%c1_117, %c0_118, %c0_119] : memref<2x16x32xf32, #tpu.memory_space<vmem>>, vector<1x16x32xf32>
    %270 = vector.shape_cast %269 : vector<1x16x32xf32> to vector<16x32xf32>
    %c0_120 = arith.constant 0 : index
    %c0_121 = arith.constant 0 : index
    %271 = vector.load %arg5[%c0_120, %c0_121] : memref<6x32xf32, #tpu.memory_space<vmem>>, vector<1x32xf32>
    %c1_122 = arith.constant 1 : index
    %c0_123 = arith.constant 0 : index
    %272 = vector.load %arg5[%c1_122, %c0_123] : memref<6x32xf32, #tpu.memory_space<vmem>>, vector<1x32xf32>
    %cst_124 = arith.constant dense<0.000000e+00> : vector<8xf32>
    %273 = vector.multi_reduction <add>, %264, %cst_124 [1] : vector<8x32xf32> to vector<8xf32>
    %274 = vector.shape_cast %273 : vector<8xf32> to vector<8x1xf32>
    %cst_125 = arith.constant 3.200000e+01 : f32
    %275 = vector.broadcast %cst_125 : f32 to vector<8x1xf32>
    %276 = arith.divf %274, %275 : vector<8x1xf32>
    %277 = vector.broadcast %276 : vector<8x1xf32> to vector<8x32xf32>
    %278 = arith.subf %264, %277 : vector<8x32xf32>
    %279 = arith.mulf %278, %278 : vector<8x32xf32>
    %cst_126 = arith.constant dense<0.000000e+00> : vector<8xf32>
    %280 = vector.multi_reduction <add>, %279, %cst_126 [1] : vector<8x32xf32> to vector<8xf32>
    %281 = vector.shape_cast %280 : vector<8xf32> to vector<8x1xf32>
    %cst_127 = arith.constant 3.200000e+01 : f32
    %282 = vector.broadcast %cst_127 : f32 to vector<8x1xf32>
    %283 = arith.divf %281, %282 : vector<8x1xf32>
    %cst_128 = arith.constant 9.99999974E-6 : f32
    %284 = vector.broadcast %cst_128 : f32 to vector<8x1xf32>
    %285 = arith.addf %283, %284 : vector<8x1xf32>
    %286 = math.rsqrt %285 : vector<8x1xf32>
    %287 = vector.broadcast %286 : vector<8x1xf32> to vector<8x32xf32>
    %288 = arith.mulf %278, %287 : vector<8x32xf32>
    %289 = vector.broadcast %271 : vector<1x32xf32> to vector<8x32xf32>
    %290 = arith.mulf %288, %289 : vector<8x32xf32>
    %291 = vector.broadcast %272 : vector<1x32xf32> to vector<8x32xf32>
    %292 = arith.addf %290, %291 : vector<8x32xf32>
    %293 = arith.addf %292, %268 : vector<8x32xf32>
    %294 = arith.truncf %293 : vector<8x32xf32> to vector<8x32xbf16>
    %295 = arith.truncf %293 : vector<8x32xf32> to vector<8x32xbf16>
    %296 = arith.truncf %292 : vector<8x32xf32> to vector<8x32xbf16>
    %c0_129 = arith.constant 0 : index
    %c0_130 = arith.constant 0 : index
    %c0_131 = arith.constant 0 : index
    %297 = vector.load %arg6[%c0_129, %c0_130, %c0_131] : memref<3x32x32xbf16, #tpu.memory_space<vmem>>, vector<1x32x32xbf16>
    %298 = vector.shape_cast %297 : vector<1x32x32xbf16> to vector<32x32xbf16>
    %cst_132 = arith.constant dense<0.000000e+00> : vector<8x32xf32>
    %299 = tpu.matmul %294, %298, %cst_132 {dimension_numbers = #tpu.dot_dimension_numbers<[1], [0], [0], [1], [0, 0, 1, 1], [], []>} : vector<8x32xbf16>, vector<32x32xbf16>, vector<8x32xf32> -> vector<8x32xf32>
    %c0_133 = arith.constant 0 : index
    %c0_134 = arith.constant 0 : index
    %c0_135 = arith.constant 0 : index
    %300 = vector.load %arg7[%c0_133, %c0_134, %c0_135] : memref<4x1x32xf32, #tpu.memory_space<vmem>>, vector<1x1x32xf32>
    %301 = vector.shape_cast %300 : vector<1x1x32xf32> to vector<1x32xf32>
    %302 = vector.broadcast %301 : vector<1x32xf32> to vector<8x32xf32>
    %303 = arith.addf %299, %302 : vector<8x32xf32>
    %c1_136 = arith.constant 1 : index
    %c0_137 = arith.constant 0 : index
    %c0_138 = arith.constant 0 : index
    %304 = vector.load %arg6[%c1_136, %c0_137, %c0_138] : memref<3x32x32xbf16, #tpu.memory_space<vmem>>, vector<1x32x32xbf16>
    %305 = vector.shape_cast %304 : vector<1x32x32xbf16> to vector<32x32xbf16>
    %cst_139 = arith.constant dense<0.000000e+00> : vector<8x32xf32>
    %306 = tpu.matmul %295, %305, %cst_139 {dimension_numbers = #tpu.dot_dimension_numbers<[1], [0], [0], [1], [0, 0, 1, 1], [], []>} : vector<8x32xbf16>, vector<32x32xbf16>, vector<8x32xf32> -> vector<8x32xf32>
    %c1_140 = arith.constant 1 : index
    %c0_141 = arith.constant 0 : index
    %c0_142 = arith.constant 0 : index
    %307 = vector.load %arg7[%c1_140, %c0_141, %c0_142] : memref<4x1x32xf32, #tpu.memory_space<vmem>>, vector<1x1x32xf32>
    %308 = vector.shape_cast %307 : vector<1x1x32xf32> to vector<1x32xf32>
    %309 = vector.broadcast %308 : vector<1x32xf32> to vector<8x32xf32>
    %310 = arith.addf %306, %309 : vector<8x32xf32>
    %c2_143 = arith.constant 2 : index
    %c0_144 = arith.constant 0 : index
    %c0_145 = arith.constant 0 : index
    %311 = vector.load %arg6[%c2_143, %c0_144, %c0_145] : memref<3x32x32xbf16, #tpu.memory_space<vmem>>, vector<1x32x32xbf16>
    %312 = vector.shape_cast %311 : vector<1x32x32xbf16> to vector<32x32xbf16>
    %cst_146 = arith.constant dense<0.000000e+00> : vector<8x32xf32>
    %313 = tpu.matmul %296, %312, %cst_146 {dimension_numbers = #tpu.dot_dimension_numbers<[1], [0], [0], [1], [0, 0, 1, 1], [], []>} : vector<8x32xbf16>, vector<32x32xbf16>, vector<8x32xf32> -> vector<8x32xf32>
    %c2_147 = arith.constant 2 : index
    %c0_148 = arith.constant 0 : index
    %c0_149 = arith.constant 0 : index
    %314 = vector.load %arg7[%c2_147, %c0_148, %c0_149] : memref<4x1x32xf32, #tpu.memory_space<vmem>>, vector<1x1x32xf32>
    %315 = vector.shape_cast %314 : vector<1x1x32xf32> to vector<1x32xf32>
    %316 = vector.broadcast %315 : vector<1x32xf32> to vector<8x32xf32>
    %317 = arith.addf %313, %316 : vector<8x32xf32>
    %318 = vector.extract_strided_slice %303 {offsets = [0, 0], sizes = [8, 8], strides = [1, 1]} : vector<8x32xf32> to vector<8x8xf32>
    %319 = vector.extract_strided_slice %303 {offsets = [0, 8], sizes = [8, 8], strides = [1, 1]} : vector<8x32xf32> to vector<8x8xf32>
    %320 = vector.extract_strided_slice %303 {offsets = [0, 16], sizes = [8, 8], strides = [1, 1]} : vector<8x32xf32> to vector<8x8xf32>
    %321 = vector.extract_strided_slice %303 {offsets = [0, 24], sizes = [8, 8], strides = [1, 1]} : vector<8x32xf32> to vector<8x8xf32>
    %322 = vector.shape_cast %318 : vector<8x8xf32> to vector<1x8x8xf32>
    %323 = vector.shape_cast %319 : vector<8x8xf32> to vector<1x8x8xf32>
    %324 = vector.shape_cast %320 : vector<8x8xf32> to vector<1x8x8xf32>
    %325 = vector.shape_cast %321 : vector<8x8xf32> to vector<1x8x8xf32>
    %326 = tpu.concatenate %322, %323, %324, %325 in 0 : vector<1x8x8xf32>, vector<1x8x8xf32>, vector<1x8x8xf32>, vector<1x8x8xf32> -> vector<4x8x8xf32>
    %327 = vector.extract_strided_slice %310 {offsets = [0, 0], sizes = [8, 8], strides = [1, 1]} : vector<8x32xf32> to vector<8x8xf32>
    %328 = vector.extract_strided_slice %310 {offsets = [0, 8], sizes = [8, 8], strides = [1, 1]} : vector<8x32xf32> to vector<8x8xf32>
    %329 = vector.extract_strided_slice %310 {offsets = [0, 16], sizes = [8, 8], strides = [1, 1]} : vector<8x32xf32> to vector<8x8xf32>
    %330 = vector.extract_strided_slice %310 {offsets = [0, 24], sizes = [8, 8], strides = [1, 1]} : vector<8x32xf32> to vector<8x8xf32>
    %331 = vector.shape_cast %327 : vector<8x8xf32> to vector<1x8x8xf32>
    %332 = vector.shape_cast %328 : vector<8x8xf32> to vector<1x8x8xf32>
    %333 = vector.shape_cast %329 : vector<8x8xf32> to vector<1x8x8xf32>
    %334 = vector.shape_cast %330 : vector<8x8xf32> to vector<1x8x8xf32>
    %335 = tpu.concatenate %331, %332, %333, %334 in 0 : vector<1x8x8xf32>, vector<1x8x8xf32>, vector<1x8x8xf32>, vector<1x8x8xf32> -> vector<4x8x8xf32>
    %336 = vector.extract_strided_slice %317 {offsets = [0, 0], sizes = [8, 8], strides = [1, 1]} : vector<8x32xf32> to vector<8x8xf32>
    %337 = vector.extract_strided_slice %317 {offsets = [0, 8], sizes = [8, 8], strides = [1, 1]} : vector<8x32xf32> to vector<8x8xf32>
    %338 = vector.extract_strided_slice %317 {offsets = [0, 16], sizes = [8, 8], strides = [1, 1]} : vector<8x32xf32> to vector<8x8xf32>
    %339 = vector.extract_strided_slice %317 {offsets = [0, 24], sizes = [8, 8], strides = [1, 1]} : vector<8x32xf32> to vector<8x8xf32>
    %340 = vector.shape_cast %336 : vector<8x8xf32> to vector<1x8x8xf32>
    %341 = vector.shape_cast %337 : vector<8x8xf32> to vector<1x8x8xf32>
    %342 = vector.shape_cast %338 : vector<8x8xf32> to vector<1x8x8xf32>
    %343 = vector.shape_cast %339 : vector<8x8xf32> to vector<1x8x8xf32>
    %344 = tpu.concatenate %340, %341, %342, %343 in 0 : vector<1x8x8xf32>, vector<1x8x8xf32>, vector<1x8x8xf32>, vector<1x8x8xf32> -> vector<4x8x8xf32>
    %345 = arith.truncf %326 : vector<4x8x8xf32> to vector<4x8x8xbf16>
    %346 = arith.truncf %335 : vector<4x8x8xf32> to vector<4x8x8xbf16>
    "tpu.trace_start"() <{level = 10 : i32, message = "hqd,hkd->hqk"}> : () -> ()
    %cst_150 = arith.constant dense<0.000000e+00> : vector<4x8x8xf32>
    %347 = tpu.matmul %345, %346, %cst_150 {dimension_numbers = #tpu.dot_dimension_numbers<[2], [2], [1], [1], [0, 0, 0, 1, 1, 1], [0], [0]>} : vector<4x8x8xbf16>, vector<4x8x8xbf16>, vector<4x8x8xf32> -> vector<4x8x8xf32>
    "tpu.trace_stop"() : () -> ()
    %cst_151 = arith.constant dense<0xFF800000> : vector<4x8xf32>
    %348 = vector.multi_reduction <maximumf>, %347, %cst_151 [2] : vector<4x8x8xf32> to vector<4x8xf32>
    %349 = vector.shape_cast %348 : vector<4x8xf32> to vector<4x8x1xf32>
    %350 = vector.broadcast %349 : vector<4x8x1xf32> to vector<4x8x8xf32>
    %351 = arith.subf %347, %350 : vector<4x8x8xf32>
    %352 = math.exp %351 : vector<4x8x8xf32>
    %cst_152 = arith.constant dense<0.000000e+00> : vector<4x8xf32>
    %353 = vector.multi_reduction <add>, %352, %cst_152 [2] : vector<4x8x8xf32> to vector<4x8xf32>
    %354 = vector.shape_cast %353 : vector<4x8xf32> to vector<4x8x1xf32>
    %355 = tpu.reciprocal %354 {approx = true} : vector<4x8x1xf32> -> vector<4x8x1xf32>
    %356 = vector.broadcast %355 : vector<4x8x1xf32> to vector<4x8x8xf32>
    %357 = arith.mulf %352, %356 : vector<4x8x8xf32>
    %358 = arith.truncf %357 : vector<4x8x8xf32> to vector<4x8x8xbf16>
    %359 = arith.truncf %344 : vector<4x8x8xf32> to vector<4x8x8xbf16>
    "tpu.trace_start"() <{level = 10 : i32, message = "hqk,hkd->hqd"}> : () -> ()
    %cst_153 = arith.constant dense<0.000000e+00> : vector<4x8x8xf32>
    %360 = tpu.matmul %358, %359, %cst_153 {dimension_numbers = #tpu.dot_dimension_numbers<[2], [1], [1], [2], [0, 0, 0, 1, 1, 2], [0], [0]>} : vector<4x8x8xbf16>, vector<4x8x8xbf16>, vector<4x8x8xf32> -> vector<4x8x8xf32>
    "tpu.trace_stop"() : () -> ()
    %361 = vector.extract_strided_slice %360 {offsets = [0, 0, 0], sizes = [1, 8, 8], strides = [1, 1, 1]} : vector<4x8x8xf32> to vector<1x8x8xf32>
    %362 = vector.shape_cast %361 : vector<1x8x8xf32> to vector<8x8xf32>
    %363 = vector.extract_strided_slice %360 {offsets = [1, 0, 0], sizes = [1, 8, 8], strides = [1, 1, 1]} : vector<4x8x8xf32> to vector<1x8x8xf32>
    %364 = vector.shape_cast %363 : vector<1x8x8xf32> to vector<8x8xf32>
    %365 = vector.extract_strided_slice %360 {offsets = [2, 0, 0], sizes = [1, 8, 8], strides = [1, 1, 1]} : vector<4x8x8xf32> to vector<1x8x8xf32>
    %366 = vector.shape_cast %365 : vector<1x8x8xf32> to vector<8x8xf32>
    %367 = vector.extract_strided_slice %360 {offsets = [3, 0, 0], sizes = [1, 8, 8], strides = [1, 1, 1]} : vector<4x8x8xf32> to vector<1x8x8xf32>
    %368 = vector.shape_cast %367 : vector<1x8x8xf32> to vector<8x8xf32>
    %369 = tpu.concatenate %362, %364, %366, %368 in 1 : vector<8x8xf32>, vector<8x8xf32>, vector<8x8xf32>, vector<8x8xf32> -> vector<8x32xf32>
    %370 = arith.truncf %369 : vector<8x32xf32> to vector<8x32xbf16>
    %c0_154 = arith.constant 0 : index
    %c0_155 = arith.constant 0 : index
    %371 = vector.load %arg8[%c0_154, %c0_155] : memref<32x32xbf16, #tpu.memory_space<vmem>>, vector<32x32xbf16>
    %cst_156 = arith.constant dense<0.000000e+00> : vector<8x32xf32>
    %372 = tpu.matmul %370, %371, %cst_156 {dimension_numbers = #tpu.dot_dimension_numbers<[1], [0], [0], [1], [0, 0, 1, 1], [], []>} : vector<8x32xbf16>, vector<32x32xbf16>, vector<8x32xf32> -> vector<8x32xf32>
    %c3_157 = arith.constant 3 : index
    %c0_158 = arith.constant 0 : index
    %c0_159 = arith.constant 0 : index
    %373 = vector.load %arg7[%c3_157, %c0_158, %c0_159] : memref<4x1x32xf32, #tpu.memory_space<vmem>>, vector<1x1x32xf32>
    %374 = vector.shape_cast %373 : vector<1x1x32xf32> to vector<1x32xf32>
    %375 = vector.broadcast %374 : vector<1x32xf32> to vector<8x32xf32>
    %376 = arith.addf %372, %375 : vector<8x32xf32>
    %377 = arith.addf %264, %376 : vector<8x32xf32>
    %c2_160 = arith.constant 2 : index
    %c0_161 = arith.constant 0 : index
    %378 = vector.load %arg5[%c2_160, %c0_161] : memref<6x32xf32, #tpu.memory_space<vmem>>, vector<1x32xf32>
    %c3_162 = arith.constant 3 : index
    %c0_163 = arith.constant 0 : index
    %379 = vector.load %arg5[%c3_162, %c0_163] : memref<6x32xf32, #tpu.memory_space<vmem>>, vector<1x32xf32>
    %cst_164 = arith.constant dense<0.000000e+00> : vector<8xf32>
    %380 = vector.multi_reduction <add>, %377, %cst_164 [1] : vector<8x32xf32> to vector<8xf32>
    %381 = vector.shape_cast %380 : vector<8xf32> to vector<8x1xf32>
    %cst_165 = arith.constant 3.200000e+01 : f32
    %382 = vector.broadcast %cst_165 : f32 to vector<8x1xf32>
    %383 = arith.divf %381, %382 : vector<8x1xf32>
    %384 = vector.broadcast %383 : vector<8x1xf32> to vector<8x32xf32>
    %385 = arith.subf %377, %384 : vector<8x32xf32>
    %386 = arith.mulf %385, %385 : vector<8x32xf32>
    %cst_166 = arith.constant dense<0.000000e+00> : vector<8xf32>
    %387 = vector.multi_reduction <add>, %386, %cst_166 [1] : vector<8x32xf32> to vector<8xf32>
    %388 = vector.shape_cast %387 : vector<8xf32> to vector<8x1xf32>
    %cst_167 = arith.constant 3.200000e+01 : f32
    %389 = vector.broadcast %cst_167 : f32 to vector<8x1xf32>
    %390 = arith.divf %388, %389 : vector<8x1xf32>
    %cst_168 = arith.constant 9.99999974E-6 : f32
    %391 = vector.broadcast %cst_168 : f32 to vector<8x1xf32>
    %392 = arith.addf %390, %391 : vector<8x1xf32>
    %393 = math.rsqrt %392 : vector<8x1xf32>
    %394 = vector.broadcast %393 : vector<8x1xf32> to vector<8x32xf32>
    %395 = arith.mulf %385, %394 : vector<8x32xf32>
    %396 = vector.broadcast %378 : vector<1x32xf32> to vector<8x32xf32>
    %397 = arith.mulf %395, %396 : vector<8x32xf32>
    %398 = vector.broadcast %379 : vector<1x32xf32> to vector<8x32xf32>
    %399 = arith.addf %397, %398 : vector<8x32xf32>
    %400 = arith.addf %399, %268 : vector<8x32xf32>
    %401 = arith.addf %266, %270 : vector<16x32xf32>
    %402 = arith.truncf %400 : vector<8x32xf32> to vector<8x32xbf16>
    %403 = arith.truncf %401 : vector<16x32xf32> to vector<16x32xbf16>
    %404 = arith.truncf %266 : vector<16x32xf32> to vector<16x32xbf16>
    %c0_169 = arith.constant 0 : index
    %c0_170 = arith.constant 0 : index
    %c0_171 = arith.constant 0 : index
    %405 = vector.load %arg9[%c0_169, %c0_170, %c0_171] : memref<3x32x32xbf16, #tpu.memory_space<vmem>>, vector<1x32x32xbf16>
    %406 = vector.shape_cast %405 : vector<1x32x32xbf16> to vector<32x32xbf16>
    %cst_172 = arith.constant dense<0.000000e+00> : vector<8x32xf32>
    %407 = tpu.matmul %402, %406, %cst_172 {dimension_numbers = #tpu.dot_dimension_numbers<[1], [0], [0], [1], [0, 0, 1, 1], [], []>} : vector<8x32xbf16>, vector<32x32xbf16>, vector<8x32xf32> -> vector<8x32xf32>
    %c0_173 = arith.constant 0 : index
    %c0_174 = arith.constant 0 : index
    %c0_175 = arith.constant 0 : index
    %408 = vector.load %arg10[%c0_173, %c0_174, %c0_175] : memref<4x1x32xf32, #tpu.memory_space<vmem>>, vector<1x1x32xf32>
    %409 = vector.shape_cast %408 : vector<1x1x32xf32> to vector<1x32xf32>
    %410 = vector.broadcast %409 : vector<1x32xf32> to vector<8x32xf32>
    %411 = arith.addf %407, %410 : vector<8x32xf32>
    %c1_176 = arith.constant 1 : index
    %c0_177 = arith.constant 0 : index
    %c0_178 = arith.constant 0 : index
    %412 = vector.load %arg9[%c1_176, %c0_177, %c0_178] : memref<3x32x32xbf16, #tpu.memory_space<vmem>>, vector<1x32x32xbf16>
    %413 = vector.shape_cast %412 : vector<1x32x32xbf16> to vector<32x32xbf16>
    %cst_179 = arith.constant dense<0.000000e+00> : vector<16x32xf32>
    %414 = tpu.matmul %403, %413, %cst_179 {dimension_numbers = #tpu.dot_dimension_numbers<[1], [0], [0], [1], [0, 0, 1, 1], [], []>} : vector<16x32xbf16>, vector<32x32xbf16>, vector<16x32xf32> -> vector<16x32xf32>
    %c1_180 = arith.constant 1 : index
    %c0_181 = arith.constant 0 : index
    %c0_182 = arith.constant 0 : index
    %415 = vector.load %arg10[%c1_180, %c0_181, %c0_182] : memref<4x1x32xf32, #tpu.memory_space<vmem>>, vector<1x1x32xf32>
    %416 = vector.shape_cast %415 : vector<1x1x32xf32> to vector<1x32xf32>
    %417 = vector.broadcast %416 : vector<1x32xf32> to vector<16x32xf32>
    %418 = arith.addf %414, %417 : vector<16x32xf32>
    %c2_183 = arith.constant 2 : index
    %c0_184 = arith.constant 0 : index
    %c0_185 = arith.constant 0 : index
    %419 = vector.load %arg9[%c2_183, %c0_184, %c0_185] : memref<3x32x32xbf16, #tpu.memory_space<vmem>>, vector<1x32x32xbf16>
    %420 = vector.shape_cast %419 : vector<1x32x32xbf16> to vector<32x32xbf16>
    %cst_186 = arith.constant dense<0.000000e+00> : vector<16x32xf32>
    %421 = tpu.matmul %404, %420, %cst_186 {dimension_numbers = #tpu.dot_dimension_numbers<[1], [0], [0], [1], [0, 0, 1, 1], [], []>} : vector<16x32xbf16>, vector<32x32xbf16>, vector<16x32xf32> -> vector<16x32xf32>
    %c2_187 = arith.constant 2 : index
    %c0_188 = arith.constant 0 : index
    %c0_189 = arith.constant 0 : index
    %422 = vector.load %arg10[%c2_187, %c0_188, %c0_189] : memref<4x1x32xf32, #tpu.memory_space<vmem>>, vector<1x1x32xf32>
    %423 = vector.shape_cast %422 : vector<1x1x32xf32> to vector<1x32xf32>
    %424 = vector.broadcast %423 : vector<1x32xf32> to vector<16x32xf32>
    %425 = arith.addf %421, %424 : vector<16x32xf32>
    %426 = vector.extract_strided_slice %411 {offsets = [0, 0], sizes = [8, 8], strides = [1, 1]} : vector<8x32xf32> to vector<8x8xf32>
    %427 = vector.extract_strided_slice %411 {offsets = [0, 8], sizes = [8, 8], strides = [1, 1]} : vector<8x32xf32> to vector<8x8xf32>
    %428 = vector.extract_strided_slice %411 {offsets = [0, 16], sizes = [8, 8], strides = [1, 1]} : vector<8x32xf32> to vector<8x8xf32>
    %429 = vector.extract_strided_slice %411 {offsets = [0, 24], sizes = [8, 8], strides = [1, 1]} : vector<8x32xf32> to vector<8x8xf32>
    %430 = vector.shape_cast %426 : vector<8x8xf32> to vector<1x8x8xf32>
    %431 = vector.shape_cast %427 : vector<8x8xf32> to vector<1x8x8xf32>
    %432 = vector.shape_cast %428 : vector<8x8xf32> to vector<1x8x8xf32>
    %433 = vector.shape_cast %429 : vector<8x8xf32> to vector<1x8x8xf32>
    %434 = tpu.concatenate %430, %431, %432, %433 in 0 : vector<1x8x8xf32>, vector<1x8x8xf32>, vector<1x8x8xf32>, vector<1x8x8xf32> -> vector<4x8x8xf32>
    %435 = vector.extract_strided_slice %418 {offsets = [0, 0], sizes = [16, 8], strides = [1, 1]} : vector<16x32xf32> to vector<16x8xf32>
    %436 = vector.extract_strided_slice %418 {offsets = [0, 8], sizes = [16, 8], strides = [1, 1]} : vector<16x32xf32> to vector<16x8xf32>
    %437 = vector.extract_strided_slice %418 {offsets = [0, 16], sizes = [16, 8], strides = [1, 1]} : vector<16x32xf32> to vector<16x8xf32>
    %438 = vector.extract_strided_slice %418 {offsets = [0, 24], sizes = [16, 8], strides = [1, 1]} : vector<16x32xf32> to vector<16x8xf32>
    %439 = vector.shape_cast %435 : vector<16x8xf32> to vector<1x16x8xf32>
    %440 = vector.shape_cast %436 : vector<16x8xf32> to vector<1x16x8xf32>
    %441 = vector.shape_cast %437 : vector<16x8xf32> to vector<1x16x8xf32>
    %442 = vector.shape_cast %438 : vector<16x8xf32> to vector<1x16x8xf32>
    %443 = tpu.concatenate %439, %440, %441, %442 in 0 : vector<1x16x8xf32>, vector<1x16x8xf32>, vector<1x16x8xf32>, vector<1x16x8xf32> -> vector<4x16x8xf32>
    %444 = vector.extract_strided_slice %425 {offsets = [0, 0], sizes = [16, 8], strides = [1, 1]} : vector<16x32xf32> to vector<16x8xf32>
    %445 = vector.extract_strided_slice %425 {offsets = [0, 8], sizes = [16, 8], strides = [1, 1]} : vector<16x32xf32> to vector<16x8xf32>
    %446 = vector.extract_strided_slice %425 {offsets = [0, 16], sizes = [16, 8], strides = [1, 1]} : vector<16x32xf32> to vector<16x8xf32>
    %447 = vector.extract_strided_slice %425 {offsets = [0, 24], sizes = [16, 8], strides = [1, 1]} : vector<16x32xf32> to vector<16x8xf32>
    %448 = vector.shape_cast %444 : vector<16x8xf32> to vector<1x16x8xf32>
    %449 = vector.shape_cast %445 : vector<16x8xf32> to vector<1x16x8xf32>
    %450 = vector.shape_cast %446 : vector<16x8xf32> to vector<1x16x8xf32>
    %451 = vector.shape_cast %447 : vector<16x8xf32> to vector<1x16x8xf32>
    %452 = tpu.concatenate %448, %449, %450, %451 in 0 : vector<1x16x8xf32>, vector<1x16x8xf32>, vector<1x16x8xf32>, vector<1x16x8xf32> -> vector<4x16x8xf32>
    %453 = arith.truncf %434 : vector<4x8x8xf32> to vector<4x8x8xbf16>
    %454 = arith.truncf %443 : vector<4x16x8xf32> to vector<4x16x8xbf16>
    "tpu.trace_start"() <{level = 10 : i32, message = "hqd,hkd->hqk"}> : () -> ()
    %cst_190 = arith.constant dense<0.000000e+00> : vector<4x8x16xf32>
    %455 = tpu.matmul %453, %454, %cst_190 {dimension_numbers = #tpu.dot_dimension_numbers<[2], [2], [1], [1], [0, 0, 0, 1, 1, 1], [0], [0]>} : vector<4x8x8xbf16>, vector<4x16x8xbf16>, vector<4x8x16xf32> -> vector<4x8x16xf32>
    "tpu.trace_stop"() : () -> ()
    %cst_191 = arith.constant dense<0xFF800000> : vector<4x8xf32>
    %456 = vector.multi_reduction <maximumf>, %455, %cst_191 [2] : vector<4x8x16xf32> to vector<4x8xf32>
    %457 = vector.shape_cast %456 : vector<4x8xf32> to vector<4x8x1xf32>
    %458 = vector.broadcast %457 : vector<4x8x1xf32> to vector<4x8x16xf32>
    %459 = arith.subf %455, %458 : vector<4x8x16xf32>
    %460 = math.exp %459 : vector<4x8x16xf32>
    %cst_192 = arith.constant dense<0.000000e+00> : vector<4x8xf32>
    %461 = vector.multi_reduction <add>, %460, %cst_192 [2] : vector<4x8x16xf32> to vector<4x8xf32>
    %462 = vector.shape_cast %461 : vector<4x8xf32> to vector<4x8x1xf32>
    %463 = tpu.reciprocal %462 {approx = true} : vector<4x8x1xf32> -> vector<4x8x1xf32>
    %464 = vector.broadcast %463 : vector<4x8x1xf32> to vector<4x8x16xf32>
    %465 = arith.mulf %460, %464 : vector<4x8x16xf32>
    %466 = arith.truncf %465 : vector<4x8x16xf32> to vector<4x8x16xbf16>
    %467 = arith.truncf %452 : vector<4x16x8xf32> to vector<4x16x8xbf16>
    "tpu.trace_start"() <{level = 10 : i32, message = "hqk,hkd->hqd"}> : () -> ()
    %cst_193 = arith.constant dense<0.000000e+00> : vector<4x8x8xf32>
    %468 = tpu.matmul %466, %467, %cst_193 {dimension_numbers = #tpu.dot_dimension_numbers<[2], [1], [1], [2], [0, 0, 0, 1, 1, 2], [0], [0]>} : vector<4x8x16xbf16>, vector<4x16x8xbf16>, vector<4x8x8xf32> -> vector<4x8x8xf32>
    "tpu.trace_stop"() : () -> ()
    %469 = vector.extract_strided_slice %468 {offsets = [0, 0, 0], sizes = [1, 8, 8], strides = [1, 1, 1]} : vector<4x8x8xf32> to vector<1x8x8xf32>
    %470 = vector.shape_cast %469 : vector<1x8x8xf32> to vector<8x8xf32>
    %471 = vector.extract_strided_slice %468 {offsets = [1, 0, 0], sizes = [1, 8, 8], strides = [1, 1, 1]} : vector<4x8x8xf32> to vector<1x8x8xf32>
    %472 = vector.shape_cast %471 : vector<1x8x8xf32> to vector<8x8xf32>
    %473 = vector.extract_strided_slice %468 {offsets = [2, 0, 0], sizes = [1, 8, 8], strides = [1, 1, 1]} : vector<4x8x8xf32> to vector<1x8x8xf32>
    %474 = vector.shape_cast %473 : vector<1x8x8xf32> to vector<8x8xf32>
    %475 = vector.extract_strided_slice %468 {offsets = [3, 0, 0], sizes = [1, 8, 8], strides = [1, 1, 1]} : vector<4x8x8xf32> to vector<1x8x8xf32>
    %476 = vector.shape_cast %475 : vector<1x8x8xf32> to vector<8x8xf32>
    %477 = tpu.concatenate %470, %472, %474, %476 in 1 : vector<8x8xf32>, vector<8x8xf32>, vector<8x8xf32>, vector<8x8xf32> -> vector<8x32xf32>
    %478 = arith.truncf %477 : vector<8x32xf32> to vector<8x32xbf16>
    %c0_194 = arith.constant 0 : index
    %c0_195 = arith.constant 0 : index
    %479 = vector.load %arg11[%c0_194, %c0_195] : memref<32x32xbf16, #tpu.memory_space<vmem>>, vector<32x32xbf16>
    %cst_196 = arith.constant dense<0.000000e+00> : vector<8x32xf32>
    %480 = tpu.matmul %478, %479, %cst_196 {dimension_numbers = #tpu.dot_dimension_numbers<[1], [0], [0], [1], [0, 0, 1, 1], [], []>} : vector<8x32xbf16>, vector<32x32xbf16>, vector<8x32xf32> -> vector<8x32xf32>
    %c3_197 = arith.constant 3 : index
    %c0_198 = arith.constant 0 : index
    %c0_199 = arith.constant 0 : index
    %481 = vector.load %arg10[%c3_197, %c0_198, %c0_199] : memref<4x1x32xf32, #tpu.memory_space<vmem>>, vector<1x1x32xf32>
    %482 = vector.shape_cast %481 : vector<1x1x32xf32> to vector<1x32xf32>
    %483 = vector.broadcast %482 : vector<1x32xf32> to vector<8x32xf32>
    %484 = arith.addf %480, %483 : vector<8x32xf32>
    %485 = arith.addf %377, %484 : vector<8x32xf32>
    %c4_200 = arith.constant 4 : index
    %c0_201 = arith.constant 0 : index
    %486 = vector.load %arg5[%c4_200, %c0_201] : memref<6x32xf32, #tpu.memory_space<vmem>>, vector<1x32xf32>
    %c5_202 = arith.constant 5 : index
    %c0_203 = arith.constant 0 : index
    %487 = vector.load %arg5[%c5_202, %c0_203] : memref<6x32xf32, #tpu.memory_space<vmem>>, vector<1x32xf32>
    %cst_204 = arith.constant dense<0.000000e+00> : vector<8xf32>
    %488 = vector.multi_reduction <add>, %485, %cst_204 [1] : vector<8x32xf32> to vector<8xf32>
    %489 = vector.shape_cast %488 : vector<8xf32> to vector<8x1xf32>
    %cst_205 = arith.constant 3.200000e+01 : f32
    %490 = vector.broadcast %cst_205 : f32 to vector<8x1xf32>
    %491 = arith.divf %489, %490 : vector<8x1xf32>
    %492 = vector.broadcast %491 : vector<8x1xf32> to vector<8x32xf32>
    %493 = arith.subf %485, %492 : vector<8x32xf32>
    %494 = arith.mulf %493, %493 : vector<8x32xf32>
    %cst_206 = arith.constant dense<0.000000e+00> : vector<8xf32>
    %495 = vector.multi_reduction <add>, %494, %cst_206 [1] : vector<8x32xf32> to vector<8xf32>
    %496 = vector.shape_cast %495 : vector<8xf32> to vector<8x1xf32>
    %cst_207 = arith.constant 3.200000e+01 : f32
    %497 = vector.broadcast %cst_207 : f32 to vector<8x1xf32>
    %498 = arith.divf %496, %497 : vector<8x1xf32>
    %cst_208 = arith.constant 9.99999974E-6 : f32
    %499 = vector.broadcast %cst_208 : f32 to vector<8x1xf32>
    %500 = arith.addf %498, %499 : vector<8x1xf32>
    %501 = math.rsqrt %500 : vector<8x1xf32>
    %502 = vector.broadcast %501 : vector<8x1xf32> to vector<8x32xf32>
    %503 = arith.mulf %493, %502 : vector<8x32xf32>
    %504 = vector.broadcast %486 : vector<1x32xf32> to vector<8x32xf32>
    %505 = arith.mulf %503, %504 : vector<8x32xf32>
    %506 = vector.broadcast %487 : vector<1x32xf32> to vector<8x32xf32>
    %507 = arith.addf %505, %506 : vector<8x32xf32>
    %508 = arith.truncf %507 : vector<8x32xf32> to vector<8x32xbf16>
    %c0_209 = arith.constant 0 : index
    %c0_210 = arith.constant 0 : index
    %509 = vector.load %arg12[%c0_209, %c0_210] : memref<32x64xbf16, #tpu.memory_space<vmem>>, vector<32x64xbf16>
    %cst_211 = arith.constant dense<0.000000e+00> : vector<8x64xf32>
    %510 = tpu.matmul %508, %509, %cst_211 {dimension_numbers = #tpu.dot_dimension_numbers<[1], [0], [0], [1], [0, 0, 1, 1], [], []>} : vector<8x32xbf16>, vector<32x64xbf16>, vector<8x64xf32> -> vector<8x64xf32>
    %c0_212 = arith.constant 0 : index
    %c0_213 = arith.constant 0 : index
    %511 = vector.load %arg13[%c0_212, %c0_213] : memref<1x64xf32, #tpu.memory_space<vmem>>, vector<1x64xf32>
    %512 = vector.broadcast %511 : vector<1x64xf32> to vector<8x64xf32>
    %513 = arith.addf %510, %512 : vector<8x64xf32>
    %cst_214 = arith.constant 0.000000e+00 : f32
    %514 = vector.broadcast %cst_214 : f32 to vector<8x64xf32>
    %515 = arith.maximumf %513, %514 : vector<8x64xf32>
    %516 = arith.truncf %515 : vector<8x64xf32> to vector<8x64xbf16>
    %c0_215 = arith.constant 0 : index
    %c0_216 = arith.constant 0 : index
    %517 = vector.load %arg14[%c0_215, %c0_216] : memref<64x32xbf16, #tpu.memory_space<vmem>>, vector<64x32xbf16>
    %cst_217 = arith.constant dense<0.000000e+00> : vector<8x32xf32>
    %518 = tpu.matmul %516, %517, %cst_217 {dimension_numbers = #tpu.dot_dimension_numbers<[1], [0], [0], [1], [0, 0, 1, 1], [], []>} : vector<8x64xbf16>, vector<64x32xbf16>, vector<8x32xf32> -> vector<8x32xf32>
    %c0_218 = arith.constant 0 : index
    %c0_219 = arith.constant 0 : index
    %519 = vector.load %arg15[%c0_218, %c0_219] : memref<1x32xf32, #tpu.memory_space<vmem>>, vector<1x32xf32>
    %520 = vector.broadcast %519 : vector<1x32xf32> to vector<8x32xf32>
    %521 = arith.addf %518, %520 : vector<8x32xf32>
    %522 = arith.addf %521, %485 : vector<8x32xf32>
    %c1_220 = arith.constant 1 : index
    %c0_221 = arith.constant 0 : index
    %c0_222 = arith.constant 0 : index
    %523 = vector.load %arg16[%c1_220, %c0_221, %c0_222] : memref<2x8x32xf32, #tpu.memory_space<vmem>>, vector<1x8x32xf32>
    %524 = vector.shape_cast %523 : vector<1x8x32xf32> to vector<8x32xf32>
    %525 = vector.shape_cast %522 : vector<8x32xf32> to vector<1x8x32xf32>
    tpu.vector_store %arg16[%c1_220, %c0_221, %c0_222], %525 {strides = array<i32>} : memref<2x8x32xf32, #tpu.memory_space<vmem>>, vector<1x8x32xf32>,
    return
  }
  func.func @transform_0(%arg0: i32) -> (i32, i32, i32) {
    %c0_i32 = arith.constant 0 : i32
    %c0_i32_0 = arith.constant 0 : i32
    %c0_i32_1 = arith.constant 0 : i32
    return %arg0, %c0_i32, %c0_i32_0 : i32, i32, i32
  }
  func.func @transform_1(%arg0: i32) -> (i32, i32, i32) {
    %c0_i32 = arith.constant 0 : i32
    %c0_i32_0 = arith.constant 0 : i32
    %c0_i32_1 = arith.constant 0 : i32
    return %arg0, %c0_i32, %c0_i32_0 : i32, i32, i32
  }
  func.func @transform_2(%arg0: i32) -> (i32, i32, i32) {
    %c0_i32 = arith.constant 0 : i32
    %c0_i32_0 = arith.constant 0 : i32
    %c0_i32_1 = arith.constant 0 : i32
    return %arg0, %c0_i32, %c0_i32_0 : i32, i32, i32
  }
  func.func @transform_3(%arg0: i32) -> (i32, i32, i32) {
    %c0_i32 = arith.constant 0 : i32
    %c0_i32_0 = arith.constant 0 : i32
    %c0_i32_1 = arith.constant 0 : i32
    return %arg0, %c0_i32, %c0_i32_0 : i32, i32, i32
  }
  func.func @transform_4(%arg0: i32) -> (i32, i32) {
    %c0_i32 = arith.constant 0 : i32
    %c0_i32_0 = arith.constant 0 : i32
    %c0_i32_1 = arith.constant 0 : i32
    return %c0_i32, %c0_i32_0 : i32, i32
  }
  func.func @transform_5(%arg0: i32) -> (i32, i32, i32) {
    %c0_i32 = arith.constant 0 : i32
    %c0_i32_0 = arith.constant 0 : i32
    %c0_i32_1 = arith.constant 0 : i32
    %c0_i32_2 = arith.constant 0 : i32
    return %c0_i32, %c0_i32_0, %c0_i32_1 : i32, i32, i32
  }
  func.func @transform_6(%arg0: i32) -> (i32, i32, i32) {
    %c0_i32 = arith.constant 0 : i32
    %c0_i32_0 = arith.constant 0 : i32
    %c0_i32_1 = arith.constant 0 : i32
    %c0_i32_2 = arith.constant 0 : i32
    return %c0_i32, %c0_i32_0, %c0_i32_1 : i32, i32, i32
  }
  func.func @transform_7(%arg0: i32) -> (i32, i32) {
    %c0_i32 = arith.constant 0 : i32
    %c0_i32_0 = arith.constant 0 : i32
    %c0_i32_1 = arith.constant 0 : i32
    return %c0_i32, %c0_i32_0 : i32, i32
  }
  func.func @transform_8(%arg0: i32) -> (i32, i32, i32) {
    %c0_i32 = arith.constant 0 : i32
    %c0_i32_0 = arith.constant 0 : i32
    %c0_i32_1 = arith.constant 0 : i32
    %c0_i32_2 = arith.constant 0 : i32
    return %c0_i32, %c0_i32_0, %c0_i32_1 : i32, i32, i32
  }
  func.func @transform_9(%arg0: i32) -> (i32, i32, i32) {
    %c0_i32 = arith.constant 0 : i32
    %c0_i32_0 = arith.constant 0 : i32
    %c0_i32_1 = arith.constant 0 : i32
    %c0_i32_2 = arith.constant 0 : i32
    return %c0_i32, %c0_i32_0, %c0_i32_1 : i32, i32, i32
  }
  func.func @transform_10(%arg0: i32) -> (i32, i32) {
    %c0_i32 = arith.constant 0 : i32
    %c0_i32_0 = arith.constant 0 : i32
    %c0_i32_1 = arith.constant 0 : i32
    return %c0_i32, %c0_i32_0 : i32, i32
  }
  func.func @transform_11(%arg0: i32) -> (i32, i32) {
    %c0_i32 = arith.constant 0 : i32
    %c0_i32_0 = arith.constant 0 : i32
    %c0_i32_1 = arith.constant 0 : i32
    return %c0_i32, %c0_i32_0 : i32, i32
  }
  func.func @transform_12(%arg0: i32) -> (i32, i32) {
    %c0_i32 = arith.constant 0 : i32
    %c0_i32_0 = arith.constant 0 : i32
    %c0_i32_1 = arith.constant 0 : i32
    return %c0_i32, %c0_i32_0 : i32, i32
  }
  func.func @transform_13(%arg0: i32) -> (i32, i32) {
    %c0_i32 = arith.constant 0 : i32
    %c0_i32_0 = arith.constant 0 : i32
    %c0_i32_1 = arith.constant 0 : i32
    return %c0_i32, %c0_i32_0 : i32, i32
  }
  func.func @transform_14(%arg0: i32) -> (i32, i32) {
    %c0_i32 = arith.constant 0 : i32
    %c0_i32_0 = arith.constant 0 : i32
    %c0_i32_1 = arith.constant 0 : i32
    return %c0_i32, %c0_i32_0 : i32, i32
  }
  func.func @transform_15(%arg0: i32) -> (i32, i32, i32) {
    %c0_i32 = arith.constant 0 : i32
    %c0_i32_0 = arith.constant 0 : i32
    %c0_i32_1 = arith.constant 0 : i32
    return %arg0, %c0_i32, %c0_i32_0 : i32, i32, i32
  }
}

</mosaic_0001>

<llo_original>
// kernel: decoder_layer_forward.1
$region0: #{decoder_layer_forward.1}
  #allocation0 [shape = 'u32[]', space=smem, size = 0x4, offset = 0x4, fixed_abs, tag = 'smem constant byte address 0x4 - core index']
  #allocation1 [shape = 'u32[144,128]{1,0:T(1,128)}', space=vmem, size = 0x12000, scoped, tag = 'internal scratch']
  %s0 = inlined_call_operand.vmem [shape: f32[4,8,32], index: 0, kind: input, shape index: {}]
  %s1 = inlined_call_operand.vmem [shape: f32[4,16,32], index: 1, kind: input, shape index: {}]
  %s2 = inlined_call_operand.vmem [shape: f32[4,8,32], index: 2, kind: input, shape index: {}]
  %s3 = inlined_call_operand.vmem [shape: f32[4,16,32], index: 3, kind: input, shape index: {}]
  %s4 = inlined_call_operand.vmem [shape: f32[6,32], index: 4, kind: input, shape index: {}]
  %s5 = inlined_call_operand.vmem [shape: bf16[3,32,32], index: 5, kind: input, shape index: {}]
  %s6 = inlined_call_operand.vmem [shape: f32[4,1,32], index: 6, kind: input, shape index: {}]
  %s7 = inlined_call_operand.vmem [shape: bf16[32,32], index: 7, kind: input, shape index: {}]
  %s8 = inlined_call_operand.vmem [shape: bf16[3,32,32], index: 8, kind: input, shape index: {}]
  %s9 = inlined_call_operand.vmem [shape: f32[4,1,32], index: 9, kind: input, shape index: {}]
  %s10 = inlined_call_operand.vmem [shape: bf16[32,32], index: 10, kind: input, shape index: {}]
  %s11 = inlined_call_operand.vmem [shape: bf16[32,64], index: 11, kind: input, shape index: {}]
  %s12 = inlined_call_operand.vmem [shape: f32[1,64], index: 12, kind: input, shape index: {}]
  %s13 = inlined_call_operand.vmem [shape: bf16[64,32], index: 13, kind: input, shape index: {}]
  %s14 = inlined_call_operand.vmem [shape: f32[1,32], index: 14, kind: input, shape index: {}]
  %s15 = inlined_call_operand.vmem [shape: f32[4,8,32], index: 15, kind: output, shape index: {}]
  %s16 = sld [smem:[#allocation0]]
  $region93: #{decoder_layer_forward.1} parent=0
    _
  %s18 = ssub.s32 1, %s16
  %s19 = scalar_select 0, %s18, %s16
  loop: start=0, step=1, limit=4
  $region2: #{decoder_layer_forward.1} parent=0 // loop_pre_header
    _
  $region3: #{decoder_layer_forward.1} parent=0 // loop_header
    %s21 = sphi 0, %s25
    %p22 = scmp.ge.s32.totalorder %s21, 4
    %s31 = sphi 0, %s33
    %s34 = sphi 0, %s31
    %s35 = sphi 0, %s34
    %s51 = sphi 0, %s35
    %s57 = sphi 0, %s59
    %s60 = sphi 0, %s57
    %s61 = sphi 0, %s60
    %s77 = sphi 0, %s61
    %s83 = sphi 0, %s85
    %s86 = sphi 0, %s83
    %s87 = sphi 0, %s86
    %s103 = sphi 0, %s87
    %s109 = sphi 0, %s111
    %s112 = sphi 0, %s109
    %s113 = sphi 0, %s112
    %s129 = sphi 0, %s113
    %s133 = sphi 0, %s133
    %s135 = sphi 0, %s133
    %s136 = sphi 0, %s135
    %s150 = sphi 0, %s136
    %s154 = sphi 0, %s154
    %s156 = sphi 0, %s154
    %s157 = sphi 0, %s156
    %s171 = sphi 0, %s157
    %s175 = sphi 0, %s175
    %s177 = sphi 0, %s175
    %s178 = sphi 0, %s177
    %s192 = sphi 0, %s178
    %s196 = sphi 0, %s196
    %s198 = sphi 0, %s196
    %s199 = sphi 0, %s198
    %s213 = sphi 0, %s199
    %s217 = sphi 0, %s217
    %s219 = sphi 0, %s217
    %s220 = sphi 0, %s219
    %s234 = sphi 0, %s220
    %s238 = sphi 0, %s238
    %s240 = sphi 0, %s238
    %s241 = sphi 0, %s240
    %s255 = sphi 0, %s241
    %s259 = sphi 0, %s259
    %s261 = sphi 0, %s259
    %s262 = sphi 0, %s261
    %s276 = sphi 0, %s262
    %s280 = sphi 0, %s280
    %s282 = sphi 0, %s280
    %s283 = sphi 0, %s282
    %s297 = sphi 0, %s283
    %s301 = sphi 0, %s301
    %s303 = sphi 0, %s301
    %s304 = sphi 0, %s303
    %s318 = sphi 0, %s304
    %s322 = sphi 0, %s322
    %s324 = sphi 0, %s322
    %s325 = sphi 0, %s324
    %s339 = sphi 0, %s325
    %s343 = sphi 0, %s343
    %s345 = sphi 0, %s343
    %s346 = sphi 0, %s345
    %s360 = sphi 0, %s346
    %s366 = sphi 0, %s368
    %s369 = sphi 0, %s366
    %s370 = sphi 0, %s369
    %s386 = sphi 0, %s370
  $region4: #{decoder_layer_forward.1} parent=0 // loop_header_branch
    %24 = sbr.rel (%p22) target = $region8
  $region5: #{decoder_layer_forward.1} parent=0 // loop_body
    %s26 = ssub.s32 %s21, 1
    %s27 = ssub.s32 %s21, 2
    %s28 = sadd.s32 %s21, 1
    %s29 = ssub.s32 %s21, %s28
    %p30 = scmp.eq.s32.totalorder %s29, 0
    %s32 = sadd.s32 %s31, 1
    %s33 = scalar_select %p30, %s31, %s32
    %p36 = pneg %p30
    %p37 = scmp.eq.s32.totalorder %s21, 1
    %p38 = por %p36, %p37
    %p39 = scmp.ne.s32.totalorder %s31, %s34
    %p40 = scmp.eq.s32.totalorder %s21, 0
    %p41 = por %p39, %p40
    %p42 = scmp.ne.s32.totalorder %s31, %s34
    %p43 = scmp.eq.s32.totalorder %s26, 1
    %p44 = por %p42, %p43
    %p45 = scmp.ne.s32.totalorder %s34, %s35
    %p46 = scmp.eq.s32.totalorder %s26, 0
    %p47 = por %p45, %p46
    %p48 = scmp.ne.s32.totalorder %s34, %s35
    %p49 = scmp.eq.s32.totalorder %s27, 1
    %p50 = por %p48, %p49
    %p52 = scmp.ne.s32.totalorder %s35, %s51
    %p53 = scmp.eq.s32.totalorder %s27, 0
    %p54 = por %p52, %p53
    %s55 = ssub.s32 %s21, %s28
    %p56 = scmp.eq.s32.totalorder %s55, 0
    %s58 = sadd.s32 %s57, 1
    %s59 = scalar_select %p56, %s57, %s58
    %p62 = pneg %p56
    %p63 = scmp.eq.s32.totalorder %s21, 1
    %p64 = por %p62, %p63
    %p65 = scmp.ne.s32.totalorder %s57, %s60
    %p66 = scmp.eq.s32.totalorder %s21, 0
    %p67 = por %p65, %p66
    %p68 = scmp.ne.s32.totalorder %s57, %s60
    %p69 = scmp.eq.s32.totalorder %s26, 1
    %p70 = por %p68, %p69
    %p71 = scmp.ne.s32.totalorder %s60, %s61
    %p72 = scmp.eq.s32.totalorder %s26, 0
    %p73 = por %p71, %p72
    %p74 = scmp.ne.s32.totalorder %s60, %s61
    %p75 = scmp.eq.s32.totalorder %s27, 1
    %p76 = por %p74, %p75
    %p78 = scmp.ne.s32.totalorder %s61, %s77
    %p79 = scmp.eq.s32.totalorder %s27, 0
    %p80 = por %p78, %p79
    %s81 = ssub.s32 %s21, %s28
    %p82 = scmp.eq.s32.totalorder %s81, 0
    %s84 = sadd.s32 %s83, 1
    %s85 = scalar_select %p82, %s83, %s84
    %p88 = pneg %p82
    %p89 = scmp.eq.s32.totalorder %s21, 1
    %p90 = por %p88, %p89
    %p91 = scmp.ne.s32.totalorder %s83, %s86
    %p92 = scmp.eq.s32.totalorder %s21, 0
    %p93 = por %p91, %p92
    %p94 = scmp.ne.s32.totalorder %s83, %s86
    %p95 = scmp.eq.s32.totalorder %s26, 1
    %p96 = por %p94, %p95
    %p97 = scmp.ne.s32.totalorder %s86, %s87
    %p98 = scmp.eq.s32.totalorder %s26, 0
    %p99 = por %p97, %p98
    %p100 = scmp.ne.s32.totalorder %s86, %s87
    %p101 = scmp.eq.s32.totalorder %s27, 1
    %p102 = por %p100, %p101
    %p104 = scmp.ne.s32.totalorder %s87, %s103
    %p105 = scmp.eq.s32.totalorder %s27, 0
    %p106 = por %p104, %p105
    %s107 = ssub.s32 %s21, %s28
    %p108 = scmp.eq.s32.totalorder %s107, 0
    %s110 = sadd.s32 %s109, 1
    %s111 = scalar_select %p108, %s109, %s110
    %p114 = pneg %p108
    %p115 = scmp.eq.s32.totalorder %s21, 1
    %p116 = por %p114, %p115
    %p117 = scmp.ne.s32.totalorder %s109, %s112
    %p118 = scmp.eq.s32.totalorder %s21, 0
    %p119 = por %p117, %p118
    %p120 = scmp.ne.s32.totalorder %s109, %s112
    %p121 = scmp.eq.s32.totalorder %s26, 1
    %p122 = por %p120, %p121
    %p123 = scmp.ne.s32.totalorder %s112, %s113
    %p124 = scmp.eq.s32.totalorder %s26, 0
    %p125 = por %p123, %p124
    %p126 = scmp.ne.s32.totalorder %s112, %s113
    %p127 = scmp.eq.s32.totalorder %s27, 1
    %p128 = por %p126, %p127
    %p130 = scmp.ne.s32.totalorder %s113, %s129
    %p131 = scmp.eq.s32.totalorder %s27, 0
    %p132 = por %p130, %p131
    %s134 = sadd.s32 %s133, 1
    %p137 = scmp.eq.s32.totalorder %s21, 1
    %p138 = scmp.ne.s32.totalorder %s133, %s135
    %p139 = scmp.eq.s32.totalorder %s21, 0
    %p140 = por %p138, %p139
    %p141 = scmp.ne.s32.totalorder %s133, %s135
    %p142 = scmp.eq.s32.totalorder %s26, 1
    %p143 = por %p141, %p142
    %p144 = scmp.ne.s32.totalorder %s135, %s136
    %p145 = scmp.eq.s32.totalorder %s26, 0
    %p146 = por %p144, %p145
    %p147 = scmp.ne.s32.totalorder %s135, %s136
    %p148 = scmp.eq.s32.totalorder %s27, 1
    %p149 = por %p147, %p148
    %p151 = scmp.ne.s32.totalorder %s136, %s150
    %p152 = scmp.eq.s32.totalorder %s27, 0
    %p153 = por %p151, %p152
    %s155 = sadd.s32 %s154, 1
    %p158 = scmp.eq.s32.totalorder %s21, 1
    %p159 = scmp.ne.s32.totalorder %s154, %s156
    %p160 = scmp.eq.s32.totalorder %s21, 0
    %p161 = por %p159, %p160
    %p162 = scmp.ne.s32.totalorder %s154, %s156
    %p163 = scmp.eq.s32.totalorder %s26, 1
    %p164 = por %p162, %p163
    %p165 = scmp.ne.s32.totalorder %s156, %s157
    %p166 = scmp.eq.s32.totalorder %s26, 0
    %p167 = por %p165, %p166
    %p168 = scmp.ne.s32.totalorder %s156, %s157
    %p169 = scmp.eq.s32.totalorder %s27, 1
    %p170 = por %p168, %p169
    %p172 = scmp.ne.s32.totalorder %s157, %s171
    %p173 = scmp.eq.s32.totalorder %s27, 0
    %p174 = por %p172, %p173
    %s176 = sadd.s32 %s175, 1
    %p179 = scmp.eq.s32.totalorder %s21, 1
    %p180 = scmp.ne.s32.totalorder %s175, %s177
    %p181 = scmp.eq.s32.totalorder %s21, 0
    %p182 = por %p180, %p181
    %p183 = scmp.ne.s32.totalorder %s175, %s177
    %p184 = scmp.eq.s32.totalorder %s26, 1
    %p185 = por %p183, %p184
    %p186 = scmp.ne.s32.totalorder %s177, %s178
    %p187 = scmp.eq.s32.totalorder %s26, 0
    %p188 = por %p186, %p187
    %p189 = scmp.ne.s32.totalorder %s177, %s178
    %p190 = scmp.eq.s32.totalorder %s27, 1
    %p191 = por %p189, %p190
    %p193 = scmp.ne.s32.totalorder %s178, %s192
    %p194 = scmp.eq.s32.totalorder %s27, 0
    %p195 = por %p193, %p194
    %s197 = sadd.s32 %s196, 1
    %p200 = scmp.eq.s32.totalorder %s21, 1
    %p201 = scmp.ne.s32.totalorder %s196, %s198
    %p202 = scmp.eq.s32.totalorder %s21, 0
    %p203 = por %p201, %p202
    %p204 = scmp.ne.s32.totalorder %s196, %s198
    %p205 = scmp.eq.s32.totalorder %s26, 1
    %p206 = por %p204, %p205
    %p207 = scmp.ne.s32.totalorder %s198, %s199
    %p208 = scmp.eq.s32.totalorder %s26, 0
    %p209 = por %p207, %p208
    %p210 = scmp.ne.s32.totalorder %s198, %s199
    %p211 = scmp.eq.s32.totalorder %s27, 1
    %p212 = por %p210, %p211
    %p214 = scmp.ne.s32.totalorder %s199, %s213
    %p215 = scmp.eq.s32.totalorder %s27, 0
    %p216 = por %p214, %p215
    %s218 = sadd.s32 %s217, 1
    %p221 = scmp.eq.s32.totalorder %s21, 1
    %p222 = scmp.ne.s32.totalorder %s217, %s219
    %p223 = scmp.eq.s32.totalorder %s21, 0
    %p224 = por %p222, %p223
    %p225 = scmp.ne.s32.totalorder %s217, %s219
    %p226 = scmp.eq.s32.totalorder %s26, 1
    %p227 = por %p225, %p226
    %p228 = scmp.ne.s32.totalorder %s219, %s220
    %p229 = scmp.eq.s32.totalorder %s26, 0
    %p230 = por %p228, %p229
    %p231 = scmp.ne.s32.totalorder %s219, %s220
    %p232 = scmp.eq.s32.totalorder %s27, 1
    %p233 = por %p231, %p232
    %p235 = scmp.ne.s32.totalorder %s220, %s234
    %p236 = scmp.eq.s32.totalorder %s27, 0
    %p237 = por %p235, %p236
    %s239 = sadd.s32 %s238, 1
    %p242 = scmp.eq.s32.totalorder %s21, 1
    %p243 = scmp.ne.s32.totalorder %s238, %s240
    %p244 = scmp.eq.s32.totalorder %s21, 0
    %p245 = por %p243, %p244
    %p246 = scmp.ne.s32.totalorder %s238, %s240
    %p247 = scmp.eq.s32.totalorder %s26, 1
    %p248 = por %p246, %p247
    %p249 = scmp.ne.s32.totalorder %s240, %s241
    %p250 = scmp.eq.s32.totalorder %s26, 0
    %p251 = por %p249, %p250
    %p252 = scmp.ne.s32.totalorder %s240, %s241
    %p253 = scmp.eq.s32.totalorder %s27, 1
    %p254 = por %p252, %p253
    %p256 = scmp.ne.s32.totalorder %s241, %s255
    %p257 = scmp.eq.s32.totalorder %s27, 0
    %p258 = por %p256, %p257
    %s260 = sadd.s32 %s259, 1
    %p263 = scmp.eq.s32.totalorder %s21, 1
    %p264 = scmp.ne.s32.totalorder %s259, %s261
    %p265 = scmp.eq.s32.totalorder %s21, 0
    %p266 = por %p264, %p265
    %p267 = scmp.ne.s32.totalorder %s259, %s261
    %p268 = scmp.eq.s32.totalorder %s26, 1
    %p269 = por %p267, %p268
    %p270 = scmp.ne.s32.totalorder %s261, %s262
    %p271 = scmp.eq.s32.totalorder %s26, 0
    %p272 = por %p270, %p271
    %p273 = scmp.ne.s32.totalorder %s261, %s262
    %p274 = scmp.eq.s32.totalorder %s27, 1
    %p275 = por %p273, %p274
    %p277 = scmp.ne.s32.totalorder %s262, %s276
    %p278 = scmp.eq.s32.totalorder %s27, 0
    %p279 = por %p277, %p278
    %s281 = sadd.s32 %s280, 1
    %p284 = scmp.eq.s32.totalorder %s21, 1
    %p285 = scmp.ne.s32.totalorder %s280, %s282
    %p286 = scmp.eq.s32.totalorder %s21, 0
    %p287 = por %p285, %p286
    %p288 = scmp.ne.s32.totalorder %s280, %s282
    %p289 = scmp.eq.s32.totalorder %s26, 1
    %p290 = por %p288, %p289
    %p291 = scmp.ne.s32.totalorder %s282, %s283
    %p292 = scmp.eq.s32.totalorder %s26, 0
    %p293 = por %p291, %p292
    %p294 = scmp.ne.s32.totalorder %s282, %s283
    %p295 = scmp.eq.s32.totalorder %s27, 1
    %p296 = por %p294, %p295
    %p298 = scmp.ne.s32.totalorder %s283, %s297
    %p299 = scmp.eq.s32.totalorder %s27, 0
    %p300 = por %p298, %p299
    %s302 = sadd.s32 %s301, 1
    %p305 = scmp.eq.s32.totalorder %s21, 1
    %p306 = scmp.ne.s32.totalorder %s301, %s303
    %p307 = scmp.eq.s32.totalorder %s21, 0
    %p308 = por %p306, %p307
    %p309 = scmp.ne.s32.totalorder %s301, %s303
    %p310 = scmp.eq.s32.totalorder %s26, 1
    %p311 = por %p309, %p310
    %p312 = scmp.ne.s32.totalorder %s303, %s304
    %p313 = scmp.eq.s32.totalorder %s26, 0
    %p314 = por %p312, %p313
    %p315 = scmp.ne.s32.totalorder %s303, %s304
    %p316 = scmp.eq.s32.totalorder %s27, 1
    %p317 = por %p315, %p316
    %p319 = scmp.ne.s32.totalorder %s304, %s318
    %p320 = scmp.eq.s32.totalorder %s27, 0
    %p321 = por %p319, %p320
    %s323 = sadd.s32 %s322, 1
    %p326 = scmp.eq.s32.totalorder %s21, 1
    %p327 = scmp.ne.s32.totalorder %s322, %s324
    %p328 = scmp.eq.s32.totalorder %s21, 0
    %p329 = por %p327, %p328
    %p330 = scmp.ne.s32.totalorder %s322, %s324
    %p331 = scmp.eq.s32.totalorder %s26, 1
    %p332 = por %p330, %p331
    %p333 = scmp.ne.s32.totalorder %s324, %s325
    %p334 = scmp.eq.s32.totalorder %s26, 0
    %p335 = por %p333, %p334
    %p336 = scmp.ne.s32.totalorder %s324, %s325
    %p337 = scmp.eq.s32.totalorder %s27, 1
    %p338 = por %p336, %p337
    %p340 = scmp.ne.s32.totalorder %s325, %s339
    %p341 = scmp.eq.s32.totalorder %s27, 0
    %p342 = por %p340, %p341
    %s344 = sadd.s32 %s343, 1
    %p347 = scmp.eq.s32.totalorder %s21, 1
    %p348 = scmp.ne.s32.totalorder %s343, %s345
    %p349 = scmp.eq.s32.totalorder %s21, 0
    %p350 = por %p348, %p349
    %p351 = scmp.ne.s32.totalorder %s343, %s345
    %p352 = scmp.eq.s32.totalorder %s26, 1
    %p353 = por %p351, %p352
    %p354 = scmp.ne.s32.totalorder %s345, %s346
    %p355 = scmp.eq.s32.totalorder %s26, 0
    %p356 = por %p354, %p355
    %p357 = scmp.ne.s32.totalorder %s345, %s346
    %p358 = scmp.eq.s32.totalorder %s27, 1
    %p359 = por %p357, %p358
    %p361 = scmp.ne.s32.totalorder %s346, %s360
    %p362 = scmp.eq.s32.totalorder %s27, 0
    %p363 = por %p361, %p362
    %s364 = ssub.s32 %s21, %s28
    %p365 = scmp.eq.s32.totalorder %s364, 0
    %s367 = sadd.s32 %s366, 1
    %s368 = scalar_select %p365, %s366, %s367
    %p371 = pneg %p365
    %p372 = scmp.eq.s32.totalorder %s21, 1
    %p373 = por %p371, %p372
    %p374 = scmp.ne.s32.totalorder %s366, %s369
    %p375 = scmp.eq.s32.totalorder %s21, 0
    %p376 = por %p374, %p375
    %p377 = scmp.ne.s32.totalorder %s366, %s369
    %p378 = scmp.eq.s32.totalorder %s26, 1
    %p379 = por %p377, %p378
    %p380 = scmp.ne.s32.totalorder %s369, %s370
    %p381 = scmp.eq.s32.totalorder %s26, 0
    %p382 = por %p380, %p381
    %p383 = scmp.ne.s32.totalorder %s369, %s370
    %p384 = scmp.eq.s32.totalorder %s27, 1
    %p385 = por %p383, %p384
    %p387 = scmp.ne.s32.totalorder %s370, %s386
    %p388 = scmp.eq.s32.totalorder %s27, 0
    %p389 = por %p387, %p388
    %p390 = scmp.le.s32.totalorder 1, %s21
    %p391 = scmp.lt.s32.totalorder %s21, 3
    %p392 = pnand %p390, %p391
    %p393 = pneg %p392
    // Predicated region
    $region9: #{decoder_layer_forward.1} parent=5 // pred_check
      _
    $region10: #{decoder_layer_forward.1} parent=5 // pred_check_branch
      %395 = sbr.rel (%p392) target = $region12
    $region11: #{decoder_layer_forward.1} parent=5 // pred_region
      %s396 = ssub.s32 %s21, 1
      // Predicated region
      $region13: #{decoder_layer_forward.1} parent=11 // pred_check
        %p397 = pneg %p146
      $region14: #{decoder_layer_forward.1} parent=11 // pred_check_branch
        %399 = sbr.rel (%p397) target = $region16
      $region15: #{decoder_layer_forward.1} parent=11 // pred_region
        _
      $region16: #{decoder_layer_forward.1} parent=11 // pred_fallthru
        _
      // Predicated region
      $region17: #{decoder_layer_forward.1} parent=11 // pred_check
        %p400 = pneg %p167
      $region18: #{decoder_layer_forward.1} parent=11 // pred_check_branch
        %402 = sbr.rel (%p400) target = $region20
      $region19: #{decoder_layer_forward.1} parent=11 // pred_region
        _
      $region20: #{decoder_layer_forward.1} parent=11 // pred_fallthru
        _
      // Predicated region
      $region21: #{decoder_layer_forward.1} parent=11 // pred_check
        %p403 = pneg %p188
      $region22: #{decoder_layer_forward.1} parent=11 // pred_check_branch
        %405 = sbr.rel (%p403) target = $region24
      $region23: #{decoder_layer_forward.1} parent=11 // pred_region
        _
      $region24: #{decoder_layer_forward.1} parent=11 // pred_fallthru
        _
      // Predicated region
      $region25: #{decoder_layer_forward.1} parent=11 // pred_check
        %p406 = pneg %p209
      $region26: #{decoder_layer_forward.1} parent=11 // pred_check_branch
        %408 = sbr.rel (%p406) target = $region28
      $region27: #{decoder_layer_forward.1} parent=11 // pred_region
        _
      $region28: #{decoder_layer_forward.1} parent=11 // pred_fallthru
        _
      // Predicated region
      $region29: #{decoder_layer_forward.1} parent=11 // pred_check
        %p409 = pneg %p230
      $region30: #{decoder_layer_forward.1} parent=11 // pred_check_branch
        %411 = sbr.rel (%p409) target = $region32
      $region31: #{decoder_layer_forward.1} parent=11 // pred_region
        _
      $region32: #{decoder_layer_forward.1} parent=11 // pred_fallthru
        _
      // Predicated region
      $region33: #{decoder_layer_forward.1} parent=11 // pred_check
        %p412 = pneg %p251
      $region34: #{decoder_layer_forward.1} parent=11 // pred_check_branch
        %414 = sbr.rel (%p412) target = $region36
      $region35: #{decoder_layer_forward.1} parent=11 // pred_region
        _
      $region36: #{decoder_layer_forward.1} parent=11 // pred_fallthru
        _
      // Predicated region
      $region37: #{decoder_layer_forward.1} parent=11 // pred_check
        %p415 = pneg %p272
      $region38: #{decoder_layer_forward.1} parent=11 // pred_check_branch
        %417 = sbr.rel (%p415) target = $region40
      $region39: #{decoder_layer_forward.1} parent=11 // pred_region
        _
      $region40: #{decoder_layer_forward.1} parent=11 // pred_fallthru
        _
      // Predicated region
      $region41: #{decoder_layer_forward.1} parent=11 // pred_check
        %p418 = pneg %p293
      $region42: #{decoder_layer_forward.1} parent=11 // pred_check_branch
        %420 = sbr.rel (%p418) target = $region44
      $region43: #{decoder_layer_forward.1} parent=11 // pred_region
        _
      $region44: #{decoder_layer_forward.1} parent=11 // pred_fallthru
        _
      // Predicated region
      $region45: #{decoder_layer_forward.1} parent=11 // pred_check
        %p421 = pneg %p314
      $region46: #{decoder_layer_forward.1} parent=11 // pred_check_branch
        %423 = sbr.rel (%p421) target = $region48
      $region47: #{decoder_layer_forward.1} parent=11 // pred_region
        _
      $region48: #{decoder_layer_forward.1} parent=11 // pred_fallthru
        _
      // Predicated region
      $region49: #{decoder_layer_forward.1} parent=11 // pred_check
        %p424 = pneg %p335
      $region50: #{decoder_layer_forward.1} parent=11 // pred_check_branch
        %426 = sbr.rel (%p424) target = $region52
      $region51: #{decoder_layer_forward.1} parent=11 // pred_region
        _
      $region52: #{decoder_layer_forward.1} parent=11 // pred_fallthru
        _
      // Predicated region
      $region53: #{decoder_layer_forward.1} parent=11 // pred_check
        %p427 = pneg %p356
      $region54: #{decoder_layer_forward.1} parent=11 // pred_check_branch
        %429 = sbr.rel (%p427) target = $region56
      $region55: #{decoder_layer_forward.1} parent=11 // pred_region
        _
      $region56: #{decoder_layer_forward.1} parent=11 // pred_fallthru
        _
    $region12: #{decoder_layer_forward.1} parent=5 // pred_fallthru
      _
    %p430 = scmp.lt.s32.totalorder %s21, 2
    // Predicated region
    $region57: #{decoder_layer_forward.1} parent=5 // pred_check
      %p431 = pneg %p430
    $region58: #{decoder_layer_forward.1} parent=5 // pred_check_branch
      %433 = sbr.rel (%p431) target = $region60
    $region59: #{decoder_layer_forward.1} parent=5 // pred_region
      // Predicated region
      $region61: #{decoder_layer_forward.1} parent=59 // pred_check
        %p434 = pneg %p41
      $region62: #{decoder_layer_forward.1} parent=59 // pred_check_branch
        %436 = sbr.rel (%p434) target = $region64
      $region63: #{decoder_layer_forward.1} parent=59 // pred_region
        %s437 = smul.u32 2, %s21
        %p438 = scmp.lt.s32.totalorder %s437, 3
        %s439 = scalar_select %p438, %s437, 3
        %s440 = smul.addr %s439, 8
        %s441 = scalar_lea.vmem %s0, %s440
        %s442 = smul.u32 2, %s21
      $region64: #{decoder_layer_forward.1} parent=59 // pred_fallthru
        _
      // Predicated region
      $region65: #{decoder_layer_forward.1} parent=59 // pred_check
        %p443 = pneg %p67
      $region66: #{decoder_layer_forward.1} parent=59 // pred_check_branch
        %445 = sbr.rel (%p443) target = $region68
      $region67: #{decoder_layer_forward.1} parent=59 // pred_region
        %s446 = smul.u32 2, %s21
        %p447 = scmp.lt.s32.totalorder %s446, 3
        %s448 = scalar_select %p447, %s446, 3
        %s449 = smul.addr %s448, 2
        %s450 = smul.addr %s449, 8
        %s451 = scalar_lea.vmem %s1, %s450
        %s452 = smul.u32 2, %s21
      $region68: #{decoder_layer_forward.1} parent=59 // pred_fallthru
        _
      // Predicated region
      $region69: #{decoder_layer_forward.1} parent=59 // pred_check
        %p453 = pneg %p93
      $region70: #{decoder_layer_forward.1} parent=59 // pred_check_branch
        %455 = sbr.rel (%p453) target = $region72
      $region71: #{decoder_layer_forward.1} parent=59 // pred_region
        %s456 = smul.u32 2, %s21
        %p457 = scmp.lt.s32.totalorder %s456, 3
        %s458 = scalar_select %p457, %s456, 3
        %s459 = smul.addr %s458, 8
        %s460 = scalar_lea.vmem %s2, %s459
        %s461 = smul.u32 2, %s21
      $region72: #{decoder_layer_forward.1} parent=59 // pred_fallthru
        _
      // Predicated region
      $region73: #{decoder_layer_forward.1} parent=59 // pred_check
        %p462 = pneg %p119
      $region74: #{decoder_layer_forward.1} parent=59 // pred_check_branch
        %464 = sbr.rel (%p462) target = $region76
      $region75: #{decoder_layer_forward.1} parent=59 // pred_region
        %s465 = smul.u32 2, %s21
        %p466 = scmp.lt.s32.totalorder %s465, 3
        %s467 = scalar_select %p466, %s465, 3
        %s468 = smul.addr %s467, 2
        %s469 = smul.addr %s468, 8
        %s470 = scalar_lea.vmem %s3, %s469
        %s471 = smul.u32 2, %s21
      $region76: #{decoder_layer_forward.1} parent=59 // pred_fallthru
        _
    $region60: #{decoder_layer_forward.1} parent=5 // pred_fallthru
      _
    %p472 = scmp.le.s32.totalorder 1, %s21
    %p473 = scmp.lt.s32.totalorder %s21, 3
    %p474 = pnand %p472, %p473
    %p475 = pneg %p474
    // Predicated region
    $region77: #{decoder_layer_forward.1} parent=5 // pred_check
      _
    $region78: #{decoder_layer_forward.1} parent=5 // pred_check_branch
      %477 = sbr.rel (%p474) target = $region80
    $region79: #{decoder_layer_forward.1} parent=5 // pred_region
      %s478 = ssub.s32 %s21, 1
      %s479 = smul.u32 2, %s26
      %p480 = scmp.lt.s32.totalorder %s479, 3
      %s481 = scalar_select %p480, %s479, 3
      %s482 = smul.addr %s481, 8
      %s483 = scalar_lea.vmem %s0, %s482
      %p484 = pneg %p47
      %p485 = pneg %p44
      %s486 = smul.u32 2, %s26
      %p487 = scmp.lt.s32.totalorder %s486, 3
      %s488 = scalar_select %p487, %s486, 3
      %s489 = smul.addr %s488, 2
      %s490 = smul.addr %s489, 8
      %s491 = scalar_lea.vmem %s1, %s490
      %p492 = pneg %p73
      %p493 = pneg %p70
      %s494 = smul.u32 2, %s26
      %p495 = scmp.lt.s32.totalorder %s494, 3
      %s496 = scalar_select %p495, %s494, 3
      %s497 = smul.addr %s496, 8
      %s498 = scalar_lea.vmem %s2, %s497
      %p499 = pneg %p99
      %p500 = pneg %p96
      %s501 = smul.u32 2, %s26
      %p502 = scmp.lt.s32.totalorder %s501, 3
      %s503 = scalar_select %p502, %s501, 3
      %s504 = smul.addr %s503, 2
      %s505 = smul.addr %s504, 8
      %s506 = scalar_lea.vmem %s3, %s505
      %p507 = pneg %p125
      %p508 = pneg %p122
      %p509 = pneg %p146
      %p510 = pneg %p143
      %p511 = pneg %p167
      %p512 = pneg %p164
      %p513 = pneg %p188
      %p514 = pneg %p185
      %p515 = pneg %p209
      %p516 = pneg %p206
      %p517 = pneg %p230
      %p518 = pneg %p227
      %p519 = pneg %p251
      %p520 = pneg %p248
      %p521 = pneg %p272
      %p522 = pneg %p269
      %p523 = pneg %p293
      %p524 = pneg %p290
      %p525 = pneg %p314
      %p526 = pneg %p311
      %p527 = pneg %p335
      %p528 = pneg %p332
      %p529 = pneg %p356
      %p530 = pneg %p353
      %p531 = pneg %p382
      %p532 = pneg %p379
      %s533 = smul.u32 2, %s26
      %p534 = scmp.lt.s32.totalorder %s533, 3
      %s535 = scalar_select %p534, %s533, 3
      %s536 = smul.addr %s535, 8
      %s537 = scalar_lea.vmem %s15, %s536
      %s538 = smul.u32 2, %s26
      %p539 = scmp.lt.s32.totalorder %s538, 3
      %s540 = scalar_select %p539, %s538, 3
      %s541 = smul.addr %s540, 8
      %s542 = scalar_lea.vmem %s0, %s541
      %s543 = smul.u32 2, %s26
      %s544 = smul.u32 2, %s26
      %p545 = scmp.lt.s32.totalorder %s544, 3
      %s546 = scalar_select %p545, %s544, 3
      %s547 = smul.addr %s546, 2
      %s548 = smul.addr %s547, 8
      %s549 = scalar_lea.vmem %s1, %s548
      %s550 = smul.u32 2, %s26
      %s551 = smul.u32 2, %s26
      %p552 = scmp.lt.s32.totalorder %s551, 3
      %s553 = scalar_select %p552, %s551, 3
      %s554 = smul.addr %s553, 8
      %s555 = scalar_lea.vmem %s2, %s554
      %s556 = smul.u32 2, %s26
      %s557 = smul.u32 2, %s26
      %p558 = scmp.lt.s32.totalorder %s557, 3
      %s559 = scalar_select %p558, %s557, 3
      %s560 = smul.addr %s559, 2
      %s561 = smul.addr %s560, 8
      %s562 = scalar_lea.vmem %s3, %s561
      %s563 = smul.u32 2, %s26
      %s564 = smul.u32 2, %s26
      %p565 = scmp.lt.s32.totalorder %s564, 3
      %s566 = scalar_select %p565, %s564, 3
      %s567 = smul.addr %s566, 8
      %s568 = scalar_lea.vmem %s15, %s567
      %s569 = smul.u32 2, %s26
      %v571 = vld [vmem:[%s542] sm:$0xff]
      %v572 = vld [vmem:[%s549] sm:$0xff]
      %v573 = vld [vmem:[%s549 + $0x8] sm:$0xff]
      %v574 = vld [vmem:[%s555] sm:$0xff]
      %v575 = vld [vmem:[%s562] sm:$0xff]
      %v576 = vld [vmem:[%s562 + $0x8] sm:$0xff]
      %v577 = vld [vmem:[%s4] sm:$0x1]
      %v578 = vld [vmem:[%s4 + $0x1] sm:$0x1]
      %vm579 = vcmask 261120
      %v580 = vsel %vm579, %v571, 0.0
      %581 = vadd.xlane.f32.xlu0 %v580
      %v582 = vpop.xlane.xlu0 %581
      %v583 = vrcp.pop 32.0
      %v584 = vmul.f32 %v582, %v583
      %v585 = vsub.f32 %v571, %v584
      %v586 = vmul.f32 %v585, %v585
      %v587 = vsel %vm579, %v586, 0.0
      %588 = vadd.xlane.f32.xlu0 %v587
      %v589 = vpop.xlane.xlu0 %588
      %v590 = vmul.f32 %v589, %v583
      %v591 = vadd.f32 %v590, 1e-05
      %v592 = vrsqrt.pop %v591
      %v593 = vmul.f32 %v585, %v592
      %v594 = vlaneseq
      %v595 = vshrl.u32 %v594, 7
      %v596 = vsub.s32 0, %v595
      %v597 = vrot.slane %v577, %v596
      %v598 = vmul.f32 %v593, %v597
      %v599 = vlaneseq
      %v600 = vshrl.u32 %v599, 7
      %v601 = vsub.s32 0, %v600
      %v602 = vrot.slane %v578, %v601
      %v603 = vadd.f32 %v598, %v602
      %v604 = vadd.f32 %v603, %v574
      %v605 = vpack.c.bf16 %v604, %v604
      %v606 = vpack.c.bf16 %v603, %v603
      %v607 = vld [vmem:[%s5] sm:$0xf]
      %v608 = vld [vmem:[%s5 + $0x4] sm:$0xf]
      %v609 = vld [vmem:[%s5 + $0x8] sm:$0xf]
      %v610 = vld [vmem:[%s5 + $0xc] sm:$0xf]
      %v611 = vld [vmem:[%s6] sm:$0x1]
      %v613 = vlaneseq
      %v614 = vshrl.u32 %v613, 7
      %v615 = vsub.s32 0, %v614
      %v616 = vrot.slane %v611, %v615
      %v622 = vunpack.c.l.b16 %v607
      %v623 = vunpack.c.l.b16 %v608
      %v624 = vunpack.c.l.b16 %v609
      %v625 = vunpack.c.l.b16 %v610
      %v626 = vpack.c.b16 %v623, %v622
      %v627 = vpack.c.b16 %v625, %v624
      %v631 = vsel %vm579, %v605, 0
      %633 = vmatprep.subr.bf16.mxu0 0
      %634 = vmatpush1.bf16.msra.mxu0 %v626
      %635 = vmatprep.subr.bf16.mxu0 0
      %636 = vmatpush1.bf16.msra.mxu0 %v627
      %637 = vmatprep.subr.bf16.mxu0 0
      %638 = vmatpush1.bf16.msra.mxu0 0
      %639 = vmatprep.subr.bf16.mxu0 0
      %640 = vmatpush1.bf16.msra.mxu0 0
      %641 = vmatprep.subr.bf16.mxu0 0
      %642 = vmatpush1.bf16.msra.mxu0 0
      %643 = vmatprep.subr.bf16.mxu0 0
      %644 = vmatpush1.bf16.msra.mxu0 0
      %645 = vmatprep.subr.bf16.mxu0 0
      %646 = vmatpush1.bf16.msra.mxu0 0
      %647 = vmatprep.subr.bf16.mxu0 0
      %648 = vmatpush1.bf16.msra.mxu0 0
      %649 = vmatprep.subr.bf16.mxu0 0
      %650 = vmatpush1.bf16.msra.mxu0 0
      %651 = vmatprep.subr.bf16.mxu0 0
      %652 = vmatpush1.bf16.msra.mxu0 0
      %653 = vmatprep.subr.bf16.mxu0 0
      %654 = vmatpush1.bf16.msra.mxu0 0
      %655 = vmatprep.subr.bf16.mxu0 0
      %656 = vmatpush1.bf16.msra.mxu0 0
      %657 = vmatprep.subr.bf16.mxu0 0
      %658 = vmatpush1.bf16.msra.mxu0 0
      %659 = vmatprep.subr.bf16.mxu0 0
      %660 = vmatpush1.bf16.msra.mxu0 0
      %661 = vmatprep.subr.bf16.mxu0 0
      %662 = vmatpush1.bf16.msra.mxu0 0
      %663 = vmatprep.subr.bf16.mxu0 0
      %664 = vmatpush1.bf16.msra.mxu0 0
      %665 = vmatprep.mubr.bf16.mxu0 0
      %666 = vmatmul.mubr.bf16.gmra.mrb[0].mxu0 %v631
      %v667 = vpop.f32.mrb[0].mxu0
      %v668 = vadd.f32 %v616, %v667
      %v669 = vpop.f32.mrb[0].mxu0
      %v670 = vpop.f32.mrb[0].mxu0
      %v671 = vpop.f32.mrb[0].mxu0
      %672 = vdwg.mxu0
      %s673 = scalar_lea.vmem %s5, 16
      %v674 = vld [vmem:[%s673] sm:$0xf]
      %v675 = vld [vmem:[%s673 + $0x4] sm:$0xf]
      %v676 = vld [vmem:[%s673 + $0x8] sm:$0xf]
      %v677 = vld [vmem:[%s673 + $0xc] sm:$0xf]
      %s678 = scalar_lea.vmem %s6, 1
      %v679 = vld [vmem:[%s678] sm:$0x1]
      %v681 = vlaneseq
      %v682 = vshrl.u32 %v681, 7
      %v683 = vsub.s32 0, %v682
      %v684 = vrot.slane %v679, %v683
      %v690 = vunpack.c.l.b16 %v674
      %v691 = vunpack.c.l.b16 %v675
      %v692 = vunpack.c.l.b16 %v676
      %v693 = vunpack.c.l.b16 %v677
      %v694 = vpack.c.b16 %v691, %v690
      %v695 = vpack.c.b16 %v693, %v692
      %698 = vmatprep.subr.bf16.mxu0 0
      %699 = vmatpush1.bf16.msra.mxu0 %v694
      %700 = vmatprep.subr.bf16.mxu0 0
      %701 = vmatpush1.bf16.msra.mxu0 %v695
      %702 = vmatprep.subr.bf16.mxu0 0
      %703 = vmatpush1.bf16.msra.mxu0 0
      %704 = vmatprep.subr.bf16.mxu0 0
      %705 = vmatpush1.bf16.msra.mxu0 0
      %706 = vmatprep.subr.bf16.mxu0 0
      %707 = vmatpush1.bf16.msra.mxu0 0
      %708 = vmatprep.subr.bf16.mxu0 0
      %709 = vmatpush1.bf16.msra.mxu0 0
      %710 = vmatprep.subr.bf16.mxu0 0
      %711 = vmatpush1.bf16.msra.mxu0 0
      %712 = vmatprep.subr.bf16.mxu0 0
      %713 = vmatpush1.bf16.msra.mxu0 0
      %714 = vmatprep.subr.bf16.mxu0 0
      %715 = vmatpush1.bf16.msra.mxu0 0
      %716 = vmatprep.subr.bf16.mxu0 0
      %717 = vmatpush1.bf16.msra.mxu0 0
      %718 = vmatprep.subr.bf16.mxu0 0
      %719 = vmatpush1.bf16.msra.mxu0 0
      %720 = vmatprep.subr.bf16.mxu0 0
      %721 = vmatpush1.bf16.msra.mxu0 0
      %722 = vmatprep.subr.bf16.mxu0 0
      %723 = vmatpush1.bf16.msra.mxu0 0
      %724 = vmatprep.subr.bf16.mxu0 0
      %725 = vmatpush1.bf16.msra.mxu0 0
      %726 = vmatprep.subr.bf16.mxu0 0
      %727 = vmatpush1.bf16.msra.mxu0 0
      %728 = vmatprep.subr.bf16.mxu0 0
      %729 = vmatpush1.bf16.msra.mxu0 0
      %730 = vmatprep.mubr.bf16.mxu0 0
      %731 = vmatmul.mubr.bf16.gmra.mrb[0].mxu0 %v631
      %v732 = vpop.f32.mrb[0].mxu0
      %v733 = vadd.f32 %v684, %v732
      %v734 = vpop.f32.mrb[0].mxu0
      %v735 = vpop.f32.mrb[0].mxu0
      %v736 = vpop.f32.mrb[0].mxu0
      %737 = vdwg.mxu0
      %s738 = scalar_lea.vmem %s5, 32
      %v739 = vld [vmem:[%s738] sm:$0xf]
      %v740 = vld [vmem:[%s738 + $0x4] sm:$0xf]
      %v741 = vld [vmem:[%s738 + $0x8] sm:$0xf]
      %v742 = vld [vmem:[%s738 + $0xc] sm:$0xf]
      %s743 = scalar_lea.vmem %s6, 2
      %v744 = vld [vmem:[%s743] sm:$0x1]
      %v746 = vlaneseq
      %v747 = vshrl.u32 %v746, 7
      %v748 = vsub.s32 0, %v747
      %v749 = vrot.slane %v744, %v748
      %v755 = vunpack.c.l.b16 %v739
      %v756 = vunpack.c.l.b16 %v740
      %v757 = vunpack.c.l.b16 %v741
      %v758 = vunpack.c.l.b16 %v742
      %v759 = vpack.c.b16 %v756, %v755
      %v760 = vpack.c.b16 %v758, %v757
      %v764 = vsel %vm579, %v606, 0
      %766 = vmatprep.subr.bf16.mxu0 0
      %767 = vmatpush1.bf16.msra.mxu0 %v759
      %768 = vmatprep.subr.bf16.mxu0 0
      %769 = vmatpush1.bf16.msra.mxu0 %v760
      %770 = vmatprep.subr.bf16.mxu0 0
      %771 = vmatpush1.bf16.msra.mxu0 0
      %772 = vmatprep.subr.bf16.mxu0 0
      %773 = vmatpush1.bf16.msra.mxu0 0
      %774 = vmatprep.subr.bf16.mxu0 0
      %775 = vmatpush1.bf16.msra.mxu0 0
      %776 = vmatprep.subr.bf16.mxu0 0
      %777 = vmatpush1.bf16.msra.mxu0 0
      %778 = vmatprep.subr.bf16.mxu0 0
      %779 = vmatpush1.bf16.msra.mxu0 0
      %780 = vmatprep.subr.bf16.mxu0 0
      %781 = vmatpush1.bf16.msra.mxu0 0
      %782 = vmatprep.subr.bf16.mxu0 0
      %783 = vmatpush1.bf16.msra.mxu0 0
      %784 = vmatprep.subr.bf16.mxu0 0
      %785 = vmatpush1.bf16.msra.mxu0 0
      %786 = vmatprep.subr.bf16.mxu0 0
      %787 = vmatpush1.bf16.msra.mxu0 0
      %788 = vmatprep.subr.bf16.mxu0 0
      %789 = vmatpush1.bf16.msra.mxu0 0
      %790 = vmatprep.subr.bf16.mxu0 0
      %791 = vmatpush1.bf16.msra.mxu0 0
      %792 = vmatprep.subr.bf16.mxu0 0
      %793 = vmatpush1.bf16.msra.mxu0 0
      %794 = vmatprep.subr.bf16.mxu0 0
      %795 = vmatpush1.bf16.msra.mxu0 0
      %796 = vmatprep.subr.bf16.mxu0 0
      %797 = vmatpush1.bf16.msra.mxu0 0
      %798 = vmatprep.mubr.bf16.mxu0 0
      %799 = vmatmul.mubr.bf16.gmra.mrb[0].mxu0 %v764
      %v800 = vpop.f32.mrb[0].mxu0
      %v801 = vadd.f32 %v749, %v800
      %v802 = vpop.f32.mrb[0].mxu0
      %v803 = vpop.f32.mrb[0].mxu0
      %v804 = vpop.f32.mrb[0].mxu0
      %805 = vdwg.mxu0
      %807 = vrot.lane.b32.xlu0 %v668, 120
      %v808 = vpop.permute.xlu0 %807
      %810 = vrot.lane.b32.xlu0 %v668, 112
      %v811 = vpop.permute.xlu0 %810
      %813 = vrot.lane.b32.xlu0 %v668, 104
      %v814 = vpop.permute.xlu0 %813
      %817 = vrot.lane.b32.xlu0 %v733, 120
      %v818 = vpop.permute.xlu0 %817
      %820 = vrot.lane.b32.xlu0 %v733, 112
      %v821 = vpop.permute.xlu0 %820
      %823 = vrot.lane.b32.xlu0 %v733, 104
      %v824 = vpop.permute.xlu0 %823
      %827 = vrot.lane.b32.xlu0 %v801, 120
      %v828 = vpop.permute.xlu0 %827
      %830 = vrot.lane.b32.xlu0 %v801, 112
      %v831 = vpop.permute.xlu0 %830
      %833 = vrot.lane.b32.xlu0 %v801, 104
      %v834 = vpop.permute.xlu0 %833
      %v836 = vpack.c.bf16 %v668, %v668
      %v837 = vpack.c.bf16 %v808, %v808
      %v838 = vpack.c.bf16 %v811, %v811
      %v839 = vpack.c.bf16 %v814, %v814
      %v840 = vpack.c.bf16 %v733, %v733
      %v841 = vpack.c.bf16 %v818, %v818
      %v842 = vpack.c.bf16 %v821, %v821
      %v843 = vpack.c.bf16 %v824, %v824
      %vm844 = vcmask 64512
      %v846 = vsel %vm844, %v836, 0
      %v849 = vsel %vm844, %v840, 0
      %851 = vmatprep.subr.bf16.mxu0 0
      %852 = vmatpush1.bf16.xpose.msra.mxu0 %v849
      %853 = vmatprep.subr.bf16.mxu0 0
      %854 = vmatpush1.bf16.xpose.msra.mxu0 0
      %855 = vmatprep.subr.bf16.mxu0 0
      %856 = vmatpush1.bf16.xpose.msra.mxu0 0
      %857 = vmatprep.subr.bf16.mxu0 0
      %858 = vmatpush1.bf16.xpose.msra.mxu0 0
      %859 = vmatprep.subr.bf16.mxu0 0
      %860 = vmatpush1.bf16.xpose.msra.mxu0 0
      %861 = vmatprep.subr.bf16.mxu0 0
      %862 = vmatpush1.bf16.xpose.msra.mxu0 0
      %863 = vmatprep.subr.bf16.mxu0 0
      %864 = vmatpush1.bf16.xpose.msra.mxu0 0
      %865 = vmatprep.subr.bf16.mxu0 0
      %866 = vmatpush1.bf16.xpose.msra.mxu0 0
      %867 = vmatprep.subr.bf16.mxu0 0
      %868 = vmatpush1.bf16.xpose.msra.mxu0 0
      %869 = vmatprep.subr.bf16.mxu0 0
      %870 = vmatpush1.bf16.xpose.msra.mxu0 0
      %871 = vmatprep.subr.bf16.mxu0 0
      %872 = vmatpush1.bf16.xpose.msra.mxu0 0
      %873 = vmatprep.subr.bf16.mxu0 0
      %874 = vmatpush1.bf16.xpose.msra.mxu0 0
      %875 = vmatprep.subr.bf16.mxu0 0
      %876 = vmatpush1.bf16.xpose.msra.mxu0 0
      %877 = vmatprep.subr.bf16.mxu0 0
      %878 = vmatpush1.bf16.xpose.msra.mxu0 0
      %879 = vmatprep.subr.bf16.mxu0 0
      %880 = vmatpush1.bf16.xpose.msra.mxu0 0
      %881 = vmatprep.subr.bf16.mxu0 0
      %882 = vmatpush1.bf16.xpose.msra.mxu0 0
      %883 = vmatprep.mubr.bf16.mxu0 0
      %884 = vmatmul.mubr.bf16.gmra.mrb[0].mxu0 %v846
      %v885 = vpop.f32.mrb[0].mxu0
      %v886 = vadd.f32 0.0, %v885
      %v887 = vpop.f32.mrb[0].mxu0
      %v888 = vpop.f32.mrb[0].mxu0
      %v889 = vpop.f32.mrb[0].mxu0
      %890 = vdwg.mxu0
      %v892 = vsel %vm844, %v837, 0
      %v895 = vsel %vm844, %v841, 0
      %897 = vmatprep.subr.bf16.mxu0 0
      %898 = vmatpush1.bf16.xpose.msra.mxu0 %v895
      %899 = vmatprep.subr.bf16.mxu0 0
      %900 = vmatpush1.bf16.xpose.msra.mxu0 0
      %901 = vmatprep.subr.bf16.mxu0 0
      %902 = vmatpush1.bf16.xpose.msra.mxu0 0
      %903 = vmatprep.subr.bf16.mxu0 0
      %904 = vmatpush1.bf16.xpose.msra.mxu0 0
      %905 = vmatprep.subr.bf16.mxu0 0
      %906 = vmatpush1.bf16.xpose.msra.mxu0 0
      %907 = vmatprep.subr.bf16.mxu0 0
      %908 = vmatpush1.bf16.xpose.msra.mxu0 0
      %909 = vmatprep.subr.bf16.mxu0 0
      %910 = vmatpush1.bf16.xpose.msra.mxu0 0
      %911 = vmatprep.subr.bf16.mxu0 0
      %912 = vmatpush1.bf16.xpose.msra.mxu0 0
      %913 = vmatprep.subr.bf16.mxu0 0
      %914 = vmatpush1.bf16.xpose.msra.mxu0 0
      %915 = vmatprep.subr.bf16.mxu0 0
      %916 = vmatpush1.bf16.xpose.msra.mxu0 0
      %917 = vmatprep.subr.bf16.mxu0 0
      %918 = vmatpush1.bf16.xpose.msra.mxu0 0
      %919 = vmatprep.subr.bf16.mxu0 0
      %920 = vmatpush1.bf16.xpose.msra.mxu0 0
      %921 = vmatprep.subr.bf16.mxu0 0
      %922 = vmatpush1.bf16.xpose.msra.mxu0 0
      %923 = vmatprep.subr.bf16.mxu0 0
      %924 = vmatpush1.bf16.xpose.msra.mxu0 0
      %925 = vmatprep.subr.bf16.mxu0 0
      %926 = vmatpush1.bf16.xpose.msra.mxu0 0
      %927 = vmatprep.subr.bf16.mxu0 0
      %928 = vmatpush1.bf16.xpose.msra.mxu0 0
      %929 = vmatprep.mubr.bf16.mxu0 0
      %930 = vmatmul.mubr.bf16.gmra.mrb[0].mxu0 %v892
      %v931 = vpop.f32.mrb[0].mxu0
      %v932 = vadd.f32 0.0, %v931
      %v933 = vpop.f32.mrb[0].mxu0
      %v934 = vpop.f32.mrb[0].mxu0
      %v935 = vpop.f32.mrb[0].mxu0
      %936 = vdwg.mxu0
      %v938 = vsel %vm844, %v838, 0
      %v941 = vsel %vm844, %v842, 0
      %943 = vmatprep.subr.bf16.mxu0 0
      %944 = vmatpush1.bf16.xpose.msra.mxu0 %v941
      %945 = vmatprep.subr.bf16.mxu0 0
      %946 = vmatpush1.bf16.xpose.msra.mxu0 0
      %947 = vmatprep.subr.bf16.mxu0 0
      %948 = vmatpush1.bf16.xpose.msra.mxu0 0
      %949 = vmatprep.subr.bf16.mxu0 0
      %950 = vmatpush1.bf16.xpose.msra.mxu0 0
      %951 = vmatprep.subr.bf16.mxu0 0
      %952 = vmatpush1.bf16.xpose.msra.mxu0 0
      %953 = vmatprep.subr.bf16.mxu0 0
      %954 = vmatpush1.bf16.xpose.msra.mxu0 0
      %955 = vmatprep.subr.bf16.mxu0 0
      %956 = vmatpush1.bf16.xpose.msra.mxu0 0
      %957 = vmatprep.subr.bf16.mxu0 0
      %958 = vmatpush1.bf16.xpose.msra.mxu0 0
      %959 = vmatprep.subr.bf16.mxu0 0
      %960 = vmatpush1.bf16.xpose.msra.mxu0 0
      %961 = vmatprep.subr.bf16.mxu0 0
      %962 = vmatpush1.bf16.xpose.msra.mxu0 0
      %963 = vmatprep.subr.bf16.mxu0 0
      %964 = vmatpush1.bf16.xpose.msra.mxu0 0
      %965 = vmatprep.subr.bf16.mxu0 0
      %966 = vmatpush1.bf16.xpose.msra.mxu0 0
      %967 = vmatprep.subr.bf16.mxu0 0
      %968 = vmatpush1.bf16.xpose.msra.mxu0 0
      %969 = vmatprep.subr.bf16.mxu0 0
      %970 = vmatpush1.bf16.xpose.msra.mxu0 0
      %971 = vmatprep.subr.bf16.mxu0 0
      %972 = vmatpush1.bf16.xpose.msra.mxu0 0
      %973 = vmatprep.subr.bf16.mxu0 0
      %974 = vmatpush1.bf16.xpose.msra.mxu0 0
      %975 = vmatprep.mubr.bf16.mxu0 0
      %976 = vmatmul.mubr.bf16.gmra.mrb[0].mxu0 %v938
      %v977 = vpop.f32.mrb[0].mxu0
      %v978 = vadd.f32 0.0, %v977
      %v979 = vpop.f32.mrb[0].mxu0
      %v980 = vpop.f32.mrb[0].mxu0
      %v981 = vpop.f32.mrb[0].mxu0
      %982 = vdwg.mxu0
      %v984 = vsel %vm844, %v839, 0
      %v987 = vsel %vm844, %v843, 0
      %989 = vmatprep.subr.bf16.mxu0 0
      %990 = vmatpush1.bf16.xpose.msra.mxu0 %v987
      %991 = vmatprep.subr.bf16.mxu0 0
      %992 = vmatpush1.bf16.xpose.msra.mxu0 0
      %993 = vmatprep.subr.bf16.mxu0 0
      %994 = vmatpush1.bf16.xpose.msra.mxu0 0
      %995 = vmatprep.subr.bf16.mxu0 0
      %996 = vmatpush1.bf16.xpose.msra.mxu0 0
      %997 = vmatprep.subr.bf16.mxu0 0
      %998 = vmatpush1.bf16.xpose.msra.mxu0 0
      %999 = vmatprep.subr.bf16.mxu0 0
      %1000 = vmatpush1.bf16.xpose.msra.mxu0 0
      %1001 = vmatprep.subr.bf16.mxu0 0
      %1002 = vmatpush1.bf16.xpose.msra.mxu0 0
      %1003 = vmatprep.subr.bf16.mxu0 0
      %1004 = vmatpush1.bf16.xpose.msra.mxu0 0
      %1005 = vmatprep.subr.bf16.mxu0 0
      %1006 = vmatpush1.bf16.xpose.msra.mxu0 0
      %1007 = vmatprep.subr.bf16.mxu0 0
      %1008 = vmatpush1.bf16.xpose.msra.mxu0 0
      %1009 = vmatprep.subr.bf16.mxu0 0
      %1010 = vmatpush1.bf16.xpose.msra.mxu0 0
      %1011 = vmatprep.subr.bf16.mxu0 0
      %1012 = vmatpush1.bf16.xpose.msra.mxu0 0
      %1013 = vmatprep.subr.bf16.mxu0 0
      %1014 = vmatpush1.bf16.xpose.msra.mxu0 0
      %1015 = vmatprep.subr.bf16.mxu0 0
      %1016 = vmatpush1.bf16.xpose.msra.mxu0 0
      %1017 = vmatprep.subr.bf16.mxu0 0
      %1018 = vmatpush1.bf16.xpose.msra.mxu0 0
      %1019 = vmatprep.subr.bf16.mxu0 0
      %1020 = vmatpush1.bf16.xpose.msra.mxu0 0
      %1021 = vmatprep.mubr.bf16.mxu0 0
      %1022 = vmatmul.mubr.bf16.gmra.mrb[0].mxu0 %v984
      %v1023 = vpop.f32.mrb[0].mxu0
      %v1024 = vadd.f32 0.0, %v1023
      %v1025 = vpop.f32.mrb[0].mxu0
      %v1026 = vpop.f32.mrb[0].mxu0
      %v1027 = vpop.f32.mrb[0].mxu0
      %1028 = vdwg.mxu0
      %v1029 = vsel %vm844, %v886, -inf
      %1030 = vmax.xlane.f32.xlu0 %v1029
      %v1031 = vpop.xlane.xlu0 %1030
      %v1032 = vsel %vm844, %v932, -inf
      %1033 = vmax.xlane.f32.xlu0 %v1032
      %v1034 = vpop.xlane.xlu0 %1033
      %v1035 = vsel %vm844, %v978, -inf
      %1036 = vmax.xlane.f32.xlu0 %v1035
      %v1037 = vpop.xlane.xlu0 %1036
      %v1038 = vsel %vm844, %v1024, -inf
      %1039 = vmax.xlane.f32.xlu0 %v1038
      %v1040 = vpop.xlane.xlu0 %1039
      %v1041 = vsub.f32 %v886, %v1031
      %v1042 = vsub.f32 %v932, %v1034
      %v1043 = vsub.f32 %v978, %v1037
      %v1044 = vsub.f32 %v1024, %v1040
      %v1045 = vmul.f32 %v1041, 1.442695
      %v1046 = vpow.pop %v1045
      %v1047 = vmul.f32 %v1042, 1.442695
      %v1048 = vpow.pop %v1047
      %v1049 = vmul.f32 %v1043, 1.442695
      %v1050 = vpow.pop %v1049
      %v1051 = vmul.f32 %v1044, 1.442695
      %v1052 = vpow.pop %v1051
      %v1053 = vsel %vm844, %v1046, 0.0
      %1054 = vadd.xlane.f32.xlu0 %v1053
      %v1055 = vpop.xlane.xlu0 %1054
      %v1056 = vsel %vm844, %v1048, 0.0
      %1057 = vadd.xlane.f32.xlu0 %v1056
      %v1058 = vpop.xlane.xlu0 %1057
      %v1059 = vsel %vm844, %v1050, 0.0
      %1060 = vadd.xlane.f32.xlu0 %v1059
      %v1061 = vpop.xlane.xlu0 %1060
      %v1062 = vsel %vm844, %v1052, 0.0
      %1063 = vadd.xlane.f32.xlu0 %v1062
      %v1064 = vpop.xlane.xlu0 %1063
      %v1065 = vrcp.pop %v1055
      %v1066 = vrcp.pop %v1058
      %v1067 = vrcp.pop %v1061
      %v1068 = vrcp.pop %v1064
      %v1069 = vmul.f32 %v1046, %v1065
      %v1070 = vmul.f32 %v1048, %v1066
      %v1071 = vmul.f32 %v1050, %v1067
      %v1072 = vmul.f32 %v1052, %v1068
      %v1073 = vpack.c.bf16 %v1069, %v1069
      %v1074 = vpack.c.bf16 %v1070, %v1070
      %v1075 = vpack.c.bf16 %v1071, %v1071
      %v1076 = vpack.c.bf16 %v1072, %v1072
      %v1077 = vpack.c.bf16 %v801, %v801
      %v1078 = vpack.c.bf16 %v828, %v828
      %v1079 = vpack.c.bf16 %v831, %v831
      %v1080 = vpack.c.bf16 %v834, %v834
      %v1082 = vsel %vm844, %v1073, 0
      %vm1084 = vcmask 1043456
      %v1086 = vsel %vm1084, %v1077, 0
      %1088 = vmatprep.subr.bf16.mxu0 0
      %1089 = vmatpush1.bf16.msra.mxu0 %v1086
      %1090 = vmatprep.subr.bf16.mxu0 0
      %1091 = vmatpush1.bf16.msra.mxu0 0
      %1092 = vmatprep.subr.bf16.mxu0 0
      %1093 = vmatpush1.bf16.msra.mxu0 0
      %1094 = vmatprep.subr.bf16.mxu0 0
      %1095 = vmatpush1.bf16.msra.mxu0 0
      %1096 = vmatprep.subr.bf16.mxu0 0
      %1097 = vmatpush1.bf16.msra.mxu0 0
      %1098 = vmatprep.subr.bf16.mxu0 0
      %1099 = vmatpush1.bf16.msra.mxu0 0
      %1100 = vmatprep.subr.bf16.mxu0 0
      %1101 = vmatpush1.bf16.msra.mxu0 0
      %1102 = vmatprep.subr.bf16.mxu0 0
      %1103 = vmatpush1.bf16.msra.mxu0 0
      %1104 = vmatprep.subr.bf16.mxu0 0
      %1105 = vmatpush1.bf16.msra.mxu0 0
      %1106 = vmatprep.subr.bf16.mxu0 0
      %1107 = vmatpush1.bf16.msra.mxu0 0
      %1108 = vmatprep.subr.bf16.mxu0 0
      %1109 = vmatpush1.bf16.msra.mxu0 0
      %1110 = vmatprep.subr.bf16.mxu0 0
      %1111 = vmatpush1.bf16.msra.mxu0 0
      %1112 = vmatprep.subr.bf16.mxu0 0
      %1113 = vmatpush1.bf16.msra.mxu0 0
      %1114 = vmatprep.subr.bf16.mxu0 0
      %1115 = vmatpush1.bf16.msra.mxu0 0
      %1116 = vmatprep.subr.bf16.mxu0 0
      %1117 = vmatpush1.bf16.msra.mxu0 0
      %1118 = vmatprep.subr.bf16.mxu0 0
      %1119 = vmatpush1.bf16.msra.mxu0 0
      %1120 = vmatprep.mubr.bf16.mxu0 0
      %1121 = vmatmul.mubr.bf16.gmra.mrb[0].mxu0 %v1082
      %v1122 = vpop.f32.mrb[0].mxu0
      %v1123 = vadd.f32 0.0, %v1122
      %v1124 = vpop.f32.mrb[0].mxu0
      %v1125 = vpop.f32.mrb[0].mxu0
      %v1126 = vpop.f32.mrb[0].mxu0
      %1127 = vdwg.mxu0
      %v1129 = vsel %vm844, %v1074, 0
      %v1132 = vsel %vm1084, %v1078, 0
      %1134 = vmatprep.subr.bf16.mxu0 0
      %1135 = vmatpush1.bf16.msra.mxu0 %v1132
      %1136 = vmatprep.subr.bf16.mxu0 0
      %1137 = vmatpush1.bf16.msra.mxu0 0
      %1138 = vmatprep.subr.bf16.mxu0 0
      %1139 = vmatpush1.bf16.msra.mxu0 0
      %1140 = vmatprep.subr.bf16.mxu0 0
      %1141 = vmatpush1.bf16.msra.mxu0 0
      %1142 = vmatprep.subr.bf16.mxu0 0
      %1143 = vmatpush1.bf16.msra.mxu0 0
      %1144 = vmatprep.subr.bf16.mxu0 0
      %1145 = vmatpush1.bf16.msra.mxu0 0
      %1146 = vmatprep.subr.bf16.mxu0 0
      %1147 = vmatpush1.bf16.msra.mxu0 0
      %1148 = vmatprep.subr.bf16.mxu0 0
      %1149 = vmatpush1.bf16.msra.mxu0 0
      %1150 = vmatprep.subr.bf16.mxu0 0
      %1151 = vmatpush1.bf16.msra.mxu0 0
      %1152 = vmatprep.subr.bf16.mxu0 0
      %1153 = vmatpush1.bf16.msra.mxu0 0
      %1154 = vmatprep.subr.bf16.mxu0 0
      %1155 = vmatpush1.bf16.msra.mxu0 0
      %1156 = vmatprep.subr.bf16.mxu0 0
      %1157 = vmatpush1.bf16.msra.mxu0 0
      %1158 = vmatprep.subr.bf16.mxu0 0
      %1159 = vmatpush1.bf16.msra.mxu0 0
      %1160 = vmatprep.subr.bf16.mxu0 0
      %1161 = vmatpush1.bf16.msra.mxu0 0
      %1162 = vmatprep.subr.bf16.mxu0 0
      %1163 = vmatpush1.bf16.msra.mxu0 0
      %1164 = vmatprep.subr.bf16.mxu0 0
      %1165 = vmatpush1.bf16.msra.mxu0 0
      %1166 = vmatprep.mubr.bf16.mxu0 0
      %1167 = vmatmul.mubr.bf16.gmra.mrb[0].mxu0 %v1129
      %v1168 = vpop.f32.mrb[0].mxu0
      %v1169 = vadd.f32 0.0, %v1168
      %v1170 = vpop.f32.mrb[0].mxu0
      %v1171 = vpop.f32.mrb[0].mxu0
      %v1172 = vpop.f32.mrb[0].mxu0
      %1173 = vdwg.mxu0
      %v1175 = vsel %vm844, %v1075, 0
      %v1178 = vsel %vm1084, %v1079, 0
      %1180 = vmatprep.subr.bf16.mxu0 0
      %1181 = vmatpush1.bf16.msra.mxu0 %v1178
      %1182 = vmatprep.subr.bf16.mxu0 0
      %1183 = vmatpush1.bf16.msra.mxu0 0
      %1184 = vmatprep.subr.bf16.mxu0 0
      %1185 = vmatpush1.bf16.msra.mxu0 0
      %1186 = vmatprep.subr.bf16.mxu0 0
      %1187 = vmatpush1.bf16.msra.mxu0 0
      %1188 = vmatprep.subr.bf16.mxu0 0
      %1189 = vmatpush1.bf16.msra.mxu0 0
      %1190 = vmatprep.subr.bf16.mxu0 0
      %1191 = vmatpush1.bf16.msra.mxu0 0
      %1192 = vmatprep.subr.bf16.mxu0 0
      %1193 = vmatpush1.bf16.msra.mxu0 0
      %1194 = vmatprep.subr.bf16.mxu0 0
      %1195 = vmatpush1.bf16.msra.mxu0 0
      %1196 = vmatprep.subr.bf16.mxu0 0
      %1197 = vmatpush1.bf16.msra.mxu0 0
      %1198 = vmatprep.subr.bf16.mxu0 0
      %1199 = vmatpush1.bf16.msra.mxu0 0
      %1200 = vmatprep.subr.bf16.mxu0 0
      %1201 = vmatpush1.bf16.msra.mxu0 0
      %1202 = vmatprep.subr.bf16.mxu0 0
      %1203 = vmatpush1.bf16.msra.mxu0 0
      %1204 = vmatprep.subr.bf16.mxu0 0
      %1205 = vmatpush1.bf16.msra.mxu0 0
      %1206 = vmatprep.subr.bf16.mxu0 0
      %1207 = vmatpush1.bf16.msra.mxu0 0
      %1208 = vmatprep.subr.bf16.mxu0 0
      %1209 = vmatpush1.bf16.msra.mxu0 0
      %1210 = vmatprep.subr.bf16.mxu0 0
      %1211 = vmatpush1.bf16.msra.mxu0 0
      %1212 = vmatprep.mubr.bf16.mxu0 0
      %1213 = vmatmul.mubr.bf16.gmra.mrb[0].mxu0 %v1175
      %v1214 = vpop.f32.mrb[0].mxu0
      %v1215 = vadd.f32 0.0, %v1214
      %v1216 = vpop.f32.mrb[0].mxu0
      %v1217 = vpop.f32.mrb[0].mxu0
      %v1218 = vpop.f32.mrb[0].mxu0
      %1219 = vdwg.mxu0
      %v1221 = vsel %vm844, %v1076, 0
      %v1224 = vsel %vm1084, %v1080, 0
      %1226 = vmatprep.subr.bf16.mxu0 0
      %1227 = vmatpush1.bf16.msra.mxu0 %v1224
      %1228 = vmatprep.subr.bf16.mxu0 0
      %1229 = vmatpush1.bf16.msra.mxu0 0
      %1230 = vmatprep.subr.bf16.mxu0 0
      %1231 = vmatpush1.bf16.msra.mxu0 0
      %1232 = vmatprep.subr.bf16.mxu0 0
      %1233 = vmatpush1.bf16.msra.mxu0 0
      %1234 = vmatprep.subr.bf16.mxu0 0
      %1235 = vmatpush1.bf16.msra.mxu0 0
      %1236 = vmatprep.subr.bf16.mxu0 0
      %1237 = vmatpush1.bf16.msra.mxu0 0
      %1238 = vmatprep.subr.bf16.mxu0 0
      %1239 = vmatpush1.bf16.msra.mxu0 0
      %1240 = vmatprep.subr.bf16.mxu0 0
      %1241 = vmatpush1.bf16.msra.mxu0 0
      %1242 = vmatprep.subr.bf16.mxu0 0
      %1243 = vmatpush1.bf16.msra.mxu0 0
      %1244 = vmatprep.subr.bf16.mxu0 0
      %1245 = vmatpush1.bf16.msra.mxu0 0
      %1246 = vmatprep.subr.bf16.mxu0 0
      %1247 = vmatpush1.bf16.msra.mxu0 0
      %1248 = vmatprep.subr.bf16.mxu0 0
      %1249 = vmatpush1.bf16.msra.mxu0 0
      %1250 = vmatprep.subr.bf16.mxu0 0
      %1251 = vmatpush1.bf16.msra.mxu0 0
      %1252 = vmatprep.subr.bf16.mxu0 0
      %1253 = vmatpush1.bf16.msra.mxu0 0
      %1254 = vmatprep.subr.bf16.mxu0 0
      %1255 = vmatpush1.bf16.msra.mxu0 0
      %1256 = vmatprep.subr.bf16.mxu0 0
      %1257 = vmatpush1.bf16.msra.mxu0 0
      %1258 = vmatprep.mubr.bf16.mxu0 0
      %1259 = vmatmul.mubr.bf16.gmra.mrb[0].mxu0 %v1221
      %v1260 = vpop.f32.mrb[0].mxu0
      %v1261 = vadd.f32 0.0, %v1260
      %v1262 = vpop.f32.mrb[0].mxu0
      %v1263 = vpop.f32.mrb[0].mxu0
      %v1264 = vpop.f32.mrb[0].mxu0
      %1265 = vdwg.mxu0
      %1267 = vrot.lane.b32.xlu0 %v1169, 8
      %v1268 = vpop.permute.xlu0 %1267
      %1271 = vrot.lane.b32.xlu0 %v1215, 16
      %v1272 = vpop.permute.xlu0 %1271
      %1275 = vrot.lane.b32.xlu0 %v1261, 24
      %v1276 = vpop.permute.xlu0 %1275
      %v1278 = vsel %vm844, %v1123, %v1268
      %vm1279 = vcmask 130048
      %v1280 = vsel %vm1279, %v1278, %v1272
      %vm1281 = vcmask 195584
      %v1282 = vsel %vm1281, %v1280, %v1276
      %v1283 = vpack.c.bf16 %v1282, %v1282
      %v1284 = vld [vmem:[%s7] sm:$0xf]
      %v1285 = vld [vmem:[%s7 + $0x4] sm:$0xf]
      %v1286 = vld [vmem:[%s7 + $0x8] sm:$0xf]
      %v1287 = vld [vmem:[%s7 + $0xc] sm:$0xf]
      %s1288 = scalar_lea.vmem %s6, 3
      %v1289 = vld [vmem:[%s1288] sm:$0x1]
      %v1291 = vlaneseq
      %v1292 = vshrl.u32 %v1291, 7
      %v1293 = vsub.s32 0, %v1292
      %v1294 = vrot.slane %v1289, %v1293
      %v1300 = vunpack.c.l.b16 %v1284
      %v1301 = vunpack.c.l.b16 %v1285
      %v1302 = vunpack.c.l.b16 %v1286
      %v1303 = vunpack.c.l.b16 %v1287
      %v1304 = vpack.c.b16 %v1301, %v1300
      %v1305 = vpack.c.b16 %v1303, %v1302
      %v1309 = vsel %vm579, %v1283, 0
      %1311 = vmatprep.subr.bf16.mxu0 0
      %1312 = vmatpush1.bf16.msra.mxu0 %v1304
      %1313 = vmatprep.subr.bf16.mxu0 0
      %1314 = vmatpush1.bf16.msra.mxu0 %v1305
      %1315 = vmatprep.subr.bf16.mxu0 0
      %1316 = vmatpush1.bf16.msra.mxu0 0
      %1317 = vmatprep.subr.bf16.mxu0 0
      %1318 = vmatpush1.bf16.msra.mxu0 0
      %1319 = vmatprep.subr.bf16.mxu0 0
      %1320 = vmatpush1.bf16.msra.mxu0 0
      %1321 = vmatprep.subr.bf16.mxu0 0
      %1322 = vmatpush1.bf16.msra.mxu0 0
      %1323 = vmatprep.subr.bf16.mxu0 0
      %1324 = vmatpush1.bf16.msra.mxu0 0
      %1325 = vmatprep.subr.bf16.mxu0 0
      %1326 = vmatpush1.bf16.msra.mxu0 0
      %1327 = vmatprep.subr.bf16.mxu0 0
      %1328 = vmatpush1.bf16.msra.mxu0 0
      %1329 = vmatprep.subr.bf16.mxu0 0
      %1330 = vmatpush1.bf16.msra.mxu0 0
      %1331 = vmatprep.subr.bf16.mxu0 0
      %1332 = vmatpush1.bf16.msra.mxu0 0
      %1333 = vmatprep.subr.bf16.mxu0 0
      %1334 = vmatpush1.bf16.msra.mxu0 0
      %1335 = vmatprep.subr.bf16.mxu0 0
      %1336 = vmatpush1.bf16.msra.mxu0 0
      %1337 = vmatprep.subr.bf16.mxu0 0
      %1338 = vmatpush1.bf16.msra.mxu0 0
      %1339 = vmatprep.subr.bf16.mxu0 0
      %1340 = vmatpush1.bf16.msra.mxu0 0
      %1341 = vmatprep.subr.bf16.mxu0 0
      %1342 = vmatpush1.bf16.msra.mxu0 0
      %1343 = vmatprep.mubr.bf16.mxu0 0
      %1344 = vmatmul.mubr.bf16.gmra.mrb[0].mxu0 %v1309
      %v1345 = vpop.f32.mrb[0].mxu0
      %v1346 = vadd.f32 %v1294, %v1345
      %v1347 = vpop.f32.mrb[0].mxu0
      %v1348 = vpop.f32.mrb[0].mxu0
      %v1349 = vpop.f32.mrb[0].mxu0
      %1350 = vdwg.mxu0
      %v1351 = vadd.f32 %v571, %v1346
      %v1352 = vld [vmem:[%s4 + $0x2] sm:$0x1]
      %v1353 = vld [vmem:[%s4 + $0x3] sm:$0x1]
      %v1354 = vsel %vm579, %v1351, 0.0
      %1355 = vadd.xlane.f32.xlu0 %v1354
      %v1356 = vpop.xlane.xlu0 %1355
      %v1357 = vmul.f32 %v1356, %v583
      %v1358 = vsub.f32 %v1351, %v1357
      %v1359 = vmul.f32 %v1358, %v1358
      %v1360 = vsel %vm579, %v1359, 0.0
      %1361 = vadd.xlane.f32.xlu0 %v1360
      %v1362 = vpop.xlane.xlu0 %1361
      %v1363 = vmul.f32 %v1362, %v583
      %v1364 = vadd.f32 %v1363, 1e-05
      %v1365 = vrsqrt.pop %v1364
      %v1366 = vmul.f32 %v1358, %v1365
      %v1367 = vlaneseq
      %v1368 = vshrl.u32 %v1367, 7
      %v1369 = vsub.s32 0, %v1368
      %v1370 = vrot.slane %v1352, %v1369
      %v1371 = vmul.f32 %v1366, %v1370
      %v1372 = vlaneseq
      %v1373 = vshrl.u32 %v1372, 7
      %v1374 = vsub.s32 0, %v1373
      %v1375 = vrot.slane %v1353, %v1374
      %v1376 = vadd.f32 %v1371, %v1375
      %v1377 = vadd.f32 %v1376, %v574
      %v1378 = vadd.f32 %v572, %v575
      %v1379 = vadd.f32 %v573, %v576
      %v1380 = vpack.c.bf16 %v1377, %v1377
      %v1381 = vpack.c.bf16 %v1379, %v1378
      %v1382 = vpack.c.bf16 %v573, %v572
      %v1383 = vld [vmem:[%s8] sm:$0xf]
      %v1384 = vld [vmem:[%s8 + $0x4] sm:$0xf]
      %v1385 = vld [vmem:[%s8 + $0x8] sm:$0xf]
      %v1386 = vld [vmem:[%s8 + $0xc] sm:$0xf]
      %v1387 = vld [vmem:[%s9] sm:$0x1]
      %v1389 = vlaneseq
      %v1390 = vshrl.u32 %v1389, 7
      %v1391 = vsub.s32 0, %v1390
      %v1392 = vrot.slane %v1387, %v1391
      %v1398 = vunpack.c.l.b16 %v1383
      %v1399 = vunpack.c.l.b16 %v1384
      %v1400 = vunpack.c.l.b16 %v1385
      %v1401 = vunpack.c.l.b16 %v1386
      %v1402 = vpack.c.b16 %v1399, %v1398
      %v1403 = vpack.c.b16 %v1401, %v1400
      %v1407 = vsel %vm579, %v1380, 0
      %1409 = vmatprep.subr.bf16.mxu0 0
      %1410 = vmatpush1.bf16.msra.mxu0 %v1402
      %1411 = vmatprep.subr.bf16.mxu0 0
      %1412 = vmatpush1.bf16.msra.mxu0 %v1403
      %1413 = vmatprep.subr.bf16.mxu0 0
      %1414 = vmatpush1.bf16.msra.mxu0 0
      %1415 = vmatprep.subr.bf16.mxu0 0
      %1416 = vmatpush1.bf16.msra.mxu0 0
      %1417 = vmatprep.subr.bf16.mxu0 0
      %1418 = vmatpush1.bf16.msra.mxu0 0
      %1419 = vmatprep.subr.bf16.mxu0 0
      %1420 = vmatpush1.bf16.msra.mxu0 0
      %1421 = vmatprep.subr.bf16.mxu0 0
      %1422 = vmatpush1.bf16.msra.mxu0 0
      %1423 = vmatprep.subr.bf16.mxu0 0
      %1424 = vmatpush1.bf16.msra.mxu0 0
      %1425 = vmatprep.subr.bf16.mxu0 0
      %1426 = vmatpush1.bf16.msra.mxu0 0
      %1427 = vmatprep.subr.bf16.mxu0 0
      %1428 = vmatpush1.bf16.msra.mxu0 0
      %1429 = vmatprep.subr.bf16.mxu0 0
      %1430 = vmatpush1.bf16.msra.mxu0 0
      %1431 = vmatprep.subr.bf16.mxu0 0
      %1432 = vmatpush1.bf16.msra.mxu0 0
      %1433 = vmatprep.subr.bf16.mxu0 0
      %1434 = vmatpush1.bf16.msra.mxu0 0
      %1435 = vmatprep.subr.bf16.mxu0 0
      %1436 = vmatpush1.bf16.msra.mxu0 0
      %1437 = vmatprep.subr.bf16.mxu0 0
      %1438 = vmatpush1.bf16.msra.mxu0 0
      %1439 = vmatprep.subr.bf16.mxu0 0
      %1440 = vmatpush1.bf16.msra.mxu0 0
      %1441 = vmatprep.mubr.bf16.mxu0 0
      %1442 = vmatmul.mubr.bf16.gmra.mrb[0].mxu0 %v1407
      %v1443 = vpop.f32.mrb[0].mxu0
      %v1444 = vadd.f32 %v1392, %v1443
      %v1445 = vpop.f32.mrb[0].mxu0
      %v1446 = vpop.f32.mrb[0].mxu0
      %v1447 = vpop.f32.mrb[0].mxu0
      %1448 = vdwg.mxu0
      %s1449 = scalar_lea.vmem %s8, 16
      %v1450 = vld [vmem:[%s1449] sm:$0xf]
      %v1451 = vld [vmem:[%s1449 + $0x4] sm:$0xf]
      %v1452 = vld [vmem:[%s1449 + $0x8] sm:$0xf]
      %v1453 = vld [vmem:[%s1449 + $0xc] sm:$0xf]
      %s1454 = scalar_lea.vmem %s9, 1
      %v1455 = vld [vmem:[%s1454] sm:$0x1]
      %v1457 = vlaneseq
      %v1458 = vshrl.u32 %v1457, 7
      %v1459 = vsub.s32 0, %v1458
      %v1460 = vrot.slane %v1455, %v1459
      %v1466 = vunpack.c.l.b16 %v1450
      %v1467 = vunpack.c.l.b16 %v1451
      %v1468 = vunpack.c.l.b16 %v1452
      %v1469 = vunpack.c.l.b16 %v1453
      %v1470 = vpack.c.b16 %v1467, %v1466
      %v1471 = vpack.c.b16 %v1469, %v1468
      %v1475 = vsel %vm579, %v1381, 0
      %1477 = vmatprep.subr.bf16.mxu0 0
      %1478 = vmatpush1.bf16.msra.mxu0 %v1470
      %1479 = vmatprep.subr.bf16.mxu0 0
      %1480 = vmatpush1.bf16.msra.mxu0 %v1471
      %1481 = vmatprep.subr.bf16.mxu0 0
      %1482 = vmatpush1.bf16.msra.mxu0 0
      %1483 = vmatprep.subr.bf16.mxu0 0
      %1484 = vmatpush1.bf16.msra.mxu0 0
      %1485 = vmatprep.subr.bf16.mxu0 0
      %1486 = vmatpush1.bf16.msra.mxu0 0
      %1487 = vmatprep.subr.bf16.mxu0 0
      %1488 = vmatpush1.bf16.msra.mxu0 0
      %1489 = vmatprep.subr.bf16.mxu0 0
      %1490 = vmatpush1.bf16.msra.mxu0 0
      %1491 = vmatprep.subr.bf16.mxu0 0
      %1492 = vmatpush1.bf16.msra.mxu0 0
      %1493 = vmatprep.subr.bf16.mxu0 0
      %1494 = vmatpush1.bf16.msra.mxu0 0
      %1495 = vmatprep.subr.bf16.mxu0 0
      %1496 = vmatpush1.bf16.msra.mxu0 0
      %1497 = vmatprep.subr.bf16.mxu0 0
      %1498 = vmatpush1.bf16.msra.mxu0 0
      %1499 = vmatprep.subr.bf16.mxu0 0
      %1500 = vmatpush1.bf16.msra.mxu0 0
      %1501 = vmatprep.subr.bf16.mxu0 0
      %1502 = vmatpush1.bf16.msra.mxu0 0
      %1503 = vmatprep.subr.bf16.mxu0 0
      %1504 = vmatpush1.bf16.msra.mxu0 0
      %1505 = vmatprep.subr.bf16.mxu0 0
      %1506 = vmatpush1.bf16.msra.mxu0 0
      %1507 = vmatprep.subr.bf16.mxu0 0
      %1508 = vmatpush1.bf16.msra.mxu0 0
      %1509 = vmatprep.mubr.bf16.mxu0 0
      %1510 = vmatmul.mubr.bf16.gmra.mrb[0].mxu0 %v1475
      %v1511 = vpop.f32.mrb[0].mxu0
      %v1512 = vadd.f32 %v1460, %v1511
      %v1513 = vpop.f32.mrb[0].mxu0
      %v1514 = vpop.f32.mrb[0].mxu0
      %v1515 = vadd.f32 %v1460, %v1514
      %v1516 = vpop.f32.mrb[0].mxu0
      %1517 = vdwg.mxu0
      %s1518 = scalar_lea.vmem %s8, 32
      %v1519 = vld [vmem:[%s1518] sm:$0xf]
      %v1520 = vld [vmem:[%s1518 + $0x4] sm:$0xf]
      %v1521 = vld [vmem:[%s1518 + $0x8] sm:$0xf]
      %v1522 = vld [vmem:[%s1518 + $0xc] sm:$0xf]
      %s1523 = scalar_lea.vmem %s9, 2
      %v1524 = vld [vmem:[%s1523] sm:$0x1]
      %v1526 = vlaneseq
      %v1527 = vshrl.u32 %v1526, 7
      %v1528 = vsub.s32 0, %v1527
      %v1529 = vrot.slane %v1524, %v1528
      %v1535 = vunpack.c.l.b16 %v1519
      %v1536 = vunpack.c.l.b16 %v1520
      %v1537 = vunpack.c.l.b16 %v1521
      %v1538 = vunpack.c.l.b16 %v1522
      %v1539 = vpack.c.b16 %v1536, %v1535
      %v1540 = vpack.c.b16 %v1538, %v1537
      %v1544 = vsel %vm579, %v1382, 0
      %1546 = vmatprep.subr.bf16.mxu0 0
      %1547 = vmatpush1.bf16.msra.mxu0 %v1539
      %1548 = vmatprep.subr.bf16.mxu0 0
      %1549 = vmatpush1.bf16.msra.mxu0 %v1540
      %1550 = vmatprep.subr.bf16.mxu0 0
      %1551 = vmatpush1.bf16.msra.mxu0 0
      %1552 = vmatprep.subr.bf16.mxu0 0
      %1553 = vmatpush1.bf16.msra.mxu0 0
      %1554 = vmatprep.subr.bf16.mxu0 0
      %1555 = vmatpush1.bf16.msra.mxu0 0
      %1556 = vmatprep.subr.bf16.mxu0 0
      %1557 = vmatpush1.bf16.msra.mxu0 0
      %1558 = vmatprep.subr.bf16.mxu0 0
      %1559 = vmatpush1.bf16.msra.mxu0 0
      %1560 = vmatprep.subr.bf16.mxu0 0
      %1561 = vmatpush1.bf16.msra.mxu0 0
      %1562 = vmatprep.subr.bf16.mxu0 0
      %1563 = vmatpush1.bf16.msra.mxu0 0
      %1564 = vmatprep.subr.bf16.mxu0 0
      %1565 = vmatpush1.bf16.msra.mxu0 0
      %1566 = vmatprep.subr.bf16.mxu0 0
      %1567 = vmatpush1.bf16.msra.mxu0 0
      %1568 = vmatprep.subr.bf16.mxu0 0
      %1569 = vmatpush1.bf16.msra.mxu0 0
      %1570 = vmatprep.subr.bf16.mxu0 0
      %1571 = vmatpush1.bf16.msra.mxu0 0
      %1572 = vmatprep.subr.bf16.mxu0 0
      %1573 = vmatpush1.bf16.msra.mxu0 0
      %1574 = vmatprep.subr.bf16.mxu0 0
      %1575 = vmatpush1.bf16.msra.mxu0 0
      %1576 = vmatprep.subr.bf16.mxu0 0
      %1577 = vmatpush1.bf16.msra.mxu0 0
      %1578 = vmatprep.mubr.bf16.mxu0 0
      %1579 = vmatmul.mubr.bf16.gmra.mrb[0].mxu0 %v1544
      %v1580 = vpop.f32.mrb[0].mxu0
      %v1581 = vadd.f32 %v1529, %v1580
      %v1582 = vpop.f32.mrb[0].mxu0
      %v1583 = vpop.f32.mrb[0].mxu0
      %v1584 = vadd.f32 %v1529, %v1583
      %v1585 = vpop.f32.mrb[0].mxu0
      %1586 = vdwg.mxu0
      %1588 = vrot.lane.b32.xlu0 %v1444, 120
      %v1589 = vpop.permute.xlu0 %1588
      %1591 = vrot.lane.b32.xlu0 %v1444, 112
      %v1592 = vpop.permute.xlu0 %1591
      %1594 = vrot.lane.b32.xlu0 %v1444, 104
      %v1595 = vpop.permute.xlu0 %1594
      %1599 = vrot.lane.b32.xlu0 %v1512, 120
      %v1600 = vpop.permute.xlu0 %1599
      %1601 = vrot.lane.b32.xlu0 %v1515, 120
      %v1602 = vpop.permute.xlu0 %1601
      %1605 = vrot.lane.b32.xlu0 %v1512, 112
      %v1606 = vpop.permute.xlu0 %1605
      %1607 = vrot.lane.b32.xlu0 %v1515, 112
      %v1608 = vpop.permute.xlu0 %1607
      %1611 = vrot.lane.b32.xlu0 %v1512, 104
      %v1612 = vpop.permute.xlu0 %1611
      %1613 = vrot.lane.b32.xlu0 %v1515, 104
      %v1614 = vpop.permute.xlu0 %1613
      %1619 = vrot.lane.b32.xlu0 %v1581, 120
      %v1620 = vpop.permute.xlu0 %1619
      %1621 = vrot.lane.b32.xlu0 %v1584, 120
      %v1622 = vpop.permute.xlu0 %1621
      %1625 = vrot.lane.b32.xlu0 %v1581, 112
      %v1626 = vpop.permute.xlu0 %1625
      %1627 = vrot.lane.b32.xlu0 %v1584, 112
      %v1628 = vpop.permute.xlu0 %1627
      %1631 = vrot.lane.b32.xlu0 %v1581, 104
      %v1632 = vpop.permute.xlu0 %1631
      %1633 = vrot.lane.b32.xlu0 %v1584, 104
      %v1634 = vpop.permute.xlu0 %1633
      %v1637 = vpack.c.bf16 %v1444, %v1444
      %v1638 = vpack.c.bf16 %v1589, %v1589
      %v1639 = vpack.c.bf16 %v1592, %v1592
      %v1640 = vpack.c.bf16 %v1595, %v1595
      %v1641 = vpack.c.bf16 %v1515, %v1512
      %v1642 = vpack.c.bf16 %v1602, %v1600
      %v1643 = vpack.c.bf16 %v1608, %v1606
      %v1644 = vpack.c.bf16 %v1614, %v1612
      %v1646 = vsel %vm844, %v1637, 0
      %v1649 = vsel %vm844, %v1641, 0
      %1651 = vmatprep.subr.bf16.mxu0 0
      %1652 = vmatpush1.bf16.xpose.msra.mxu0 %v1649
      %1653 = vmatprep.subr.bf16.mxu0 0
      %1654 = vmatpush1.bf16.xpose.msra.mxu0 0
      %1655 = vmatprep.subr.bf16.mxu0 0
      %1656 = vmatpush1.bf16.xpose.msra.mxu0 0
      %1657 = vmatprep.subr.bf16.mxu0 0
      %1658 = vmatpush1.bf16.xpose.msra.mxu0 0
      %1659 = vmatprep.subr.bf16.mxu0 0
      %1660 = vmatpush1.bf16.xpose.msra.mxu0 0
      %1661 = vmatprep.subr.bf16.mxu0 0
      %1662 = vmatpush1.bf16.xpose.msra.mxu0 0
      %1663 = vmatprep.subr.bf16.mxu0 0
      %1664 = vmatpush1.bf16.xpose.msra.mxu0 0
      %1665 = vmatprep.subr.bf16.mxu0 0
      %1666 = vmatpush1.bf16.xpose.msra.mxu0 0
      %1667 = vmatprep.subr.bf16.mxu0 0
      %1668 = vmatpush1.bf16.xpose.msra.mxu0 0
      %1669 = vmatprep.subr.bf16.mxu0 0
      %1670 = vmatpush1.bf16.xpose.msra.mxu0 0
      %1671 = vmatprep.subr.bf16.mxu0 0
      %1672 = vmatpush1.bf16.xpose.msra.mxu0 0
      %1673 = vmatprep.subr.bf16.mxu0 0
      %1674 = vmatpush1.bf16.xpose.msra.mxu0 0
      %1675 = vmatprep.subr.bf16.mxu0 0
      %1676 = vmatpush1.bf16.xpose.msra.mxu0 0
      %1677 = vmatprep.subr.bf16.mxu0 0
      %1678 = vmatpush1.bf16.xpose.msra.mxu0 0
      %1679 = vmatprep.subr.bf16.mxu0 0
      %1680 = vmatpush1.bf16.xpose.msra.mxu0 0
      %1681 = vmatprep.subr.bf16.mxu0 0
      %1682 = vmatpush1.bf16.xpose.msra.mxu0 0
      %1683 = vmatprep.mubr.bf16.mxu0 0
      %1684 = vmatmul.mubr.bf16.gmra.mrb[0].mxu0 %v1646
      %v1685 = vpop.f32.mrb[0].mxu0
      %v1686 = vadd.f32 0.0, %v1685
      %v1687 = vpop.f32.mrb[0].mxu0
      %v1688 = vpop.f32.mrb[0].mxu0
      %v1689 = vpop.f32.mrb[0].mxu0
      %1690 = vdwg.mxu0
      %v1692 = vsel %vm844, %v1638, 0
      %v1695 = vsel %vm844, %v1642, 0
      %1697 = vmatprep.subr.bf16.mxu0 0
      %1698 = vmatpush1.bf16.xpose.msra.mxu0 %v1695
      %1699 = vmatprep.subr.bf16.mxu0 0
      %1700 = vmatpush1.bf16.xpose.msra.mxu0 0
      %1701 = vmatprep.subr.bf16.mxu0 0
      %1702 = vmatpush1.bf16.xpose.msra.mxu0 0
      %1703 = vmatprep.subr.bf16.mxu0 0
      %1704 = vmatpush1.bf16.xpose.msra.mxu0 0
      %1705 = vmatprep.subr.bf16.mxu0 0
      %1706 = vmatpush1.bf16.xpose.msra.mxu0 0
      %1707 = vmatprep.subr.bf16.mxu0 0
      %1708 = vmatpush1.bf16.xpose.msra.mxu0 0
      %1709 = vmatprep.subr.bf16.mxu0 0
      %1710 = vmatpush1.bf16.xpose.msra.mxu0 0
      %1711 = vmatprep.subr.bf16.mxu0 0
      %1712 = vmatpush1.bf16.xpose.msra.mxu0 0
      %1713 = vmatprep.subr.bf16.mxu0 0
      %1714 = vmatpush1.bf16.xpose.msra.mxu0 0
      %1715 = vmatprep.subr.bf16.mxu0 0
      %1716 = vmatpush1.bf16.xpose.msra.mxu0 0
      %1717 = vmatprep.subr.bf16.mxu0 0
      %1718 = vmatpush1.bf16.xpose.msra.mxu0 0
      %1719 = vmatprep.subr.bf16.mxu0 0
      %1720 = vmatpush1.bf16.xpose.msra.mxu0 0
      %1721 = vmatprep.subr.bf16.mxu0 0
      %1722 = vmatpush1.bf16.xpose.msra.mxu0 0
      %1723 = vmatprep.subr.bf16.mxu0 0
      %1724 = vmatpush1.bf16.xpose.msra.mxu0 0
      %1725 = vmatprep.subr.bf16.mxu0 0
      %1726 = vmatpush1.bf16.xpose.msra.mxu0 0
      %1727 = vmatprep.subr.bf16.mxu0 0
      %1728 = vmatpush1.bf16.xpose.msra.mxu0 0
      %1729 = vmatprep.mubr.bf16.mxu0 0
      %1730 = vmatmul.mubr.bf16.gmra.mrb[0].mxu0 %v1692
      %v1731 = vpop.f32.mrb[0].mxu0
      %v1732 = vadd.f32 0.0, %v1731
      %v1733 = vpop.f32.mrb[0].mxu0
      %v1734 = vpop.f32.mrb[0].mxu0
      %v1735 = vpop.f32.mrb[0].mxu0
      %1736 = vdwg.mxu0
      %v1738 = vsel %vm844, %v1639, 0
      %v1741 = vsel %vm844, %v1643, 0
      %1743 = vmatprep.subr.bf16.mxu0 0
      %1744 = vmatpush1.bf16.xpose.msra.mxu0 %v1741
      %1745 = vmatprep.subr.bf16.mxu0 0
      %1746 = vmatpush1.bf16.xpose.msra.mxu0 0
      %1747 = vmatprep.subr.bf16.mxu0 0
      %1748 = vmatpush1.bf16.xpose.msra.mxu0 0
      %1749 = vmatprep.subr.bf16.mxu0 0
      %1750 = vmatpush1.bf16.xpose.msra.mxu0 0
      %1751 = vmatprep.subr.bf16.mxu0 0
      %1752 = vmatpush1.bf16.xpose.msra.mxu0 0
      %1753 = vmatprep.subr.bf16.mxu0 0
      %1754 = vmatpush1.bf16.xpose.msra.mxu0 0
      %1755 = vmatprep.subr.bf16.mxu0 0
      %1756 = vmatpush1.bf16.xpose.msra.mxu0 0
      %1757 = vmatprep.subr.bf16.mxu0 0
      %1758 = vmatpush1.bf16.xpose.msra.mxu0 0
      %1759 = vmatprep.subr.bf16.mxu0 0
      %1760 = vmatpush1.bf16.xpose.msra.mxu0 0
      %1761 = vmatprep.subr.bf16.mxu0 0
      %1762 = vmatpush1.bf16.xpose.msra.mxu0 0
      %1763 = vmatprep.subr.bf16.mxu0 0
      %1764 = vmatpush1.bf16.xpose.msra.mxu0 0
      %1765 = vmatprep.subr.bf16.mxu0 0
      %1766 = vmatpush1.bf16.xpose.msra.mxu0 0
      %1767 = vmatprep.subr.bf16.mxu0 0
      %1768 = vmatpush1.bf16.xpose.msra.mxu0 0
      %1769 = vmatprep.subr.bf16.mxu0 0
      %1770 = vmatpush1.bf16.xpose.msra.mxu0 0
      %1771 = vmatprep.subr.bf16.mxu0 0
      %1772 = vmatpush1.bf16.xpose.msra.mxu0 0
      %1773 = vmatprep.subr.bf16.mxu0 0
      %1774 = vmatpush1.bf16.xpose.msra.mxu0 0
      %1775 = vmatprep.mubr.bf16.mxu0 0
      %1776 = vmatmul.mubr.bf16.gmra.mrb[0].mxu0 %v1738
      %v1777 = vpop.f32.mrb[0].mxu0
      %v1778 = vadd.f32 0.0, %v1777
      %v1779 = vpop.f32.mrb[0].mxu0
      %v1780 = vpop.f32.mrb[0].mxu0
      %v1781 = vpop.f32.mrb[0].mxu0
      %1782 = vdwg.mxu0
      %v1784 = vsel %vm844, %v1640, 0
      %v1787 = vsel %vm844, %v1644, 0
      %1789 = vmatprep.subr.bf16.mxu0 0
      %1790 = vmatpush1.bf16.xpose.msra.mxu0 %v1787
      %1791 = vmatprep.subr.bf16.mxu0 0
      %1792 = vmatpush1.bf16.xpose.msra.mxu0 0
      %1793 = vmatprep.subr.bf16.mxu0 0
      %1794 = vmatpush1.bf16.xpose.msra.mxu0 0
      %1795 = vmatprep.subr.bf16.mxu0 0
      %1796 = vmatpush1.bf16.xpose.msra.mxu0 0
      %1797 = vmatprep.subr.bf16.mxu0 0
      %1798 = vmatpush1.bf16.xpose.msra.mxu0 0
      %1799 = vmatprep.subr.bf16.mxu0 0
      %1800 = vmatpush1.bf16.xpose.msra.mxu0 0
      %1801 = vmatprep.subr.bf16.mxu0 0
      %1802 = vmatpush1.bf16.xpose.msra.mxu0 0
      %1803 = vmatprep.subr.bf16.mxu0 0
      %1804 = vmatpush1.bf16.xpose.msra.mxu0 0
      %1805 = vmatprep.subr.bf16.mxu0 0
      %1806 = vmatpush1.bf16.xpose.msra.mxu0 0
      %1807 = vmatprep.subr.bf16.mxu0 0
      %1808 = vmatpush1.bf16.xpose.msra.mxu0 0
      %1809 = vmatprep.subr.bf16.mxu0 0
      %1810 = vmatpush1.bf16.xpose.msra.mxu0 0
      %1811 = vmatprep.subr.bf16.mxu0 0
      %1812 = vmatpush1.bf16.xpose.msra.mxu0 0
      %1813 = vmatprep.subr.bf16.mxu0 0
      %1814 = vmatpush1.bf16.xpose.msra.mxu0 0
      %1815 = vmatprep.subr.bf16.mxu0 0
      %1816 = vmatpush1.bf16.xpose.msra.mxu0 0
      %1817 = vmatprep.subr.bf16.mxu0 0
      %1818 = vmatpush1.bf16.xpose.msra.mxu0 0
      %1819 = vmatprep.subr.bf16.mxu0 0
      %1820 = vmatpush1.bf16.xpose.msra.mxu0 0
      %1821 = vmatprep.mubr.bf16.mxu0 0
      %1822 = vmatmul.mubr.bf16.gmra.mrb[0].mxu0 %v1784
      %v1823 = vpop.f32.mrb[0].mxu0
      %v1824 = vadd.f32 0.0, %v1823
      %v1825 = vpop.f32.mrb[0].mxu0
      %v1826 = vpop.f32.mrb[0].mxu0
      %v1827 = vpop.f32.mrb[0].mxu0
      %1828 = vdwg.mxu0
      %v1829 = vsel %vm1279, %v1686, -inf
      %1830 = vmax.xlane.f32.xlu0 %v1829
      %v1831 = vpop.xlane.xlu0 %1830
      %v1832 = vsel %vm1279, %v1732, -inf
      %1833 = vmax.xlane.f32.xlu0 %v1832
      %v1834 = vpop.xlane.xlu0 %1833
      %v1835 = vsel %vm1279, %v1778, -inf
      %1836 = vmax.xlane.f32.xlu0 %v1835
      %v1837 = vpop.xlane.xlu0 %1836
      %v1838 = vsel %vm1279, %v1824, -inf
      %1839 = vmax.xlane.f32.xlu0 %v1838
      %v1840 = vpop.xlane.xlu0 %1839
      %v1841 = vsub.f32 %v1686, %v1831
      %v1842 = vsub.f32 %v1732, %v1834
      %v1843 = vsub.f32 %v1778, %v1837
      %v1844 = vsub.f32 %v1824, %v1840
      %v1845 = vmul.f32 %v1841, 1.442695
      %v1846 = vpow.pop %v1845
      %v1847 = vmul.f32 %v1842, 1.442695
      %v1848 = vpow.pop %v1847
      %v1849 = vmul.f32 %v1843, 1.442695
      %v1850 = vpow.pop %v1849
      %v1851 = vmul.f32 %v1844, 1.442695
      %v1852 = vpow.pop %v1851
      %v1853 = vsel %vm1279, %v1846, 0.0
      %1854 = vadd.xlane.f32.xlu0 %v1853
      %v1855 = vpop.xlane.xlu0 %1854
      %v1856 = vsel %vm1279, %v1848, 0.0
      %1857 = vadd.xlane.f32.xlu0 %v1856
      %v1858 = vpop.xlane.xlu0 %1857
      %v1859 = vsel %vm1279, %v1850, 0.0
      %1860 = vadd.xlane.f32.xlu0 %v1859
      %v1861 = vpop.xlane.xlu0 %1860
      %v1862 = vsel %vm1279, %v1852, 0.0
      %1863 = vadd.xlane.f32.xlu0 %v1862
      %v1864 = vpop.xlane.xlu0 %1863
      %v1865 = vrcp.pop %v1855
      %v1866 = vrcp.pop %v1858
      %v1867 = vrcp.pop %v1861
      %v1868 = vrcp.pop %v1864
      %v1869 = vmul.f32 %v1846, %v1865
      %v1870 = vmul.f32 %v1848, %v1866
      %v1871 = vmul.f32 %v1850, %v1867
      %v1872 = vmul.f32 %v1852, %v1868
      %v1873 = vpack.c.bf16 %v1869, %v1869
      %v1874 = vpack.c.bf16 %v1870, %v1870
      %v1875 = vpack.c.bf16 %v1871, %v1871
      %v1876 = vpack.c.bf16 %v1872, %v1872
      %v1877 = vpack.c.bf16 %v1584, %v1581
      %v1878 = vpack.c.bf16 %v1622, %v1620
      %v1879 = vpack.c.bf16 %v1628, %v1626
      %v1880 = vpack.c.bf16 %v1634, %v1632
      %v1882 = vsel %vm1279, %v1873, 0
      %1884 = vmatprep.subr.bf16.mxu0 0
      %1885 = vmatpush1.bf16.msra.mxu0 %v1877
      %1886 = vmatprep.subr.bf16.mxu0 0
      %1887 = vmatpush1.bf16.msra.mxu0 0
      %1888 = vmatprep.subr.bf16.mxu0 0
      %1889 = vmatpush1.bf16.msra.mxu0 0
      %1890 = vmatprep.subr.bf16.mxu0 0
      %1891 = vmatpush1.bf16.msra.mxu0 0
      %1892 = vmatprep.subr.bf16.mxu0 0
      %1893 = vmatpush1.bf16.msra.mxu0 0
      %1894 = vmatprep.subr.bf16.mxu0 0
      %1895 = vmatpush1.bf16.msra.mxu0 0
      %1896 = vmatprep.subr.bf16.mxu0 0
      %1897 = vmatpush1.bf16.msra.mxu0 0
      %1898 = vmatprep.subr.bf16.mxu0 0
      %1899 = vmatpush1.bf16.msra.mxu0 0
      %1900 = vmatprep.subr.bf16.mxu0 0
      %1901 = vmatpush1.bf16.msra.mxu0 0
      %1902 = vmatprep.subr.bf16.mxu0 0
      %1903 = vmatpush1.bf16.msra.mxu0 0
      %1904 = vmatprep.subr.bf16.mxu0 0
      %1905 = vmatpush1.bf16.msra.mxu0 0
      %1906 = vmatprep.subr.bf16.mxu0 0
      %1907 = vmatpush1.bf16.msra.mxu0 0
      %1908 = vmatprep.subr.bf16.mxu0 0
      %1909 = vmatpush1.bf16.msra.mxu0 0
      %1910 = vmatprep.subr.bf16.mxu0 0
      %1911 = vmatpush1.bf16.msra.mxu0 0
      %1912 = vmatprep.subr.bf16.mxu0 0
      %1913 = vmatpush1.bf16.msra.mxu0 0
      %1914 = vmatprep.subr.bf16.mxu0 0
      %1915 = vmatpush1.bf16.msra.mxu0 0
      %1916 = vmatprep.mubr.bf16.mxu0 0
      %1917 = vmatmul.mubr.bf16.gmra.mrb[0].mxu0 %v1882
      %v1918 = vpop.f32.mrb[0].mxu0
      %v1919 = vadd.f32 0.0, %v1918
      %v1920 = vpop.f32.mrb[0].mxu0
      %v1921 = vpop.f32.mrb[0].mxu0
      %v1922 = vpop.f32.mrb[0].mxu0
      %1923 = vdwg.mxu0
      %v1925 = vsel %vm1279, %v1874, 0
      %1927 = vmatprep.subr.bf16.mxu0 0
      %1928 = vmatpush1.bf16.msra.mxu0 %v1878
      %1929 = vmatprep.subr.bf16.mxu0 0
      %1930 = vmatpush1.bf16.msra.mxu0 0
      %1931 = vmatprep.subr.bf16.mxu0 0
      %1932 = vmatpush1.bf16.msra.mxu0 0
      %1933 = vmatprep.subr.bf16.mxu0 0
      %1934 = vmatpush1.bf16.msra.mxu0 0
      %1935 = vmatprep.subr.bf16.mxu0 0
      %1936 = vmatpush1.bf16.msra.mxu0 0
      %1937 = vmatprep.subr.bf16.mxu0 0
      %1938 = vmatpush1.bf16.msra.mxu0 0
      %1939 = vmatprep.subr.bf16.mxu0 0
      %1940 = vmatpush1.bf16.msra.mxu0 0
      %1941 = vmatprep.subr.bf16.mxu0 0
      %1942 = vmatpush1.bf16.msra.mxu0 0
      %1943 = vmatprep.subr.bf16.mxu0 0
      %1944 = vmatpush1.bf16.msra.mxu0 0
      %1945 = vmatprep.subr.bf16.mxu0 0
      %1946 = vmatpush1.bf16.msra.mxu0 0
      %1947 = vmatprep.subr.bf16.mxu0 0
      %1948 = vmatpush1.bf16.msra.mxu0 0
      %1949 = vmatprep.subr.bf16.mxu0 0
      %1950 = vmatpush1.bf16.msra.mxu0 0
      %1951 = vmatprep.subr.bf16.mxu0 0
      %1952 = vmatpush1.bf16.msra.mxu0 0
      %1953 = vmatprep.subr.bf16.mxu0 0
      %1954 = vmatpush1.bf16.msra.mxu0 0
      %1955 = vmatprep.subr.bf16.mxu0 0
      %1956 = vmatpush1.bf16.msra.mxu0 0
      %1957 = vmatprep.subr.bf16.mxu0 0
      %1958 = vmatpush1.bf16.msra.mxu0 0
      %1959 = vmatprep.mubr.bf16.mxu0 0
      %1960 = vmatmul.mubr.bf16.gmra.mrb[0].mxu0 %v1925
      %v1961 = vpop.f32.mrb[0].mxu0
      %v1962 = vadd.f32 0.0, %v1961
      %v1963 = vpop.f32.mrb[0].mxu0
      %v1964 = vpop.f32.mrb[0].mxu0
      %v1965 = vpop.f32.mrb[0].mxu0
      %1966 = vdwg.mxu0
      %v1968 = vsel %vm1279, %v1875, 0
      %1970 = vmatprep.subr.bf16.mxu0 0
      %1971 = vmatpush1.bf16.msra.mxu0 %v1879
      %1972 = vmatprep.subr.bf16.mxu0 0
      %1973 = vmatpush1.bf16.msra.mxu0 0
      %1974 = vmatprep.subr.bf16.mxu0 0
      %1975 = vmatpush1.bf16.msra.mxu0 0
      %1976 = vmatprep.subr.bf16.mxu0 0
      %1977 = vmatpush1.bf16.msra.mxu0 0
      %1978 = vmatprep.subr.bf16.mxu0 0
      %1979 = vmatpush1.bf16.msra.mxu0 0
      %1980 = vmatprep.subr.bf16.mxu0 0
      %1981 = vmatpush1.bf16.msra.mxu0 0
      %1982 = vmatprep.subr.bf16.mxu0 0
      %1983 = vmatpush1.bf16.msra.mxu0 0
      %1984 = vmatprep.subr.bf16.mxu0 0
      %1985 = vmatpush1.bf16.msra.mxu0 0
      %1986 = vmatprep.subr.bf16.mxu0 0
      %1987 = vmatpush1.bf16.msra.mxu0 0
      %1988 = vmatprep.subr.bf16.mxu0 0
      %1989 = vmatpush1.bf16.msra.mxu0 0
      %1990 = vmatprep.subr.bf16.mxu0 0
      %1991 = vmatpush1.bf16.msra.mxu0 0
      %1992 = vmatprep.subr.bf16.mxu0 0
      %1993 = vmatpush1.bf16.msra.mxu0 0
      %1994 = vmatprep.subr.bf16.mxu0 0
      %1995 = vmatpush1.bf16.msra.mxu0 0
      %1996 = vmatprep.subr.bf16.mxu0 0
      %1997 = vmatpush1.bf16.msra.mxu0 0
      %1998 = vmatprep.subr.bf16.mxu0 0
      %1999 = vmatpush1.bf16.msra.mxu0 0
      %2000 = vmatprep.subr.bf16.mxu0 0
      %2001 = vmatpush1.bf16.msra.mxu0 0
      %2002 = vmatprep.mubr.bf16.mxu0 0
      %2003 = vmatmul.mubr.bf16.gmra.mrb[0].mxu0 %v1968
      %v2004 = vpop.f32.mrb[0].mxu0
      %v2005 = vadd.f32 0.0, %v2004
      %v2006 = vpop.f32.mrb[0].mxu0
      %v2007 = vpop.f32.mrb[0].mxu0
      %v2008 = vpop.f32.mrb[0].mxu0
      %2009 = vdwg.mxu0
      %v2011 = vsel %vm1279, %v1876, 0
      %2013 = vmatprep.subr.bf16.mxu0 0
      %2014 = vmatpush1.bf16.msra.mxu0 %v1880
      %2015 = vmatprep.subr.bf16.mxu0 0
      %2016 = vmatpush1.bf16.msra.mxu0 0
      %2017 = vmatprep.subr.bf16.mxu0 0
      %2018 = vmatpush1.bf16.msra.mxu0 0
      %2019 = vmatprep.subr.bf16.mxu0 0
      %2020 = vmatpush1.bf16.msra.mxu0 0
      %2021 = vmatprep.subr.bf16.mxu0 0
      %2022 = vmatpush1.bf16.msra.mxu0 0
      %2023 = vmatprep.subr.bf16.mxu0 0
      %2024 = vmatpush1.bf16.msra.mxu0 0
      %2025 = vmatprep.subr.bf16.mxu0 0
      %2026 = vmatpush1.bf16.msra.mxu0 0
      %2027 = vmatprep.subr.bf16.mxu0 0
      %2028 = vmatpush1.bf16.msra.mxu0 0
      %2029 = vmatprep.subr.bf16.mxu0 0
      %2030 = vmatpush1.bf16.msra.mxu0 0
      %2031 = vmatprep.subr.bf16.mxu0 0
      %2032 = vmatpush1.bf16.msra.mxu0 0
      %2033 = vmatprep.subr.bf16.mxu0 0
      %2034 = vmatpush1.bf16.msra.mxu0 0
      %2035 = vmatprep.subr.bf16.mxu0 0
      %2036 = vmatpush1.bf16.msra.mxu0 0
      %2037 = vmatprep.subr.bf16.mxu0 0
      %2038 = vmatpush1.bf16.msra.mxu0 0
      %2039 = vmatprep.subr.bf16.mxu0 0
      %2040 = vmatpush1.bf16.msra.mxu0 0
      %2041 = vmatprep.subr.bf16.mxu0 0
      %2042 = vmatpush1.bf16.msra.mxu0 0
      %2043 = vmatprep.subr.bf16.mxu0 0
      %2044 = vmatpush1.bf16.msra.mxu0 0
      %2045 = vmatprep.mubr.bf16.mxu0 0
      %2046 = vmatmul.mubr.bf16.gmra.mrb[0].mxu0 %v2011
      %v2047 = vpop.f32.mrb[0].mxu0
      %v2048 = vadd.f32 0.0, %v2047
      %v2049 = vpop.f32.mrb[0].mxu0
      %v2050 = vpop.f32.mrb[0].mxu0
      %v2051 = vpop.f32.mrb[0].mxu0
      %2052 = vdwg.mxu0
      %2054 = vrot.lane.b32.xlu0 %v1962, 8
      %v2055 = vpop.permute.xlu0 %2054
      %2058 = vrot.lane.b32.xlu0 %v2005, 16
      %v2059 = vpop.permute.xlu0 %2058
      %2062 = vrot.lane.b32.xlu0 %v2048, 24
      %v2063 = vpop.permute.xlu0 %2062
      %v2065 = vsel %vm844, %v1919, %v2055
      %v2066 = vsel %vm1279, %v2065, %v2059
      %v2067 = vsel %vm1281, %v2066, %v2063
      %v2068 = vpack.c.bf16 %v2067, %v2067
      %v2069 = vld [vmem:[%s10] sm:$0xf]
      %v2070 = vld [vmem:[%s10 + $0x4] sm:$0xf]
      %v2071 = vld [vmem:[%s10 + $0x8] sm:$0xf]
      %v2072 = vld [vmem:[%s10 + $0xc] sm:$0xf]
      %s2073 = scalar_lea.vmem %s9, 3
      %v2074 = vld [vmem:[%s2073] sm:$0x1]
      %v2076 = vlaneseq
      %v2077 = vshrl.u32 %v2076, 7
      %v2078 = vsub.s32 0, %v2077
      %v2079 = vrot.slane %v2074, %v2078
      %v2085 = vunpack.c.l.b16 %v2069
      %v2086 = vunpack.c.l.b16 %v2070
      %v2087 = vunpack.c.l.b16 %v2071
      %v2088 = vunpack.c.l.b16 %v2072
      %v2089 = vpack.c.b16 %v2086, %v2085
      %v2090 = vpack.c.b16 %v2088, %v2087
      %v2094 = vsel %vm579, %v2068, 0
      %2096 = vmatprep.subr.bf16.mxu0 0
      %2097 = vmatpush1.bf16.msra.mxu0 %v2089
      %2098 = vmatprep.subr.bf16.mxu0 0
      %2099 = vmatpush1.bf16.msra.mxu0 %v2090
      %2100 = vmatprep.subr.bf16.mxu0 0
      %2101 = vmatpush1.bf16.msra.mxu0 0
      %2102 = vmatprep.subr.bf16.mxu0 0
      %2103 = vmatpush1.bf16.msra.mxu0 0
      %2104 = vmatprep.subr.bf16.mxu0 0
      %2105 = vmatpush1.bf16.msra.mxu0 0
      %2106 = vmatprep.subr.bf16.mxu0 0
      %2107 = vmatpush1.bf16.msra.mxu0 0
      %2108 = vmatprep.subr.bf16.mxu0 0
      %2109 = vmatpush1.bf16.msra.mxu0 0
      %2110 = vmatprep.subr.bf16.mxu0 0
      %2111 = vmatpush1.bf16.msra.mxu0 0
      %2112 = vmatprep.subr.bf16.mxu0 0
      %2113 = vmatpush1.bf16.msra.mxu0 0
      %2114 = vmatprep.subr.bf16.mxu0 0
      %2115 = vmatpush1.bf16.msra.mxu0 0
      %2116 = vmatprep.subr.bf16.mxu0 0
      %2117 = vmatpush1.bf16.msra.mxu0 0
      %2118 = vmatprep.subr.bf16.mxu0 0
      %2119 = vmatpush1.bf16.msra.mxu0 0
      %2120 = vmatprep.subr.bf16.mxu0 0
      %2121 = vmatpush1.bf16.msra.mxu0 0
      %2122 = vmatprep.subr.bf16.mxu0 0
      %2123 = vmatpush1.bf16.msra.mxu0 0
      %2124 = vmatprep.subr.bf16.mxu0 0
      %2125 = vmatpush1.bf16.msra.mxu0 0
      %2126 = vmatprep.subr.bf16.mxu0 0
      %2127 = vmatpush1.bf16.msra.mxu0 0
      %2128 = vmatprep.mubr.bf16.mxu0 0
      %2129 = vmatmul.mubr.bf16.gmra.mrb[0].mxu0 %v2094
      %v2130 = vpop.f32.mrb[0].mxu0
      %v2131 = vadd.f32 %v2079, %v2130
      %v2132 = vpop.f32.mrb[0].mxu0
      %v2133 = vpop.f32.mrb[0].mxu0
      %v2134 = vpop.f32.mrb[0].mxu0
      %2135 = vdwg.mxu0
      %v2136 = vadd.f32 %v1351, %v2131
      %v2137 = vld [vmem:[%s4 + $0x4] sm:$0x1]
      %v2138 = vld [vmem:[%s4 + $0x5] sm:$0x1]
      %v2139 = vsel %vm579, %v2136, 0.0
      %2140 = vadd.xlane.f32.xlu0 %v2139
      %v2141 = vpop.xlane.xlu0 %2140
      %v2142 = vmul.f32 %v2141, %v583
      %v2143 = vsub.f32 %v2136, %v2142
      %v2144 = vmul.f32 %v2143, %v2143
      %v2145 = vsel %vm579, %v2144, 0.0
      %2146 = vadd.xlane.f32.xlu0 %v2145
      %v2147 = vpop.xlane.xlu0 %2146
      %v2148 = vmul.f32 %v2147, %v583
      %v2149 = vadd.f32 %v2148, 1e-05
      %v2150 = vrsqrt.pop %v2149
      %v2151 = vmul.f32 %v2143, %v2150
      %v2152 = vlaneseq
      %v2153 = vshrl.u32 %v2152, 7
      %v2154 = vsub.s32 0, %v2153
      %v2155 = vrot.slane %v2137, %v2154
      %v2156 = vmul.f32 %v2151, %v2155
      %v2157 = vlaneseq
      %v2158 = vshrl.u32 %v2157, 7
      %v2159 = vsub.s32 0, %v2158
      %v2160 = vrot.slane %v2138, %v2159
      %v2161 = vadd.f32 %v2156, %v2160
      %v2162 = vpack.c.bf16 %v2161, %v2161
      %v2163 = vld [vmem:[%s11] sm:$0xf]
      %v2164 = vld [vmem:[%s11 + $0x4] sm:$0xf]
      %v2165 = vld [vmem:[%s11 + $0x8] sm:$0xf]
      %v2166 = vld [vmem:[%s11 + $0xc] sm:$0xf]
      %v2167 = vld [vmem:[%s12] sm:$0x1]
      %v2169 = vlaneseq
      %v2170 = vshrl.u32 %v2169, 7
      %v2171 = vsub.s32 0, %v2170
      %v2172 = vrot.slane %v2167, %v2171
      %v2178 = vunpack.c.l.b16 %v2163
      %v2179 = vunpack.c.l.b16 %v2164
      %v2180 = vunpack.c.l.b16 %v2165
      %v2181 = vunpack.c.l.b16 %v2166
      %v2182 = vpack.c.b16 %v2179, %v2178
      %v2183 = vpack.c.b16 %v2181, %v2180
      %v2187 = vsel %vm579, %v2162, 0
      %2189 = vmatprep.subr.bf16.mxu0 0
      %2190 = vmatpush1.bf16.msra.mxu0 %v2182
      %2191 = vmatprep.subr.bf16.mxu0 0
      %2192 = vmatpush1.bf16.msra.mxu0 %v2183
      %2193 = vmatprep.subr.bf16.mxu0 0
      %2194 = vmatpush1.bf16.msra.mxu0 0
      %2195 = vmatprep.subr.bf16.mxu0 0
      %2196 = vmatpush1.bf16.msra.mxu0 0
      %2197 = vmatprep.subr.bf16.mxu0 0
      %2198 = vmatpush1.bf16.msra.mxu0 0
      %2199 = vmatprep.subr.bf16.mxu0 0
      %2200 = vmatpush1.bf16.msra.mxu0 0
      %2201 = vmatprep.subr.bf16.mxu0 0
      %2202 = vmatpush1.bf16.msra.mxu0 0
      %2203 = vmatprep.subr.bf16.mxu0 0
      %2204 = vmatpush1.bf16.msra.mxu0 0
      %2205 = vmatprep.subr.bf16.mxu0 0
      %2206 = vmatpush1.bf16.msra.mxu0 0
      %2207 = vmatprep.subr.bf16.mxu0 0
      %2208 = vmatpush1.bf16.msra.mxu0 0
      %2209 = vmatprep.subr.bf16.mxu0 0
      %2210 = vmatpush1.bf16.msra.mxu0 0
      %2211 = vmatprep.subr.bf16.mxu0 0
      %2212 = vmatpush1.bf16.msra.mxu0 0
      %2213 = vmatprep.subr.bf16.mxu0 0
      %2214 = vmatpush1.bf16.msra.mxu0 0
      %2215 = vmatprep.subr.bf16.mxu0 0
      %2216 = vmatpush1.bf16.msra.mxu0 0
      %2217 = vmatprep.subr.bf16.mxu0 0
      %2218 = vmatpush1.bf16.msra.mxu0 0
      %2219 = vmatprep.subr.bf16.mxu0 0
      %2220 = vmatpush1.bf16.msra.mxu0 0
      %2221 = vmatprep.mubr.bf16.mxu0 0
      %2222 = vmatmul.mubr.bf16.gmra.mrb[0].mxu0 %v2187
      %v2223 = vpop.f32.mrb[0].mxu0
      %v2224 = vadd.f32 %v2172, %v2223
      %v2225 = vpop.f32.mrb[0].mxu0
      %v2226 = vpop.f32.mrb[0].mxu0
      %v2227 = vpop.f32.mrb[0].mxu0
      %2228 = vdwg.mxu0
      %v2229 = vmax.f32 %v2224, 0.0
      %v2230 = vpack.c.bf16 %v2229, %v2229
      %v2231 = vld [vmem:[%s13] sm:$0xf]
      %v2232 = vld [vmem:[%s13 + $0x4] sm:$0xf]
      %v2233 = vld [vmem:[%s13 + $0x8] sm:$0xf]
      %v2234 = vld [vmem:[%s13 + $0xc] sm:$0xf]
      %v2235 = vld [vmem:[%s13 + $0x10] sm:$0xf]
      %v2236 = vld [vmem:[%s13 + $0x14] sm:$0xf]
      %v2237 = vld [vmem:[%s13 + $0x18] sm:$0xf]
      %v2238 = vld [vmem:[%s13 + $0x1c] sm:$0xf]
      %v2239 = vld [vmem:[%s14] sm:$0x1]
      %v2241 = vlaneseq
      %v2242 = vshrl.u32 %v2241, 7
      %v2243 = vsub.s32 0, %v2242
      %v2244 = vrot.slane %v2239, %v2243
      %v2254 = vunpack.c.l.b16 %v2231
      %v2255 = vunpack.c.l.b16 %v2232
      %v2256 = vunpack.c.l.b16 %v2233
      %v2257 = vunpack.c.l.b16 %v2234
      %v2258 = vunpack.c.l.b16 %v2235
      %v2259 = vunpack.c.l.b16 %v2236
      %v2260 = vunpack.c.l.b16 %v2237
      %v2261 = vunpack.c.l.b16 %v2238
      %v2262 = vpack.c.b16 %v2255, %v2254
      %v2263 = vpack.c.b16 %v2257, %v2256
      %v2264 = vpack.c.b16 %v2259, %v2258
      %v2265 = vpack.c.b16 %v2261, %v2260
      %vm2270 = vcmask 523264
      %v2272 = vsel %vm2270, %v2230, 0
      %2274 = vmatprep.subr.bf16.mxu0 0
      %2275 = vmatpush1.bf16.msra.mxu0 %v2262
      %2276 = vmatprep.subr.bf16.mxu0 0
      %2277 = vmatpush1.bf16.msra.mxu0 %v2263
      %2278 = vmatprep.subr.bf16.mxu0 0
      %2279 = vmatpush1.bf16.msra.mxu0 %v2264
      %2280 = vmatprep.subr.bf16.mxu0 0
      %2281 = vmatpush1.bf16.msra.mxu0 %v2265
      %2282 = vmatprep.subr.bf16.mxu0 0
      %2283 = vmatpush1.bf16.msra.mxu0 0
      %2284 = vmatprep.subr.bf16.mxu0 0
      %2285 = vmatpush1.bf16.msra.mxu0 0
      %2286 = vmatprep.subr.bf16.mxu0 0
      %2287 = vmatpush1.bf16.msra.mxu0 0
      %2288 = vmatprep.subr.bf16.mxu0 0
      %2289 = vmatpush1.bf16.msra.mxu0 0
      %2290 = vmatprep.subr.bf16.mxu0 0
      %2291 = vmatpush1.bf16.msra.mxu0 0
      %2292 = vmatprep.subr.bf16.mxu0 0
      %2293 = vmatpush1.bf16.msra.mxu0 0
      %2294 = vmatprep.subr.bf16.mxu0 0
      %2295 = vmatpush1.bf16.msra.mxu0 0
      %2296 = vmatprep.subr.bf16.mxu0 0
      %2297 = vmatpush1.bf16.msra.mxu0 0
      %2298 = vmatprep.subr.bf16.mxu0 0
      %2299 = vmatpush1.bf16.msra.mxu0 0
      %2300 = vmatprep.subr.bf16.mxu0 0
      %2301 = vmatpush1.bf16.msra.mxu0 0
      %2302 = vmatprep.subr.bf16.mxu0 0
      %2303 = vmatpush1.bf16.msra.mxu0 0
      %2304 = vmatprep.subr.bf16.mxu0 0
      %2305 = vmatpush1.bf16.msra.mxu0 0
      %2306 = vmatprep.mubr.bf16.mxu0 0
      %2307 = vmatmul.mubr.bf16.gmra.mrb[0].mxu0 %v2272
      %v2308 = vpop.f32.mrb[0].mxu0
      %v2309 = vadd.f32 %v2244, %v2308
      %v2310 = vpop.f32.mrb[0].mxu0
      %v2311 = vpop.f32.mrb[0].mxu0
      %v2312 = vpop.f32.mrb[0].mxu0
      %2313 = vdwg.mxu0
      %v2314 = vadd.f32 %v2309, %v2136
      %2315 = vst.msk [vmem:[%s568] sm:$0xff] %vm579, %v2314
      %s2316 = scalar_lea.vmem %s542, 8
      %v2317 = vld [vmem:[%s2316] sm:$0xff]
      %s2318 = scalar_lea.vmem %s549, 16
      %v2319 = vld [vmem:[%s2318] sm:$0xff]
      %v2320 = vld [vmem:[%s2318 + $0x8] sm:$0xff]
      %s2321 = scalar_lea.vmem %s555, 8
      %v2322 = vld [vmem:[%s2321] sm:$0xff]
      %s2323 = scalar_lea.vmem %s562, 16
      %v2324 = vld [vmem:[%s2323] sm:$0xff]
      %v2325 = vld [vmem:[%s2323 + $0x8] sm:$0xff]
      %v2326 = vld [vmem:[%s4] sm:$0x1]
      %v2327 = vld [vmem:[%s4 + $0x1] sm:$0x1]
      %v2328 = vsel %vm579, %v2317, 0.0
      %2329 = vadd.xlane.f32.xlu0 %v2328
      %v2330 = vpop.xlane.xlu0 %2329
      %v2331 = vmul.f32 %v2330, %v583
      %v2332 = vsub.f32 %v2317, %v2331
      %v2333 = vmul.f32 %v2332, %v2332
      %v2334 = vsel %vm579, %v2333, 0.0
      %2335 = vadd.xlane.f32.xlu0 %v2334
      %v2336 = vpop.xlane.xlu0 %2335
      %v2337 = vmul.f32 %v2336, %v583
      %v2338 = vadd.f32 %v2337, 1e-05
      %v2339 = vrsqrt.pop %v2338
      %v2340 = vmul.f32 %v2332, %v2339
      %v2341 = vlaneseq
      %v2342 = vshrl.u32 %v2341, 7
      %v2343 = vsub.s32 0, %v2342
      %v2344 = vrot.slane %v2326, %v2343
      %v2345 = vmul.f32 %v2340, %v2344
      %v2346 = vlaneseq
      %v2347 = vshrl.u32 %v2346, 7
      %v2348 = vsub.s32 0, %v2347
      %v2349 = vrot.slane %v2327, %v2348
      %v2350 = vadd.f32 %v2345, %v2349
      %v2351 = vadd.f32 %v2350, %v2322
      %v2352 = vpack.c.bf16 %v2351, %v2351
      %v2353 = vpack.c.bf16 %v2350, %v2350
      %v2354 = vld [vmem:[%s5] sm:$0xf]
      %v2355 = vld [vmem:[%s5 + $0x4] sm:$0xf]
      %v2356 = vld [vmem:[%s5 + $0x8] sm:$0xf]
      %v2357 = vld [vmem:[%s5 + $0xc] sm:$0xf]
      %v2358 = vld [vmem:[%s6] sm:$0x1]
      %v2360 = vlaneseq
      %v2361 = vshrl.u32 %v2360, 7
      %v2362 = vsub.s32 0, %v2361
      %v2363 = vrot.slane %v2358, %v2362
      %v2369 = vunpack.c.l.b16 %v2354
      %v2370 = vunpack.c.l.b16 %v2355
      %v2371 = vunpack.c.l.b16 %v2356
      %v2372 = vunpack.c.l.b16 %v2357
      %v2373 = vpack.c.b16 %v2370, %v2369
      %v2374 = vpack.c.b16 %v2372, %v2371
      %v2378 = vsel %vm579, %v2352, 0
      %2380 = vmatprep.subr.bf16.mxu0 0
      %2381 = vmatpush1.bf16.msra.mxu0 %v2373
      %2382 = vmatprep.subr.bf16.mxu0 0
      %2383 = vmatpush1.bf16.msra.mxu0 %v2374
      %2384 = vmatprep.subr.bf16.mxu0 0
      %2385 = vmatpush1.bf16.msra.mxu0 0
      %2386 = vmatprep.subr.bf16.mxu0 0
      %2387 = vmatpush1.bf16.msra.mxu0 0
      %2388 = vmatprep.subr.bf16.mxu0 0
      %2389 = vmatpush1.bf16.msra.mxu0 0
      %2390 = vmatprep.subr.bf16.mxu0 0
      %2391 = vmatpush1.bf16.msra.mxu0 0
      %2392 = vmatprep.subr.bf16.mxu0 0
      %2393 = vmatpush1.bf16.msra.mxu0 0
      %2394 = vmatprep.subr.bf16.mxu0 0
      %2395 = vmatpush1.bf16.msra.mxu0 0
      %2396 = vmatprep.subr.bf16.mxu0 0
      %2397 = vmatpush1.bf16.msra.mxu0 0
      %2398 = vmatprep.subr.bf16.mxu0 0
      %2399 = vmatpush1.bf16.msra.mxu0 0
      %2400 = vmatprep.subr.bf16.mxu0 0
      %2401 = vmatpush1.bf16.msra.mxu0 0
      %2402 = vmatprep.subr.bf16.mxu0 0
      %2403 = vmatpush1.bf16.msra.mxu0 0
      %2404 = vmatprep.subr.bf16.mxu0 0
      %2405 = vmatpush1.bf16.msra.mxu0 0
      %2406 = vmatprep.subr.bf16.mxu0 0
      %2407 = vmatpush1.bf16.msra.mxu0 0
      %2408 = vmatprep.subr.bf16.mxu0 0
      %2409 = vmatpush1.bf16.msra.mxu0 0
      %2410 = vmatprep.subr.bf16.mxu0 0
      %2411 = vmatpush1.bf16.msra.mxu0 0
      %2412 = vmatprep.mubr.bf16.mxu0 0
      %2413 = vmatmul.mubr.bf16.gmra.mrb[0].mxu0 %v2378
      %v2414 = vpop.f32.mrb[0].mxu0
      %v2415 = vadd.f32 %v2363, %v2414
      %v2416 = vpop.f32.mrb[0].mxu0
      %v2417 = vpop.f32.mrb[0].mxu0
      %v2418 = vpop.f32.mrb[0].mxu0
      %2419 = vdwg.mxu0
      %v2420 = vld [vmem:[%s673] sm:$0xf]
      %v2421 = vld [vmem:[%s673 + $0x4] sm:$0xf]
      %v2422 = vld [vmem:[%s673 + $0x8] sm:$0xf]
      %v2423 = vld [vmem:[%s673 + $0xc] sm:$0xf]
      %v2424 = vld [vmem:[%s678] sm:$0x1]
      %v2426 = vlaneseq
      %v2427 = vshrl.u32 %v2426, 7
      %v2428 = vsub.s32 0, %v2427
      %v2429 = vrot.slane %v2424, %v2428
      %v2435 = vunpack.c.l.b16 %v2420
      %v2436 = vunpack.c.l.b16 %v2421
      %v2437 = vunpack.c.l.b16 %v2422
      %v2438 = vunpack.c.l.b16 %v2423
      %v2439 = vpack.c.b16 %v2436, %v2435
      %v2440 = vpack.c.b16 %v2438, %v2437
      %2443 = vmatprep.subr.bf16.mxu0 0
      %2444 = vmatpush1.bf16.msra.mxu0 %v2439
      %2445 = vmatprep.subr.bf16.mxu0 0
      %2446 = vmatpush1.bf16.msra.mxu0 %v2440
      %2447 = vmatprep.subr.bf16.mxu0 0
      %2448 = vmatpush1.bf16.msra.mxu0 0
      %2449 = vmatprep.subr.bf16.mxu0 0
      %2450 = vmatpush1.bf16.msra.mxu0 0
      %2451 = vmatprep.subr.bf16.mxu0 0
      %2452 = vmatpush1.bf16.msra.mxu0 0
      %2453 = vmatprep.subr.bf16.mxu0 0
      %2454 = vmatpush1.bf16.msra.mxu0 0
      %2455 = vmatprep.subr.bf16.mxu0 0
      %2456 = vmatpush1.bf16.msra.mxu0 0
      %2457 = vmatprep.subr.bf16.mxu0 0
      %2458 = vmatpush1.bf16.msra.mxu0 0
      %2459 = vmatprep.subr.bf16.mxu0 0
      %2460 = vmatpush1.bf16.msra.mxu0 0
      %2461 = vmatprep.subr.bf16.mxu0 0
      %2462 = vmatpush1.bf16.msra.mxu0 0
      %2463 = vmatprep.subr.bf16.mxu0 0
      %2464 = vmatpush1.bf16.msra.mxu0 0
      %2465 = vmatprep.subr.bf16.mxu0 0
      %2466 = vmatpush1.bf16.msra.mxu0 0
      %2467 = vmatprep.subr.bf16.mxu0 0
      %2468 = vmatpush1.bf16.msra.mxu0 0
      %2469 = vmatprep.subr.bf16.mxu0 0
      %2470 = vmatpush1.bf16.msra.mxu0 0
      %2471 = vmatprep.subr.bf16.mxu0 0
      %2472 = vmatpush1.bf16.msra.mxu0 0
      %2473 = vmatprep.subr.bf16.mxu0 0
      %2474 = vmatpush1.bf16.msra.mxu0 0
      %2475 = vmatprep.mubr.bf16.mxu0 0
      %2476 = vmatmul.mubr.bf16.gmra.mrb[0].mxu0 %v2378
      %v2477 = vpop.f32.mrb[0].mxu0
      %v2478 = vadd.f32 %v2429, %v2477
      %v2479 = vpop.f32.mrb[0].mxu0
      %v2480 = vpop.f32.mrb[0].mxu0
      %v2481 = vpop.f32.mrb[0].mxu0
      %2482 = vdwg.mxu0
      %v2483 = vld [vmem:[%s738] sm:$0xf]
      %v2484 = vld [vmem:[%s738 + $0x4] sm:$0xf]
      %v2485 = vld [vmem:[%s738 + $0x8] sm:$0xf]
      %v2486 = vld [vmem:[%s738 + $0xc] sm:$0xf]
      %v2487 = vld [vmem:[%s743] sm:$0x1]
      %v2489 = vlaneseq
      %v2490 = vshrl.u32 %v2489, 7
      %v2491 = vsub.s32 0, %v2490
      %v2492 = vrot.slane %v2487, %v2491
      %v2498 = vunpack.c.l.b16 %v2483
      %v2499 = vunpack.c.l.b16 %v2484
      %v2500 = vunpack.c.l.b16 %v2485
      %v2501 = vunpack.c.l.b16 %v2486
      %v2502 = vpack.c.b16 %v2499, %v2498
      %v2503 = vpack.c.b16 %v2501, %v2500
      %v2507 = vsel %vm579, %v2353, 0
      %2509 = vmatprep.subr.bf16.mxu0 0
      %2510 = vmatpush1.bf16.msra.mxu0 %v2502
      %2511 = vmatprep.subr.bf16.mxu0 0
      %2512 = vmatpush1.bf16.msra.mxu0 %v2503
      %2513 = vmatprep.subr.bf16.mxu0 0
      %2514 = vmatpush1.bf16.msra.mxu0 0
      %2515 = vmatprep.subr.bf16.mxu0 0
      %2516 = vmatpush1.bf16.msra.mxu0 0
      %2517 = vmatprep.subr.bf16.mxu0 0
      %2518 = vmatpush1.bf16.msra.mxu0 0
      %2519 = vmatprep.subr.bf16.mxu0 0
      %2520 = vmatpush1.bf16.msra.mxu0 0
      %2521 = vmatprep.subr.bf16.mxu0 0
      %2522 = vmatpush1.bf16.msra.mxu0 0
      %2523 = vmatprep.subr.bf16.mxu0 0
      %2524 = vmatpush1.bf16.msra.mxu0 0
      %2525 = vmatprep.subr.bf16.mxu0 0
      %2526 = vmatpush1.bf16.msra.mxu0 0
      %2527 = vmatprep.subr.bf16.mxu0 0
      %2528 = vmatpush1.bf16.msra.mxu0 0
      %2529 = vmatprep.subr.bf16.mxu0 0
      %2530 = vmatpush1.bf16.msra.mxu0 0
      %2531 = vmatprep.subr.bf16.mxu0 0
      %2532 = vmatpush1.bf16.msra.mxu0 0
      %2533 = vmatprep.subr.bf16.mxu0 0
      %2534 = vmatpush1.bf16.msra.mxu0 0
      %2535 = vmatprep.subr.bf16.mxu0 0
      %2536 = vmatpush1.bf16.msra.mxu0 0
      %2537 = vmatprep.subr.bf16.mxu0 0
      %2538 = vmatpush1.bf16.msra.mxu0 0
      %2539 = vmatprep.subr.bf16.mxu0 0
      %2540 = vmatpush1.bf16.msra.mxu0 0
      %2541 = vmatprep.mubr.bf16.mxu0 0
      %2542 = vmatmul.mubr.bf16.gmra.mrb[0].mxu0 %v2507
      %v2543 = vpop.f32.mrb[0].mxu0
      %v2544 = vadd.f32 %v2492, %v2543
      %v2545 = vpop.f32.mrb[0].mxu0
      %v2546 = vpop.f32.mrb[0].mxu0
      %v2547 = vpop.f32.mrb[0].mxu0
      %2548 = vdwg.mxu0
      %2550 = vrot.lane.b32.xlu0 %v2415, 120
      %v2551 = vpop.permute.xlu0 %2550
      %2553 = vrot.lane.b32.xlu0 %v2415, 112
      %v2554 = vpop.permute.xlu0 %2553
      %2556 = vrot.lane.b32.xlu0 %v2415, 104
      %v2557 = vpop.permute.xlu0 %2556
      %2560 = vrot.lane.b32.xlu0 %v2478, 120
      %v2561 = vpop.permute.xlu0 %2560
      %2563 = vrot.lane.b32.xlu0 %v2478, 112
      %v2564 = vpop.permute.xlu0 %2563
      %2566 = vrot.lane.b32.xlu0 %v2478, 104
      %v2567 = vpop.permute.xlu0 %2566
      %2570 = vrot.lane.b32.xlu0 %v2544, 120
      %v2571 = vpop.permute.xlu0 %2570
      %2573 = vrot.lane.b32.xlu0 %v2544, 112
      %v2574 = vpop.permute.xlu0 %2573
      %2576 = vrot.lane.b32.xlu0 %v2544, 104
      %v2577 = vpop.permute.xlu0 %2576
      %v2579 = vpack.c.bf16 %v2415, %v2415
      %v2580 = vpack.c.bf16 %v2551, %v2551
      %v2581 = vpack.c.bf16 %v2554, %v2554
      %v2582 = vpack.c.bf16 %v2557, %v2557
      %v2583 = vpack.c.bf16 %v2478, %v2478
      %v2584 = vpack.c.bf16 %v2561, %v2561
      %v2585 = vpack.c.bf16 %v2564, %v2564
      %v2586 = vpack.c.bf16 %v2567, %v2567
      %v2588 = vsel %vm844, %v2579, 0
      %v2591 = vsel %vm844, %v2583, 0
      %2593 = vmatprep.subr.bf16.mxu0 0
      %2594 = vmatpush1.bf16.xpose.msra.mxu0 %v2591
      %2595 = vmatprep.subr.bf16.mxu0 0
      %2596 = vmatpush1.bf16.xpose.msra.mxu0 0
      %2597 = vmatprep.subr.bf16.mxu0 0
      %2598 = vmatpush1.bf16.xpose.msra.mxu0 0
      %2599 = vmatprep.subr.bf16.mxu0 0
      %2600 = vmatpush1.bf16.xpose.msra.mxu0 0
      %2601 = vmatprep.subr.bf16.mxu0 0
      %2602 = vmatpush1.bf16.xpose.msra.mxu0 0
      %2603 = vmatprep.subr.bf16.mxu0 0
      %2604 = vmatpush1.bf16.xpose.msra.mxu0 0
      %2605 = vmatprep.subr.bf16.mxu0 0
      %2606 = vmatpush1.bf16.xpose.msra.mxu0 0
      %2607 = vmatprep.subr.bf16.mxu0 0
      %2608 = vmatpush1.bf16.xpose.msra.mxu0 0
      %2609 = vmatprep.subr.bf16.mxu0 0
      %2610 = vmatpush1.bf16.xpose.msra.mxu0 0
      %2611 = vmatprep.subr.bf16.mxu0 0
      %2612 = vmatpush1.bf16.xpose.msra.mxu0 0
      %2613 = vmatprep.subr.bf16.mxu0 0
      %2614 = vmatpush1.bf16.xpose.msra.mxu0 0
      %2615 = vmatprep.subr.bf16.mxu0 0
      %2616 = vmatpush1.bf16.xpose.msra.mxu0 0
      %2617 = vmatprep.subr.bf16.mxu0 0
      %2618 = vmatpush1.bf16.xpose.msra.mxu0 0
      %2619 = vmatprep.subr.bf16.mxu0 0
      %2620 = vmatpush1.bf16.xpose.msra.mxu0 0
      %2621 = vmatprep.subr.bf16.mxu0 0
      %2622 = vmatpush1.bf16.xpose.msra.mxu0 0
      %2623 = vmatprep.subr.bf16.mxu0 0
      %2624 = vmatpush1.bf16.xpose.msra.mxu0 0
      %2625 = vmatprep.mubr.bf16.mxu0 0
      %2626 = vmatmul.mubr.bf16.gmra.mrb[0].mxu0 %v2588
      %v2627 = vpop.f32.mrb[0].mxu0
      %v2628 = vadd.f32 0.0, %v2627
      %v2629 = vpop.f32.mrb[0].mxu0
      %v2630 = vpop.f32.mrb[0].mxu0
      %v2631 = vpop.f32.mrb[0].mxu0
      %2632 = vdwg.mxu0
      %v2634 = vsel %vm844, %v2580, 0
      %v2637 = vsel %vm844, %v2584, 0
      %2639 = vmatprep.subr.bf16.mxu0 0
      %2640 = vmatpush1.bf16.xpose.msra.mxu0 %v2637
      %2641 = vmatprep.subr.bf16.mxu0 0
      %2642 = vmatpush1.bf16.xpose.msra.mxu0 0
      %2643 = vmatprep.subr.bf16.mxu0 0
      %2644 = vmatpush1.bf16.xpose.msra.mxu0 0
      %2645 = vmatprep.subr.bf16.mxu0 0
      %2646 = vmatpush1.bf16.xpose.msra.mxu0 0
      %2647 = vmatprep.subr.bf16.mxu0 0
      %2648 = vmatpush1.bf16.xpose.msra.mxu0 0
      %2649 = vmatprep.subr.bf16.mxu0 0
      %2650 = vmatpush1.bf16.xpose.msra.mxu0 0
      %2651 = vmatprep.subr.bf16.mxu0 0
      %2652 = vmatpush1.bf16.xpose.msra.mxu0 0
      %2653 = vmatprep.subr.bf16.mxu0 0
      %2654 = vmatpush1.bf16.xpose.msra.mxu0 0
      %2655 = vmatprep.subr.bf16.mxu0 0
      %2656 = vmatpush1.bf16.xpose.msra.mxu0 0
      %2657 = vmatprep.subr.bf16.mxu0 0
      %2658 = vmatpush1.bf16.xpose.msra.mxu0 0
      %2659 = vmatprep.subr.bf16.mxu0 0
      %2660 = vmatpush1.bf16.xpose.msra.mxu0 0
      %2661 = vmatprep.subr.bf16.mxu0 0
      %2662 = vmatpush1.bf16.xpose.msra.mxu0 0
      %2663 = vmatprep.subr.bf16.mxu0 0
      %2664 = vmatpush1.bf16.xpose.msra.mxu0 0
      %2665 = vmatprep.subr.bf16.mxu0 0
      %2666 = vmatpush1.bf16.xpose.msra.mxu0 0
      %2667 = vmatprep.subr.bf16.mxu0 0
      %2668 = vmatpush1.bf16.xpose.msra.mxu0 0
      %2669 = vmatprep.subr.bf16.mxu0 0
      %2670 = vmatpush1.bf16.xpose.msra.mxu0 0
      %2671 = vmatprep.mubr.bf16.mxu0 0
      %2672 = vmatmul.mubr.bf16.gmra.mrb[0].mxu0 %v2634
      %v2673 = vpop.f32.mrb[0].mxu0
      %v2674 = vadd.f32 0.0, %v2673
      %v2675 = vpop.f32.mrb[0].mxu0
      %v2676 = vpop.f32.mrb[0].mxu0
      %v2677 = vpop.f32.mrb[0].mxu0
      %2678 = vdwg.mxu0
      %v2680 = vsel %vm844, %v2581, 0
      %v2683 = vsel %vm844, %v2585, 0
      %2685 = vmatprep.subr.bf16.mxu0 0
      %2686 = vmatpush1.bf16.xpose.msra.mxu0 %v2683
      %2687 = vmatprep.subr.bf16.mxu0 0
      %2688 = vmatpush1.bf16.xpose.msra.mxu0 0
      %2689 = vmatprep.subr.bf16.mxu0 0
      %2690 = vmatpush1.bf16.xpose.msra.mxu0 0
      %2691 = vmatprep.subr.bf16.mxu0 0
      %2692 = vmatpush1.bf16.xpose.msra.mxu0 0
      %2693 = vmatprep.subr.bf16.mxu0 0
      %2694 = vmatpush1.bf16.xpose.msra.mxu0 0
      %2695 = vmatprep.subr.bf16.mxu0 0
      %2696 = vmatpush1.bf16.xpose.msra.mxu0 0
      %2697 = vmatprep.subr.bf16.mxu0 0
      %2698 = vmatpush1.bf16.xpose.msra.mxu0 0
      %2699 = vmatprep.subr.bf16.mxu0 0
      %2700 = vmatpush1.bf16.xpose.msra.mxu0 0
      %2701 = vmatprep.subr.bf16.mxu0 0
      %2702 = vmatpush1.bf16.xpose.msra.mxu0 0
      %2703 = vmatprep.subr.bf16.mxu0 0
      %2704 = vmatpush1.bf16.xpose.msra.mxu0 0
      %2705 = vmatprep.subr.bf16.mxu0 0
      %2706 = vmatpush1.bf16.xpose.msra.mxu0 0
      %2707 = vmatprep.subr.bf16.mxu0 0
      %2708 = vmatpush1.bf16.xpose.msra.mxu0 0
      %2709 = vmatprep.subr.bf16.mxu0 0
      %2710 = vmatpush1.bf16.xpose.msra.mxu0 0
      %2711 = vmatprep.subr.bf16.mxu0 0
      %2712 = vmatpush1.bf16.xpose.msra.mxu0 0
      %2713 = vmatprep.subr.bf16.mxu0 0
      %2714 = vmatpush1.bf16.xpose.msra.mxu0 0
      %2715 = vmatprep.subr.bf16.mxu0 0
      %2716 = vmatpush1.bf16.xpose.msra.mxu0 0
      %2717 = vmatprep.mubr.bf16.mxu0 0
      %2718 = vmatmul.mubr.bf16.gmra.mrb[0].mxu0 %v2680
      %v2719 = vpop.f32.mrb[0].mxu0
      %v2720 = vadd.f32 0.0, %v2719
      %v2721 = vpop.f32.mrb[0].mxu0
      %v2722 = vpop.f32.mrb[0].mxu0
      %v2723 = vpop.f32.mrb[0].mxu0
      %2724 = vdwg.mxu0
      %v2726 = vsel %vm844, %v2582, 0
      %v2729 = vsel %vm844, %v2586, 0
      %2731 = vmatprep.subr.bf16.mxu0 0
      %2732 = vmatpush1.bf16.xpose.msra.mxu0 %v2729
      %2733 = vmatprep.subr.bf16.mxu0 0
      %2734 = vmatpush1.bf16.xpose.msra.mxu0 0
      %2735 = vmatprep.subr.bf16.mxu0 0
      %2736 = vmatpush1.bf16.xpose.msra.mxu0 0
      %2737 = vmatprep.subr.bf16.mxu0 0
      %2738 = vmatpush1.bf16.xpose.msra.mxu0 0
      %2739 = vmatprep.subr.bf16.mxu0 0
      %2740 = vmatpush1.bf16.xpose.msra.mxu0 0
      %2741 = vmatprep.subr.bf16.mxu0 0
      %2742 = vmatpush1.bf16.xpose.msra.mxu0 0
      %2743 = vmatprep.subr.bf16.mxu0 0
      %2744 = vmatpush1.bf16.xpose.msra.mxu0 0
      %2745 = vmatprep.subr.bf16.mxu0 0
      %2746 = vmatpush1.bf16.xpose.msra.mxu0 0
      %2747 = vmatprep.subr.bf16.mxu0 0
      %2748 = vmatpush1.bf16.xpose.msra.mxu0 0
      %2749 = vmatprep.subr.bf16.mxu0 0
      %2750 = vmatpush1.bf16.xpose.msra.mxu0 0
      %2751 = vmatprep.subr.bf16.mxu0 0
      %2752 = vmatpush1.bf16.xpose.msra.mxu0 0
      %2753 = vmatprep.subr.bf16.mxu0 0
      %2754 = vmatpush1.bf16.xpose.msra.mxu0 0
      %2755 = vmatprep.subr.bf16.mxu0 0
      %2756 = vmatpush1.bf16.xpose.msra.mxu0 0
      %2757 = vmatprep.subr.bf16.mxu0 0
      %2758 = vmatpush1.bf16.xpose.msra.mxu0 0
      %2759 = vmatprep.subr.bf16.mxu0 0
      %2760 = vmatpush1.bf16.xpose.msra.mxu0 0
      %2761 = vmatprep.subr.bf16.mxu0 0
      %2762 = vmatpush1.bf16.xpose.msra.mxu0 0
      %2763 = vmatprep.mubr.bf16.mxu0 0
      %2764 = vmatmul.mubr.bf16.gmra.mrb[0].mxu0 %v2726
      %v2765 = vpop.f32.mrb[0].mxu0
      %v2766 = vadd.f32 0.0, %v2765
      %v2767 = vpop.f32.mrb[0].mxu0
      %v2768 = vpop.f32.mrb[0].mxu0
      %v2769 = vpop.f32.mrb[0].mxu0
      %2770 = vdwg.mxu0
      %v2771 = vsel %vm844, %v2628, -inf
      %2772 = vmax.xlane.f32.xlu0 %v2771
      %v2773 = vpop.xlane.xlu0 %2772
      %v2774 = vsel %vm844, %v2674, -inf
      %2775 = vmax.xlane.f32.xlu0 %v2774
      %v2776 = vpop.xlane.xlu0 %2775
      %v2777 = vsel %vm844, %v2720, -inf
      %2778 = vmax.xlane.f32.xlu0 %v2777
      %v2779 = vpop.xlane.xlu0 %2778
      %v2780 = vsel %vm844, %v2766, -inf
      %2781 = vmax.xlane.f32.xlu0 %v2780
      %v2782 = vpop.xlane.xlu0 %2781
      %v2783 = vsub.f32 %v2628, %v2773
      %v2784 = vsub.f32 %v2674, %v2776
      %v2785 = vsub.f32 %v2720, %v2779
      %v2786 = vsub.f32 %v2766, %v2782
      %v2787 = vmul.f32 %v2783, 1.442695
      %v2788 = vpow.pop %v2787
      %v2789 = vmul.f32 %v2784, 1.442695
      %v2790 = vpow.pop %v2789
      %v2791 = vmul.f32 %v2785, 1.442695
      %v2792 = vpow.pop %v2791
      %v2793 = vmul.f32 %v2786, 1.442695
      %v2794 = vpow.pop %v2793
      %v2795 = vsel %vm844, %v2788, 0.0
      %2796 = vadd.xlane.f32.xlu0 %v2795
      %v2797 = vpop.xlane.xlu0 %2796
      %v2798 = vsel %vm844, %v2790, 0.0
      %2799 = vadd.xlane.f32.xlu0 %v2798
      %v2800 = vpop.xlane.xlu0 %2799
      %v2801 = vsel %vm844, %v2792, 0.0
      %2802 = vadd.xlane.f32.xlu0 %v2801
      %v2803 = vpop.xlane.xlu0 %2802
      %v2804 = vsel %vm844, %v2794, 0.0
      %2805 = vadd.xlane.f32.xlu0 %v2804
      %v2806 = vpop.xlane.xlu0 %2805
      %v2807 = vrcp.pop %v2797
      %v2808 = vrcp.pop %v2800
      %v2809 = vrcp.pop %v2803
      %v2810 = vrcp.pop %v2806
      %v2811 = vmul.f32 %v2788, %v2807
      %v2812 = vmul.f32 %v2790, %v2808
      %v2813 = vmul.f32 %v2792, %v2809
      %v2814 = vmul.f32 %v2794, %v2810
      %v2815 = vpack.c.bf16 %v2811, %v2811
      %v2816 = vpack.c.bf16 %v2812, %v2812
      %v2817 = vpack.c.bf16 %v2813, %v2813
      %v2818 = vpack.c.bf16 %v2814, %v2814
      %v2819 = vpack.c.bf16 %v2544, %v2544
      %v2820 = vpack.c.bf16 %v2571, %v2571
      %v2821 = vpack.c.bf16 %v2574, %v2574
      %v2822 = vpack.c.bf16 %v2577, %v2577
      %v2824 = vsel %vm844, %v2815, 0
      %v2827 = vsel %vm1084, %v2819, 0
      %2829 = vmatprep.subr.bf16.mxu0 0
      %2830 = vmatpush1.bf16.msra.mxu0 %v2827
      %2831 = vmatprep.subr.bf16.mxu0 0
      %2832 = vmatpush1.bf16.msra.mxu0 0
      %2833 = vmatprep.subr.bf16.mxu0 0
      %2834 = vmatpush1.bf16.msra.mxu0 0
      %2835 = vmatprep.subr.bf16.mxu0 0
      %2836 = vmatpush1.bf16.msra.mxu0 0
      %2837 = vmatprep.subr.bf16.mxu0 0
      %2838 = vmatpush1.bf16.msra.mxu0 0
      %2839 = vmatprep.subr.bf16.mxu0 0
      %2840 = vmatpush1.bf16.msra.mxu0 0
      %2841 = vmatprep.subr.bf16.mxu0 0
      %2842 = vmatpush1.bf16.msra.mxu0 0
      %2843 = vmatprep.subr.bf16.mxu0 0
      %2844 = vmatpush1.bf16.msra.mxu0 0
      %2845 = vmatprep.subr.bf16.mxu0 0
      %2846 = vmatpush1.bf16.msra.mxu0 0
      %2847 = vmatprep.subr.bf16.mxu0 0
      %2848 = vmatpush1.bf16.msra.mxu0 0
      %2849 = vmatprep.subr.bf16.mxu0 0
      %2850 = vmatpush1.bf16.msra.mxu0 0
      %2851 = vmatprep.subr.bf16.mxu0 0
      %2852 = vmatpush1.bf16.msra.mxu0 0
      %2853 = vmatprep.subr.bf16.mxu0 0
      %2854 = vmatpush1.bf16.msra.mxu0 0
      %2855 = vmatprep.subr.bf16.mxu0 0
      %2856 = vmatpush1.bf16.msra.mxu0 0
      %2857 = vmatprep.subr.bf16.mxu0 0
      %2858 = vmatpush1.bf16.msra.mxu0 0
      %2859 = vmatprep.subr.bf16.mxu0 0
      %2860 = vmatpush1.bf16.msra.mxu0 0
      %2861 = vmatprep.mubr.bf16.mxu0 0
      %2862 = vmatmul.mubr.bf16.gmra.mrb[0].mxu0 %v2824
      %v2863 = vpop.f32.mrb[0].mxu0
      %v2864 = vadd.f32 0.0, %v2863
      %v2865 = vpop.f32.mrb[0].mxu0
      %v2866 = vpop.f32.mrb[0].mxu0
      %v2867 = vpop.f32.mrb[0].mxu0
      %2868 = vdwg.mxu0
      %v2870 = vsel %vm844, %v2816, 0
      %v2873 = vsel %vm1084, %v2820, 0
      %2875 = vmatprep.subr.bf16.mxu0 0
      %2876 = vmatpush1.bf16.msra.mxu0 %v2873
      %2877 = vmatprep.subr.bf16.mxu0 0
      %2878 = vmatpush1.bf16.msra.mxu0 0
      %2879 = vmatprep.subr.bf16.mxu0 0
      %2880 = vmatpush1.bf16.msra.mxu0 0
      %2881 = vmatprep.subr.bf16.mxu0 0
      %2882 = vmatpush1.bf16.msra.mxu0 0
      %2883 = vmatprep.subr.bf16.mxu0 0
      %2884 = vmatpush1.bf16.msra.mxu0 0
      %2885 = vmatprep.subr.bf16.mxu0 0
      %2886 = vmatpush1.bf16.msra.mxu0 0
      %2887 = vmatprep.subr.bf16.mxu0 0
      %2888 = vmatpush1.bf16.msra.mxu0 0
      %2889 = vmatprep.subr.bf16.mxu0 0
      %2890 = vmatpush1.bf16.msra.mxu0 0
      %2891 = vmatprep.subr.bf16.mxu0 0
      %2892 = vmatpush1.bf16.msra.mxu0 0
      %2893 = vmatprep.subr.bf16.mxu0 0
      %2894 = vmatpush1.bf16.msra.mxu0 0
      %2895 = vmatprep.subr.bf16.mxu0 0
      %2896 = vmatpush1.bf16.msra.mxu0 0
      %2897 = vmatprep.subr.bf16.mxu0 0
      %2898 = vmatpush1.bf16.msra.mxu0 0
      %2899 = vmatprep.subr.bf16.mxu0 0
      %2900 = vmatpush1.bf16.msra.mxu0 0
      %2901 = vmatprep.subr.bf16.mxu0 0
      %2902 = vmatpush1.bf16.msra.mxu0 0
      %2903 = vmatprep.subr.bf16.mxu0 0
      %2904 = vmatpush1.bf16.msra.mxu0 0
      %2905 = vmatprep.subr.bf16.mxu0 0
      %2906 = vmatpush1.bf16.msra.mxu0 0
      %2907 = vmatprep.mubr.bf16.mxu0 0
      %2908 = vmatmul.mubr.bf16.gmra.mrb[0].mxu0 %v2870
      %v2909 = vpop.f32.mrb[0].mxu0
      %v2910 = vadd.f32 0.0, %v2909
      %v2911 = vpop.f32.mrb[0].mxu0
      %v2912 = vpop.f32.mrb[0].mxu0
      %v2913 = vpop.f32.mrb[0].mxu0
      %2914 = vdwg.mxu0
      %v2916 = vsel %vm844, %v2817, 0
      %v2919 = vsel %vm1084, %v2821, 0
      %2921 = vmatprep.subr.bf16.mxu0 0
      %2922 = vmatpush1.bf16.msra.mxu0 %v2919
      %2923 = vmatprep.subr.bf16.mxu0 0
      %2924 = vmatpush1.bf16.msra.mxu0 0
      %2925 = vmatprep.subr.bf16.mxu0 0
      %2926 = vmatpush1.bf16.msra.mxu0 0
      %2927 = vmatprep.subr.bf16.mxu0 0
      %2928 = vmatpush1.bf16.msra.mxu0 0
      %2929 = vmatprep.subr.bf16.mxu0 0
      %2930 = vmatpush1.bf16.msra.mxu0 0
      %2931 = vmatprep.subr.bf16.mxu0 0
      %2932 = vmatpush1.bf16.msra.mxu0 0
      %2933 = vmatprep.subr.bf16.mxu0 0
      %2934 = vmatpush1.bf16.msra.mxu0 0
      %2935 = vmatprep.subr.bf16.mxu0 0
      %2936 = vmatpush1.bf16.msra.mxu0 0
      %2937 = vmatprep.subr.bf16.mxu0 0
      %2938 = vmatpush1.bf16.msra.mxu0 0
      %2939 = vmatprep.subr.bf16.mxu0 0
      %2940 = vmatpush1.bf16.msra.mxu0 0
      %2941 = vmatprep.subr.bf16.mxu0 0
      %2942 = vmatpush1.bf16.msra.mxu0 0
      %2943 = vmatprep.subr.bf16.mxu0 0
      %2944 = vmatpush1.bf16.msra.mxu0 0
      %2945 = vmatprep.subr.bf16.mxu0 0
      %2946 = vmatpush1.bf16.msra.mxu0 0
      %2947 = vmatprep.subr.bf16.mxu0 0
      %2948 = vmatpush1.bf16.msra.mxu0 0
      %2949 = vmatprep.subr.bf16.mxu0 0
      %2950 = vmatpush1.bf16.msra.mxu0 0
      %2951 = vmatprep.subr.bf16.mxu0 0
      %2952 = vmatpush1.bf16.msra.mxu0 0
      %2953 = vmatprep.mubr.bf16.mxu0 0
      %2954 = vmatmul.mubr.bf16.gmra.mrb[0].mxu0 %v2916
      %v2955 = vpop.f32.mrb[0].mxu0
      %v2956 = vadd.f32 0.0, %v2955
      %v2957 = vpop.f32.mrb[0].mxu0
      %v2958 = vpop.f32.mrb[0].mxu0
      %v2959 = vpop.f32.mrb[0].mxu0
      %2960 = vdwg.mxu0
      %v2962 = vsel %vm844, %v2818, 0
      %v2965 = vsel %vm1084, %v2822, 0
      %2967 = vmatprep.subr.bf16.mxu0 0
      %2968 = vmatpush1.bf16.msra.mxu0 %v2965
      %2969 = vmatprep.subr.bf16.mxu0 0
      %2970 = vmatpush1.bf16.msra.mxu0 0
      %2971 = vmatprep.subr.bf16.mxu0 0
      %2972 = vmatpush1.bf16.msra.mxu0 0
      %2973 = vmatprep.subr.bf16.mxu0 0
      %2974 = vmatpush1.bf16.msra.mxu0 0
      %2975 = vmatprep.subr.bf16.mxu0 0
      %2976 = vmatpush1.bf16.msra.mxu0 0
      %2977 = vmatprep.subr.bf16.mxu0 0
      %2978 = vmatpush1.bf16.msra.mxu0 0
      %2979 = vmatprep.subr.bf16.mxu0 0
      %2980 = vmatpush1.bf16.msra.mxu0 0
      %2981 = vmatprep.subr.bf16.mxu0 0
      %2982 = vmatpush1.bf16.msra.mxu0 0
      %2983 = vmatprep.subr.bf16.mxu0 0
      %2984 = vmatpush1.bf16.msra.mxu0 0
      %2985 = vmatprep.subr.bf16.mxu0 0
      %2986 = vmatpush1.bf16.msra.mxu0 0
      %2987 = vmatprep.subr.bf16.mxu0 0
      %2988 = vmatpush1.bf16.msra.mxu0 0
      %2989 = vmatprep.subr.bf16.mxu0 0
      %2990 = vmatpush1.bf16.msra.mxu0 0
      %2991 = vmatprep.subr.bf16.mxu0 0
      %2992 = vmatpush1.bf16.msra.mxu0 0
      %2993 = vmatprep.subr.bf16.mxu0 0
      %2994 = vmatpush1.bf16.msra.mxu0 0
      %2995 = vmatprep.subr.bf16.mxu0 0
      %2996 = vmatpush1.bf16.msra.mxu0 0
      %2997 = vmatprep.subr.bf16.mxu0 0
      %2998 = vmatpush1.bf16.msra.mxu0 0
      %2999 = vmatprep.mubr.bf16.mxu0 0
      %3000 = vmatmul.mubr.bf16.gmra.mrb[0].mxu0 %v2962
      %v3001 = vpop.f32.mrb[0].mxu0
      %v3002 = vadd.f32 0.0, %v3001
      %v3003 = vpop.f32.mrb[0].mxu0
      %v3004 = vpop.f32.mrb[0].mxu0
      %v3005 = vpop.f32.mrb[0].mxu0
      %3006 = vdwg.mxu0
      %3008 = vrot.lane.b32.xlu0 %v2910, 8
      %v3009 = vpop.permute.xlu0 %3008
      %3012 = vrot.lane.b32.xlu0 %v2956, 16
      %v3013 = vpop.permute.xlu0 %3012
      %3016 = vrot.lane.b32.xlu0 %v3002, 24
      %v3017 = vpop.permute.xlu0 %3016
      %v3019 = vsel %vm844, %v2864, %v3009
      %v3020 = vsel %vm1279, %v3019, %v3013
      %v3021 = vsel %vm1281, %v3020, %v3017
      %v3022 = vpack.c.bf16 %v3021, %v3021
      %v3023 = vld [vmem:[%s7] sm:$0xf]
      %v3024 = vld [vmem:[%s7 + $0x4] sm:$0xf]
      %v3025 = vld [vmem:[%s7 + $0x8] sm:$0xf]
      %v3026 = vld [vmem:[%s7 + $0xc] sm:$0xf]
      %v3027 = vld [vmem:[%s1288] sm:$0x1]
      %v3029 = vlaneseq
      %v3030 = vshrl.u32 %v3029, 7
      %v3031 = vsub.s32 0, %v3030
      %v3032 = vrot.slane %v3027, %v3031
      %v3038 = vunpack.c.l.b16 %v3023
      %v3039 = vunpack.c.l.b16 %v3024
      %v3040 = vunpack.c.l.b16 %v3025
      %v3041 = vunpack.c.l.b16 %v3026
      %v3042 = vpack.c.b16 %v3039, %v3038
      %v3043 = vpack.c.b16 %v3041, %v3040
      %v3047 = vsel %vm579, %v3022, 0
      %3049 = vmatprep.subr.bf16.mxu0 0
      %3050 = vmatpush1.bf16.msra.mxu0 %v3042
      %3051 = vmatprep.subr.bf16.mxu0 0
      %3052 = vmatpush1.bf16.msra.mxu0 %v3043
      %3053 = vmatprep.subr.bf16.mxu0 0
      %3054 = vmatpush1.bf16.msra.mxu0 0
      %3055 = vmatprep.subr.bf16.mxu0 0
      %3056 = vmatpush1.bf16.msra.mxu0 0
      %3057 = vmatprep.subr.bf16.mxu0 0
      %3058 = vmatpush1.bf16.msra.mxu0 0
      %3059 = vmatprep.subr.bf16.mxu0 0
      %3060 = vmatpush1.bf16.msra.mxu0 0
      %3061 = vmatprep.subr.bf16.mxu0 0
      %3062 = vmatpush1.bf16.msra.mxu0 0
      %3063 = vmatprep.subr.bf16.mxu0 0
      %3064 = vmatpush1.bf16.msra.mxu0 0
      %3065 = vmatprep.subr.bf16.mxu0 0
      %3066 = vmatpush1.bf16.msra.mxu0 0
      %3067 = vmatprep.subr.bf16.mxu0 0
      %3068 = vmatpush1.bf16.msra.mxu0 0
      %3069 = vmatprep.subr.bf16.mxu0 0
      %3070 = vmatpush1.bf16.msra.mxu0 0
      %3071 = vmatprep.subr.bf16.mxu0 0
      %3072 = vmatpush1.bf16.msra.mxu0 0
      %3073 = vmatprep.subr.bf16.mxu0 0
      %3074 = vmatpush1.bf16.msra.mxu0 0
      %3075 = vmatprep.subr.bf16.mxu0 0
      %3076 = vmatpush1.bf16.msra.mxu0 0
      %3077 = vmatprep.subr.bf16.mxu0 0
      %3078 = vmatpush1.bf16.msra.mxu0 0
      %3079 = vmatprep.subr.bf16.mxu0 0
      %3080 = vmatpush1.bf16.msra.mxu0 0
      %3081 = vmatprep.mubr.bf16.mxu0 0
      %3082 = vmatmul.mubr.bf16.gmra.mrb[0].mxu0 %v3047
      %v3083 = vpop.f32.mrb[0].mxu0
      %v3084 = vadd.f32 %v3032, %v3083
      %v3085 = vpop.f32.mrb[0].mxu0
      %v3086 = vpop.f32.mrb[0].mxu0
      %v3087 = vpop.f32.mrb[0].mxu0
      %3088 = vdwg.mxu0
      %v3089 = vadd.f32 %v2317, %v3084
      %v3090 = vld [vmem:[%s4 + $0x2] sm:$0x1]
      %v3091 = vld [vmem:[%s4 + $0x3] sm:$0x1]
      %v3092 = vsel %vm579, %v3089, 0.0
      %3093 = vadd.xlane.f32.xlu0 %v3092
      %v3094 = vpop.xlane.xlu0 %3093
      %v3095 = vmul.f32 %v3094, %v583
      %v3096 = vsub.f32 %v3089, %v3095
      %v3097 = vmul.f32 %v3096, %v3096
      %v3098 = vsel %vm579, %v3097, 0.0
      %3099 = vadd.xlane.f32.xlu0 %v3098
      %v3100 = vpop.xlane.xlu0 %3099
      %v3101 = vmul.f32 %v3100, %v583
      %v3102 = vadd.f32 %v3101, 1e-05
      %v3103 = vrsqrt.pop %v3102
      %v3104 = vmul.f32 %v3096, %v3103
      %v3105 = vlaneseq
      %v3106 = vshrl.u32 %v3105, 7
      %v3107 = vsub.s32 0, %v3106
      %v3108 = vrot.slane %v3090, %v3107
      %v3109 = vmul.f32 %v3104, %v3108
      %v3110 = vlaneseq
      %v3111 = vshrl.u32 %v3110, 7
      %v3112 = vsub.s32 0, %v3111
      %v3113 = vrot.slane %v3091, %v3112
      %v3114 = vadd.f32 %v3109, %v3113
      %v3115 = vadd.f32 %v3114, %v2322
      %v3116 = vadd.f32 %v2319, %v2324
      %v3117 = vadd.f32 %v2320, %v2325
      %v3118 = vpack.c.bf16 %v3115, %v3115
      %v3119 = vpack.c.bf16 %v3117, %v3116
      %v3120 = vpack.c.bf16 %v2320, %v2319
      %v3121 = vld [vmem:[%s8] sm:$0xf]
      %v3122 = vld [vmem:[%s8 + $0x4] sm:$0xf]
      %v3123 = vld [vmem:[%s8 + $0x8] sm:$0xf]
      %v3124 = vld [vmem:[%s8 + $0xc] sm:$0xf]
      %v3125 = vld [vmem:[%s9] sm:$0x1]
      %v3127 = vlaneseq
      %v3128 = vshrl.u32 %v3127, 7
      %v3129 = vsub.s32 0, %v3128
      %v3130 = vrot.slane %v3125, %v3129
      %v3136 = vunpack.c.l.b16 %v3121
      %v3137 = vunpack.c.l.b16 %v3122
      %v3138 = vunpack.c.l.b16 %v3123
      %v3139 = vunpack.c.l.b16 %v3124
      %v3140 = vpack.c.b16 %v3137, %v3136
      %v3141 = vpack.c.b16 %v3139, %v3138
      %v3145 = vsel %vm579, %v3118, 0
      %3147 = vmatprep.subr.bf16.mxu0 0
      %3148 = vmatpush1.bf16.msra.mxu0 %v3140
      %3149 = vmatprep.subr.bf16.mxu0 0
      %3150 = vmatpush1.bf16.msra.mxu0 %v3141
      %3151 = vmatprep.subr.bf16.mxu0 0
      %3152 = vmatpush1.bf16.msra.mxu0 0
      %3153 = vmatprep.subr.bf16.mxu0 0
      %3154 = vmatpush1.bf16.msra.mxu0 0
      %3155 = vmatprep.subr.bf16.mxu0 0
      %3156 = vmatpush1.bf16.msra.mxu0 0
      %3157 = vmatprep.subr.bf16.mxu0 0
      %3158 = vmatpush1.bf16.msra.mxu0 0
      %3159 = vmatprep.subr.bf16.mxu0 0
      %3160 = vmatpush1.bf16.msra.mxu0 0
      %3161 = vmatprep.subr.bf16.mxu0 0
      %3162 = vmatpush1.bf16.msra.mxu0 0
      %3163 = vmatprep.subr.bf16.mxu0 0
      %3164 = vmatpush1.bf16.msra.mxu0 0
      %3165 = vmatprep.subr.bf16.mxu0 0
      %3166 = vmatpush1.bf16.msra.mxu0 0
      %3167 = vmatprep.subr.bf16.mxu0 0
      %3168 = vmatpush1.bf16.msra.mxu0 0
      %3169 = vmatprep.subr.bf16.mxu0 0
      %3170 = vmatpush1.bf16.msra.mxu0 0
      %3171 = vmatprep.subr.bf16.mxu0 0
      %3172 = vmatpush1.bf16.msra.mxu0 0
      %3173 = vmatprep.subr.bf16.mxu0 0
      %3174 = vmatpush1.bf16.msra.mxu0 0
      %3175 = vmatprep.subr.bf16.mxu0 0
      %3176 = vmatpush1.bf16.msra.mxu0 0
      %3177 = vmatprep.subr.bf16.mxu0 0
      %3178 = vmatpush1.bf16.msra.mxu0 0
      %3179 = vmatprep.mubr.bf16.mxu0 0
      %3180 = vmatmul.mubr.bf16.gmra.mrb[0].mxu0 %v3145
      %v3181 = vpop.f32.mrb[0].mxu0
      %v3182 = vadd.f32 %v3130, %v3181
      %v3183 = vpop.f32.mrb[0].mxu0
      %v3184 = vpop.f32.mrb[0].mxu0
      %v3185 = vpop.f32.mrb[0].mxu0
      %3186 = vdwg.mxu0
      %v3187 = vld [vmem:[%s1449] sm:$0xf]
      %v3188 = vld [vmem:[%s1449 + $0x4] sm:$0xf]
      %v3189 = vld [vmem:[%s1449 + $0x8] sm:$0xf]
      %v3190 = vld [vmem:[%s1449 + $0xc] sm:$0xf]
      %v3191 = vld [vmem:[%s1454] sm:$0x1]
      %v3193 = vlaneseq
      %v3194 = vshrl.u32 %v3193, 7
      %v3195 = vsub.s32 0, %v3194
      %v3196 = vrot.slane %v3191, %v3195
      %v3202 = vunpack.c.l.b16 %v3187
      %v3203 = vunpack.c.l.b16 %v3188
      %v3204 = vunpack.c.l.b16 %v3189
      %v3205 = vunpack.c.l.b16 %v3190
      %v3206 = vpack.c.b16 %v3203, %v3202
      %v3207 = vpack.c.b16 %v3205, %v3204
      %v3211 = vsel %vm579, %v3119, 0
      %3213 = vmatprep.subr.bf16.mxu0 0
      %3214 = vmatpush1.bf16.msra.mxu0 %v3206
      %3215 = vmatprep.subr.bf16.mxu0 0
      %3216 = vmatpush1.bf16.msra.mxu0 %v3207
      %3217 = vmatprep.subr.bf16.mxu0 0
      %3218 = vmatpush1.bf16.msra.mxu0 0
      %3219 = vmatprep.subr.bf16.mxu0 0
      %3220 = vmatpush1.bf16.msra.mxu0 0
      %3221 = vmatprep.subr.bf16.mxu0 0
      %3222 = vmatpush1.bf16.msra.mxu0 0
      %3223 = vmatprep.subr.bf16.mxu0 0
      %3224 = vmatpush1.bf16.msra.mxu0 0
      %3225 = vmatprep.subr.bf16.mxu0 0
      %3226 = vmatpush1.bf16.msra.mxu0 0
      %3227 = vmatprep.subr.bf16.mxu0 0
      %3228 = vmatpush1.bf16.msra.mxu0 0
      %3229 = vmatprep.subr.bf16.mxu0 0
      %3230 = vmatpush1.bf16.msra.mxu0 0
      %3231 = vmatprep.subr.bf16.mxu0 0
      %3232 = vmatpush1.bf16.msra.mxu0 0
      %3233 = vmatprep.subr.bf16.mxu0 0
      %3234 = vmatpush1.bf16.msra.mxu0 0
      %3235 = vmatprep.subr.bf16.mxu0 0
      %3236 = vmatpush1.bf16.msra.mxu0 0
      %3237 = vmatprep.subr.bf16.mxu0 0
      %3238 = vmatpush1.bf16.msra.mxu0 0
      %3239 = vmatprep.subr.bf16.mxu0 0
      %3240 = vmatpush1.bf16.msra.mxu0 0
      %3241 = vmatprep.subr.bf16.mxu0 0
      %3242 = vmatpush1.bf16.msra.mxu0 0
      %3243 = vmatprep.subr.bf16.mxu0 0
      %3244 = vmatpush1.bf16.msra.mxu0 0
      %3245 = vmatprep.mubr.bf16.mxu0 0
      %3246 = vmatmul.mubr.bf16.gmra.mrb[0].mxu0 %v3211
      %v3247 = vpop.f32.mrb[0].mxu0
      %v3248 = vadd.f32 %v3196, %v3247
      %v3249 = vpop.f32.mrb[0].mxu0
      %v3250 = vpop.f32.mrb[0].mxu0
      %v3251 = vadd.f32 %v3196, %v3250
      %v3252 = vpop.f32.mrb[0].mxu0
      %3253 = vdwg.mxu0
      %v3254 = vld [vmem:[%s1518] sm:$0xf]
      %v3255 = vld [vmem:[%s1518 + $0x4] sm:$0xf]
      %v3256 = vld [vmem:[%s1518 + $0x8] sm:$0xf]
      %v3257 = vld [vmem:[%s1518 + $0xc] sm:$0xf]
      %v3258 = vld [vmem:[%s1523] sm:$0x1]
      %v3260 = vlaneseq
      %v3261 = vshrl.u32 %v3260, 7
      %v3262 = vsub.s32 0, %v3261
      %v3263 = vrot.slane %v3258, %v3262
      %v3269 = vunpack.c.l.b16 %v3254
      %v3270 = vunpack.c.l.b16 %v3255
      %v3271 = vunpack.c.l.b16 %v3256
      %v3272 = vunpack.c.l.b16 %v3257
      %v3273 = vpack.c.b16 %v3270, %v3269
      %v3274 = vpack.c.b16 %v3272, %v3271
      %v3278 = vsel %vm579, %v3120, 0
      %3280 = vmatprep.subr.bf16.mxu0 0
      %3281 = vmatpush1.bf16.msra.mxu0 %v3273
      %3282 = vmatprep.subr.bf16.mxu0 0
      %3283 = vmatpush1.bf16.msra.mxu0 %v3274
      %3284 = vmatprep.subr.bf16.mxu0 0
      %3285 = vmatpush1.bf16.msra.mxu0 0
      %3286 = vmatprep.subr.bf16.mxu0 0
      %3287 = vmatpush1.bf16.msra.mxu0 0
      %3288 = vmatprep.subr.bf16.mxu0 0
      %3289 = vmatpush1.bf16.msra.mxu0 0
      %3290 = vmatprep.subr.bf16.mxu0 0
      %3291 = vmatpush1.bf16.msra.mxu0 0
      %3292 = vmatprep.subr.bf16.mxu0 0
      %3293 = vmatpush1.bf16.msra.mxu0 0
      %3294 = vmatprep.subr.bf16.mxu0 0
      %3295 = vmatpush1.bf16.msra.mxu0 0
      %3296 = vmatprep.subr.bf16.mxu0 0
      %3297 = vmatpush1.bf16.msra.mxu0 0
      %3298 = vmatprep.subr.bf16.mxu0 0
      %3299 = vmatpush1.bf16.msra.mxu0 0
      %3300 = vmatprep.subr.bf16.mxu0 0
      %3301 = vmatpush1.bf16.msra.mxu0 0
      %3302 = vmatprep.subr.bf16.mxu0 0
      %3303 = vmatpush1.bf16.msra.mxu0 0
      %3304 = vmatprep.subr.bf16.mxu0 0
      %3305 = vmatpush1.bf16.msra.mxu0 0
      %3306 = vmatprep.subr.bf16.mxu0 0
      %3307 = vmatpush1.bf16.msra.mxu0 0
      %3308 = vmatprep.subr.bf16.mxu0 0
      %3309 = vmatpush1.bf16.msra.mxu0 0
      %3310 = vmatprep.subr.bf16.mxu0 0
      %3311 = vmatpush1.bf16.msra.mxu0 0
      %3312 = vmatprep.mubr.bf16.mxu0 0
      %3313 = vmatmul.mubr.bf16.gmra.mrb[0].mxu0 %v3278
      %v3314 = vpop.f32.mrb[0].mxu0
      %v3315 = vadd.f32 %v3263, %v3314
      %v3316 = vpop.f32.mrb[0].mxu0
      %v3317 = vpop.f32.mrb[0].mxu0
      %v3318 = vadd.f32 %v3263, %v3317
      %v3319 = vpop.f32.mrb[0].mxu0
      %3320 = vdwg.mxu0
      %3322 = vrot.lane.b32.xlu0 %v3182, 120
      %v3323 = vpop.permute.xlu0 %3322
      %3325 = vrot.lane.b32.xlu0 %v3182, 112
      %v3326 = vpop.permute.xlu0 %3325
      %3328 = vrot.lane.b32.xlu0 %v3182, 104
      %v3329 = vpop.permute.xlu0 %3328
      %3333 = vrot.lane.b32.xlu0 %v3248, 120
      %v3334 = vpop.permute.xlu0 %3333
      %3335 = vrot.lane.b32.xlu0 %v3251, 120
      %v3336 = vpop.permute.xlu0 %3335
      %3339 = vrot.lane.b32.xlu0 %v3248, 112
      %v3340 = vpop.permute.xlu0 %3339
      %3341 = vrot.lane.b32.xlu0 %v3251, 112
      %v3342 = vpop.permute.xlu0 %3341
      %3345 = vrot.lane.b32.xlu0 %v3248, 104
      %v3346 = vpop.permute.xlu0 %3345
      %3347 = vrot.lane.b32.xlu0 %v3251, 104
      %v3348 = vpop.permute.xlu0 %3347
      %3353 = vrot.lane.b32.xlu0 %v3315, 120
      %v3354 = vpop.permute.xlu0 %3353
      %3355 = vrot.lane.b32.xlu0 %v3318, 120
      %v3356 = vpop.permute.xlu0 %3355
      %3359 = vrot.lane.b32.xlu0 %v3315, 112
      %v3360 = vpop.permute.xlu0 %3359
      %3361 = vrot.lane.b32.xlu0 %v3318, 112
      %v3362 = vpop.permute.xlu0 %3361
      %3365 = vrot.lane.b32.xlu0 %v3315, 104
      %v3366 = vpop.permute.xlu0 %3365
      %3367 = vrot.lane.b32.xlu0 %v3318, 104
      %v3368 = vpop.permute.xlu0 %3367
      %v3371 = vpack.c.bf16 %v3182, %v3182
      %v3372 = vpack.c.bf16 %v3323, %v3323
      %v3373 = vpack.c.bf16 %v3326, %v3326
      %v3374 = vpack.c.bf16 %v3329, %v3329
      %v3375 = vpack.c.bf16 %v3251, %v3248
      %v3376 = vpack.c.bf16 %v3336, %v3334
      %v3377 = vpack.c.bf16 %v3342, %v3340
      %v3378 = vpack.c.bf16 %v3348, %v3346
      %v3380 = vsel %vm844, %v3371, 0
      %v3383 = vsel %vm844, %v3375, 0
      %3385 = vmatprep.subr.bf16.mxu0 0
      %3386 = vmatpush1.bf16.xpose.msra.mxu0 %v3383
      %3387 = vmatprep.subr.bf16.mxu0 0
      %3388 = vmatpush1.bf16.xpose.msra.mxu0 0
      %3389 = vmatprep.subr.bf16.mxu0 0
      %3390 = vmatpush1.bf16.xpose.msra.mxu0 0
      %3391 = vmatprep.subr.bf16.mxu0 0
      %3392 = vmatpush1.bf16.xpose.msra.mxu0 0
      %3393 = vmatprep.subr.bf16.mxu0 0
      %3394 = vmatpush1.bf16.xpose.msra.mxu0 0
      %3395 = vmatprep.subr.bf16.mxu0 0
      %3396 = vmatpush1.bf16.xpose.msra.mxu0 0
      %3397 = vmatprep.subr.bf16.mxu0 0
      %3398 = vmatpush1.bf16.xpose.msra.mxu0 0
      %3399 = vmatprep.subr.bf16.mxu0 0
      %3400 = vmatpush1.bf16.xpose.msra.mxu0 0
      %3401 = vmatprep.subr.bf16.mxu0 0
      %3402 = vmatpush1.bf16.xpose.msra.mxu0 0
      %3403 = vmatprep.subr.bf16.mxu0 0
      %3404 = vmatpush1.bf16.xpose.msra.mxu0 0
      %3405 = vmatprep.subr.bf16.mxu0 0
      %3406 = vmatpush1.bf16.xpose.msra.mxu0 0
      %3407 = vmatprep.subr.bf16.mxu0 0
      %3408 = vmatpush1.bf16.xpose.msra.mxu0 0
      %3409 = vmatprep.subr.bf16.mxu0 0
      %3410 = vmatpush1.bf16.xpose.msra.mxu0 0
      %3411 = vmatprep.subr.bf16.mxu0 0
      %3412 = vmatpush1.bf16.xpose.msra.mxu0 0
      %3413 = vmatprep.subr.bf16.mxu0 0
      %3414 = vmatpush1.bf16.xpose.msra.mxu0 0
      %3415 = vmatprep.subr.bf16.mxu0 0
      %3416 = vmatpush1.bf16.xpose.msra.mxu0 0
      %3417 = vmatprep.mubr.bf16.mxu0 0
      %3418 = vmatmul.mubr.bf16.gmra.mrb[0].mxu0 %v3380
      %v3419 = vpop.f32.mrb[0].mxu0
      %v3420 = vadd.f32 0.0, %v3419
      %v3421 = vpop.f32.mrb[0].mxu0
      %v3422 = vpop.f32.mrb[0].mxu0
      %v3423 = vpop.f32.mrb[0].mxu0
      %3424 = vdwg.mxu0
      %v3426 = vsel %vm844, %v3372, 0
      %v3429 = vsel %vm844, %v3376, 0
      %3431 = vmatprep.subr.bf16.mxu0 0
      %3432 = vmatpush1.bf16.xpose.msra.mxu0 %v3429
      %3433 = vmatprep.subr.bf16.mxu0 0
      %3434 = vmatpush1.bf16.xpose.msra.mxu0 0
      %3435 = vmatprep.subr.bf16.mxu0 0
      %3436 = vmatpush1.bf16.xpose.msra.mxu0 0
      %3437 = vmatprep.subr.bf16.mxu0 0
      %3438 = vmatpush1.bf16.xpose.msra.mxu0 0
      %3439 = vmatprep.subr.bf16.mxu0 0
      %3440 = vmatpush1.bf16.xpose.msra.mxu0 0
      %3441 = vmatprep.subr.bf16.mxu0 0
      %3442 = vmatpush1.bf16.xpose.msra.mxu0 0
      %3443 = vmatprep.subr.bf16.mxu0 0
      %3444 = vmatpush1.bf16.xpose.msra.mxu0 0
      %3445 = vmatprep.subr.bf16.mxu0 0
      %3446 = vmatpush1.bf16.xpose.msra.mxu0 0
      %3447 = vmatprep.subr.bf16.mxu0 0
      %3448 = vmatpush1.bf16.xpose.msra.mxu0 0
      %3449 = vmatprep.subr.bf16.mxu0 0
      %3450 = vmatpush1.bf16.xpose.msra.mxu0 0
      %3451 = vmatprep.subr.bf16.mxu0 0
      %3452 = vmatpush1.bf16.xpose.msra.mxu0 0
      %3453 = vmatprep.subr.bf16.mxu0 0
      %3454 = vmatpush1.bf16.xpose.msra.mxu0 0
      %3455 = vmatprep.subr.bf16.mxu0 0
      %3456 = vmatpush1.bf16.xpose.msra.mxu0 0
      %3457 = vmatprep.subr.bf16.mxu0 0
      %3458 = vmatpush1.bf16.xpose.msra.mxu0 0
      %3459 = vmatprep.subr.bf16.mxu0 0
      %3460 = vmatpush1.bf16.xpose.msra.mxu0 0
      %3461 = vmatprep.subr.bf16.mxu0 0
      %3462 = vmatpush1.bf16.xpose.msra.mxu0 0
      %3463 = vmatprep.mubr.bf16.mxu0 0
      %3464 = vmatmul.mubr.bf16.gmra.mrb[0].mxu0 %v3426
      %v3465 = vpop.f32.mrb[0].mxu0
      %v3466 = vadd.f32 0.0, %v3465
      %v3467 = vpop.f32.mrb[0].mxu0
      %v3468 = vpop.f32.mrb[0].mxu0
      %v3469 = vpop.f32.mrb[0].mxu0
      %3470 = vdwg.mxu0
      %v3472 = vsel %vm844, %v3373, 0
      %v3475 = vsel %vm844, %v3377, 0
      %3477 = vmatprep.subr.bf16.mxu0 0
      %3478 = vmatpush1.bf16.xpose.msra.mxu0 %v3475
      %3479 = vmatprep.subr.bf16.mxu0 0
      %3480 = vmatpush1.bf16.xpose.msra.mxu0 0
      %3481 = vmatprep.subr.bf16.mxu0 0
      %3482 = vmatpush1.bf16.xpose.msra.mxu0 0
      %3483 = vmatprep.subr.bf16.mxu0 0
      %3484 = vmatpush1.bf16.xpose.msra.mxu0 0
      %3485 = vmatprep.subr.bf16.mxu0 0
      %3486 = vmatpush1.bf16.xpose.msra.mxu0 0
      %3487 = vmatprep.subr.bf16.mxu0 0
      %3488 = vmatpush1.bf16.xpose.msra.mxu0 0
      %3489 = vmatprep.subr.bf16.mxu0 0
      %3490 = vmatpush1.bf16.xpose.msra.mxu0 0
      %3491 = vmatprep.subr.bf16.mxu0 0
      %3492 = vmatpush1.bf16.xpose.msra.mxu0 0
      %3493 = vmatprep.subr.bf16.mxu0 0
      %3494 = vmatpush1.bf16.xpose.msra.mxu0 0
      %3495 = vmatprep.subr.bf16.mxu0 0
      %3496 = vmatpush1.bf16.xpose.msra.mxu0 0
      %3497 = vmatprep.subr.bf16.mxu0 0
      %3498 = vmatpush1.bf16.xpose.msra.mxu0 0
      %3499 = vmatprep.subr.bf16.mxu0 0
      %3500 = vmatpush1.bf16.xpose.msra.mxu0 0
      %3501 = vmatprep.subr.bf16.mxu0 0
      %3502 = vmatpush1.bf16.xpose.msra.mxu0 0
      %3503 = vmatprep.subr.bf16.mxu0 0
      %3504 = vmatpush1.bf16.xpose.msra.mxu0 0
      %3505 = vmatprep.subr.bf16.mxu0 0
      %3506 = vmatpush1.bf16.xpose.msra.mxu0 0
      %3507 = vmatprep.subr.bf16.mxu0 0
      %3508 = vmatpush1.bf16.xpose.msra.mxu0 0
      %3509 = vmatprep.mubr.bf16.mxu0 0
      %3510 = vmatmul.mubr.bf16.gmra.mrb[0].mxu0 %v3472
      %v3511 = vpop.f32.mrb[0].mxu0
      %v3512 = vadd.f32 0.0, %v3511
      %v3513 = vpop.f32.mrb[0].mxu0
      %v3514 = vpop.f32.mrb[0].mxu0
      %v3515 = vpop.f32.mrb[0].mxu0
      %3516 = vdwg.mxu0
      %v3518 = vsel %vm844, %v3374, 0
      %v3521 = vsel %vm844, %v3378, 0
      %3523 = vmatprep.subr.bf16.mxu0 0
      %3524 = vmatpush1.bf16.xpose.msra.mxu0 %v3521
      %3525 = vmatprep.subr.bf16.mxu0 0
      %3526 = vmatpush1.bf16.xpose.msra.mxu0 0
      %3527 = vmatprep.subr.bf16.mxu0 0
      %3528 = vmatpush1.bf16.xpose.msra.mxu0 0
      %3529 = vmatprep.subr.bf16.mxu0 0
      %3530 = vmatpush1.bf16.xpose.msra.mxu0 0
      %3531 = vmatprep.subr.bf16.mxu0 0
      %3532 = vmatpush1.bf16.xpose.msra.mxu0 0
      %3533 = vmatprep.subr.bf16.mxu0 0
      %3534 = vmatpush1.bf16.xpose.msra.mxu0 0
      %3535 = vmatprep.subr.bf16.mxu0 0
      %3536 = vmatpush1.bf16.xpose.msra.mxu0 0
      %3537 = vmatprep.subr.bf16.mxu0 0
      %3538 = vmatpush1.bf16.xpose.msra.mxu0 0
      %3539 = vmatprep.subr.bf16.mxu0 0
      %3540 = vmatpush1.bf16.xpose.msra.mxu0 0
      %3541 = vmatprep.subr.bf16.mxu0 0
      %3542 = vmatpush1.bf16.xpose.msra.mxu0 0
      %3543 = vmatprep.subr.bf16.mxu0 0
      %3544 = vmatpush1.bf16.xpose.msra.mxu0 0
      %3545 = vmatprep.subr.bf16.mxu0 0
      %3546 = vmatpush1.bf16.xpose.msra.mxu0 0
      %3547 = vmatprep.subr.bf16.mxu0 0
      %3548 = vmatpush1.bf16.xpose.msra.mxu0 0
      %3549 = vmatprep.subr.bf16.mxu0 0
      %3550 = vmatpush1.bf16.xpose.msra.mxu0 0
      %3551 = vmatprep.subr.bf16.mxu0 0
      %3552 = vmatpush1.bf16.xpose.msra.mxu0 0
      %3553 = vmatprep.subr.bf16.mxu0 0
      %3554 = vmatpush1.bf16.xpose.msra.mxu0 0
      %3555 = vmatprep.mubr.bf16.mxu0 0
      %3556 = vmatmul.mubr.bf16.gmra.mrb[0].mxu0 %v3518
      %v3557 = vpop.f32.mrb[0].mxu0
      %v3558 = vadd.f32 0.0, %v3557
      %v3559 = vpop.f32.mrb[0].mxu0
      %v3560 = vpop.f32.mrb[0].mxu0
      %v3561 = vpop.f32.mrb[0].mxu0
      %3562 = vdwg.mxu0
      %v3563 = vsel %vm1279, %v3420, -inf
      %3564 = vmax.xlane.f32.xlu0 %v3563
      %v3565 = vpop.xlane.xlu0 %3564
      %v3566 = vsel %vm1279, %v3466, -inf
      %3567 = vmax.xlane.f32.xlu0 %v3566
      %v3568 = vpop.xlane.xlu0 %3567
      %v3569 = vsel %vm1279, %v3512, -inf
      %3570 = vmax.xlane.f32.xlu0 %v3569
      %v3571 = vpop.xlane.xlu0 %3570
      %v3572 = vsel %vm1279, %v3558, -inf
      %3573 = vmax.xlane.f32.xlu0 %v3572
      %v3574 = vpop.xlane.xlu0 %3573
      %v3575 = vsub.f32 %v3420, %v3565
      %v3576 = vsub.f32 %v3466, %v3568
      %v3577 = vsub.f32 %v3512, %v3571
      %v3578 = vsub.f32 %v3558, %v3574
      %v3579 = vmul.f32 %v3575, 1.442695
      %v3580 = vpow.pop %v3579
      %v3581 = vmul.f32 %v3576, 1.442695
      %v3582 = vpow.pop %v3581
      %v3583 = vmul.f32 %v3577, 1.442695
      %v3584 = vpow.pop %v3583
      %v3585 = vmul.f32 %v3578, 1.442695
      %v3586 = vpow.pop %v3585
      %v3587 = vsel %vm1279, %v3580, 0.0
      %3588 = vadd.xlane.f32.xlu0 %v3587
      %v3589 = vpop.xlane.xlu0 %3588
      %v3590 = vsel %vm1279, %v3582, 0.0
      %3591 = vadd.xlane.f32.xlu0 %v3590
      %v3592 = vpop.xlane.xlu0 %3591
      %v3593 = vsel %vm1279, %v3584, 0.0
      %3594 = vadd.xlane.f32.xlu0 %v3593
      %v3595 = vpop.xlane.xlu0 %3594
      %v3596 = vsel %vm1279, %v3586, 0.0
      %3597 = vadd.xlane.f32.xlu0 %v3596
      %v3598 = vpop.xlane.xlu0 %3597
      %v3599 = vrcp.pop %v3589
      %v3600 = vrcp.pop %v3592
      %v3601 = vrcp.pop %v3595
      %v3602 = vrcp.pop %v3598
      %v3603 = vmul.f32 %v3580, %v3599
      %v3604 = vmul.f32 %v3582, %v3600
      %v3605 = vmul.f32 %v3584, %v3601
      %v3606 = vmul.f32 %v3586, %v3602
      %v3607 = vpack.c.bf16 %v3603, %v3603
      %v3608 = vpack.c.bf16 %v3604, %v3604
      %v3609 = vpack.c.bf16 %v3605, %v3605
      %v3610 = vpack.c.bf16 %v3606, %v3606
      %v3611 = vpack.c.bf16 %v3318, %v3315
      %v3612 = vpack.c.bf16 %v3356, %v3354
      %v3613 = vpack.c.bf16 %v3362, %v3360
      %v3614 = vpack.c.bf16 %v3368, %v3366
      %v3616 = vsel %vm1279, %v3607, 0
      %3618 = vmatprep.subr.bf16.mxu0 0
      %3619 = vmatpush1.bf16.msra.mxu0 %v3611
      %3620 = vmatprep.subr.bf16.mxu0 0
      %3621 = vmatpush1.bf16.msra.mxu0 0
      %3622 = vmatprep.subr.bf16.mxu0 0
      %3623 = vmatpush1.bf16.msra.mxu0 0
      %3624 = vmatprep.subr.bf16.mxu0 0
      %3625 = vmatpush1.bf16.msra.mxu0 0
      %3626 = vmatprep.subr.bf16.mxu0 0
      %3627 = vmatpush1.bf16.msra.mxu0 0
      %3628 = vmatprep.subr.bf16.mxu0 0
      %3629 = vmatpush1.bf16.msra.mxu0 0
      %3630 = vmatprep.subr.bf16.mxu0 0
      %3631 = vmatpush1.bf16.msra.mxu0 0
      %3632 = vmatprep.subr.bf16.mxu0 0
      %3633 = vmatpush1.bf16.msra.mxu0 0
      %3634 = vmatprep.subr.bf16.mxu0 0
      %3635 = vmatpush1.bf16.msra.mxu0 0
      %3636 = vmatprep.subr.bf16.mxu0 0
      %3637 = vmatpush1.bf16.msra.mxu0 0
      %3638 = vmatprep.subr.bf16.mxu0 0
      %3639 = vmatpush1.bf16.msra.mxu0 0
      %3640 = vmatprep.subr.bf16.mxu0 0
      %3641 = vmatpush1.bf16.msra.mxu0 0
      %3642 = vmatprep.subr.bf16.mxu0 0
      %3643 = vmatpush1.bf16.msra.mxu0 0
      %3644 = vmatprep.subr.bf16.mxu0 0
      %3645 = vmatpush1.bf16.msra.mxu0 0
      %3646 = vmatprep.subr.bf16.mxu0 0
      %3647 = vmatpush1.bf16.msra.mxu0 0
      %3648 = vmatprep.subr.bf16.mxu0 0
      %3649 = vmatpush1.bf16.msra.mxu0 0
      %3650 = vmatprep.mubr.bf16.mxu0 0
      %3651 = vmatmul.mubr.bf16.gmra.mrb[0].mxu0 %v3616
      %v3652 = vpop.f32.mrb[0].mxu0
      %v3653 = vadd.f32 0.0, %v3652
      %v3654 = vpop.f32.mrb[0].mxu0
      %v3655 = vpop.f32.mrb[0].mxu0
      %v3656 = vpop.f32.mrb[0].mxu0
      %3657 = vdwg.mxu0
      %v3659 = vsel %vm1279, %v3608, 0
      %3661 = vmatprep.subr.bf16.mxu0 0
      %3662 = vmatpush1.bf16.msra.mxu0 %v3612
      %3663 = vmatprep.subr.bf16.mxu0 0
      %3664 = vmatpush1.bf16.msra.mxu0 0
      %3665 = vmatprep.subr.bf16.mxu0 0
      %3666 = vmatpush1.bf16.msra.mxu0 0
      %3667 = vmatprep.subr.bf16.mxu0 0
      %3668 = vmatpush1.bf16.msra.mxu0 0
      %3669 = vmatprep.subr.bf16.mxu0 0
      %3670 = vmatpush1.bf16.msra.mxu0 0
      %3671 = vmatprep.subr.bf16.mxu0 0
      %3672 = vmatpush1.bf16.msra.mxu0 0
      %3673 = vmatprep.subr.bf16.mxu0 0
      %3674 = vmatpush1.bf16.msra.mxu0 0
      %3675 = vmatprep.subr.bf16.mxu0 0
      %3676 = vmatpush1.bf16.msra.mxu0 0
      %3677 = vmatprep.subr.bf16.mxu0 0
      %3678 = vmatpush1.bf16.msra.mxu0 0
      %3679 = vmatprep.subr.bf16.mxu0 0
      %3680 = vmatpush1.bf16.msra.mxu0 0
      %3681 = vmatprep.subr.bf16.mxu0 0
      %3682 = vmatpush1.bf16.msra.mxu0 0
      %3683 = vmatprep.subr.bf16.mxu0 0
      %3684 = vmatpush1.bf16.msra.mxu0 0
      %3685 = vmatprep.subr.bf16.mxu0 0
      %3686 = vmatpush1.bf16.msra.mxu0 0
      %3687 = vmatprep.subr.bf16.mxu0 0
      %3688 = vmatpush1.bf16.msra.mxu0 0
      %3689 = vmatprep.subr.bf16.mxu0 0
      %3690 = vmatpush1.bf16.msra.mxu0 0
      %3691 = vmatprep.subr.bf16.mxu0 0
      %3692 = vmatpush1.bf16.msra.mxu0 0
      %3693 = vmatprep.mubr.bf16.mxu0 0
      %3694 = vmatmul.mubr.bf16.gmra.mrb[0].mxu0 %v3659
      %v3695 = vpop.f32.mrb[0].mxu0
      %v3696 = vadd.f32 0.0, %v3695
      %v3697 = vpop.f32.mrb[0].mxu0
      %v3698 = vpop.f32.mrb[0].mxu0
      %v3699 = vpop.f32.mrb[0].mxu0
      %3700 = vdwg.mxu0
      %v3702 = vsel %vm1279, %v3609, 0
      %3704 = vmatprep.subr.bf16.mxu0 0
      %3705 = vmatpush1.bf16.msra.mxu0 %v3613
      %3706 = vmatprep.subr.bf16.mxu0 0
      %3707 = vmatpush1.bf16.msra.mxu0 0
      %3708 = vmatprep.subr.bf16.mxu0 0
      %3709 = vmatpush1.bf16.msra.mxu0 0
      %3710 = vmatprep.subr.bf16.mxu0 0
      %3711 = vmatpush1.bf16.msra.mxu0 0
      %3712 = vmatprep.subr.bf16.mxu0 0
      %3713 = vmatpush1.bf16.msra.mxu0 0
      %3714 = vmatprep.subr.bf16.mxu0 0
      %3715 = vmatpush1.bf16.msra.mxu0 0
      %3716 = vmatprep.subr.bf16.mxu0 0
      %3717 = vmatpush1.bf16.msra.mxu0 0
      %3718 = vmatprep.subr.bf16.mxu0 0
      %3719 = vmatpush1.bf16.msra.mxu0 0
      %3720 = vmatprep.subr.bf16.mxu0 0
      %3721 = vmatpush1.bf16.msra.mxu0 0
      %3722 = vmatprep.subr.bf16.mxu0 0
      %3723 = vmatpush1.bf16.msra.mxu0 0
      %3724 = vmatprep.subr.bf16.mxu0 0
      %3725 = vmatpush1.bf16.msra.mxu0 0
      %3726 = vmatprep.subr.bf16.mxu0 0
      %3727 = vmatpush1.bf16.msra.mxu0 0
      %3728 = vmatprep.subr.bf16.mxu0 0
      %3729 = vmatpush1.bf16.msra.mxu0 0
      %3730 = vmatprep.subr.bf16.mxu0 0
      %3731 = vmatpush1.bf16.msra.mxu0 0
      %3732 = vmatprep.subr.bf16.mxu0 0
      %3733 = vmatpush1.bf16.msra.mxu0 0
      %3734 = vmatprep.subr.bf16.mxu0 0
      %3735 = vmatpush1.bf16.msra.mxu0 0
      %3736 = vmatprep.mubr.bf16.mxu0 0
      %3737 = vmatmul.mubr.bf16.gmra.mrb[0].mxu0 %v3702
      %v3738 = vpop.f32.mrb[0].mxu0
      %v3739 = vadd.f32 0.0, %v3738
      %v3740 = vpop.f32.mrb[0].mxu0
      %v3741 = vpop.f32.mrb[0].mxu0
      %v3742 = vpop.f32.mrb[0].mxu0
      %3743 = vdwg.mxu0
      %v3745 = vsel %vm1279, %v3610, 0
      %3747 = vmatprep.subr.bf16.mxu0 0
      %3748 = vmatpush1.bf16.msra.mxu0 %v3614
      %3749 = vmatprep.subr.bf16.mxu0 0
      %3750 = vmatpush1.bf16.msra.mxu0 0
      %3751 = vmatprep.subr.bf16.mxu0 0
      %3752 = vmatpush1.bf16.msra.mxu0 0
      %3753 = vmatprep.subr.bf16.mxu0 0
      %3754 = vmatpush1.bf16.msra.mxu0 0
      %3755 = vmatprep.subr.bf16.mxu0 0
      %3756 = vmatpush1.bf16.msra.mxu0 0
      %3757 = vmatprep.subr.bf16.mxu0 0
      %3758 = vmatpush1.bf16.msra.mxu0 0
      %3759 = vmatprep.subr.bf16.mxu0 0
      %3760 = vmatpush1.bf16.msra.mxu0 0
      %3761 = vmatprep.subr.bf16.mxu0 0
      %3762 = vmatpush1.bf16.msra.mxu0 0
      %3763 = vmatprep.subr.bf16.mxu0 0
      %3764 = vmatpush1.bf16.msra.mxu0 0
      %3765 = vmatprep.subr.bf16.mxu0 0
      %3766 = vmatpush1.bf16.msra.mxu0 0
      %3767 = vmatprep.subr.bf16.mxu0 0
      %3768 = vmatpush1.bf16.msra.mxu0 0
      %3769 = vmatprep.subr.bf16.mxu0 0
      %3770 = vmatpush1.bf16.msra.mxu0 0
      %3771 = vmatprep.subr.bf16.mxu0 0
      %3772 = vmatpush1.bf16.msra.mxu0 0
      %3773 = vmatprep.subr.bf16.mxu0 0
      %3774 = vmatpush1.bf16.msra.mxu0 0
      %3775 = vmatprep.subr.bf16.mxu0 0
      %3776 = vmatpush1.bf16.msra.mxu0 0
      %3777 = vmatprep.subr.bf16.mxu0 0
      %3778 = vmatpush1.bf16.msra.mxu0 0
      %3779 = vmatprep.mubr.bf16.mxu0 0
      %3780 = vmatmul.mubr.bf16.gmra.mrb[0].mxu0 %v3745
      %v3781 = vpop.f32.mrb[0].mxu0
      %v3782 = vadd.f32 0.0, %v3781
      %v3783 = vpop.f32.mrb[0].mxu0
      %v3784 = vpop.f32.mrb[0].mxu0
      %v3785 = vpop.f32.mrb[0].mxu0
      %3786 = vdwg.mxu0
      %3788 = vrot.lane.b32.xlu0 %v3696, 8
      %v3789 = vpop.permute.xlu0 %3788
      %3792 = vrot.lane.b32.xlu0 %v3739, 16
      %v3793 = vpop.permute.xlu0 %3792
      %3796 = vrot.lane.b32.xlu0 %v3782, 24
      %v3797 = vpop.permute.xlu0 %3796
      %v3799 = vsel %vm844, %v3653, %v3789
      %v3800 = vsel %vm1279, %v3799, %v3793
      %v3801 = vsel %vm1281, %v3800, %v3797
      %v3802 = vpack.c.bf16 %v3801, %v3801
      %v3803 = vld [vmem:[%s10] sm:$0xf]
      %v3804 = vld [vmem:[%s10 + $0x4] sm:$0xf]
      %v3805 = vld [vmem:[%s10 + $0x8] sm:$0xf]
      %v3806 = vld [vmem:[%s10 + $0xc] sm:$0xf]
      %v3807 = vld [vmem:[%s2073] sm:$0x1]
      %v3809 = vlaneseq
      %v3810 = vshrl.u32 %v3809, 7
      %v3811 = vsub.s32 0, %v3810
      %v3812 = vrot.slane %v3807, %v3811
      %v3818 = vunpack.c.l.b16 %v3803
      %v3819 = vunpack.c.l.b16 %v3804
      %v3820 = vunpack.c.l.b16 %v3805
      %v3821 = vunpack.c.l.b16 %v3806
      %v3822 = vpack.c.b16 %v3819, %v3818
      %v3823 = vpack.c.b16 %v3821, %v3820
      %v3827 = vsel %vm579, %v3802, 0
      %3829 = vmatprep.subr.bf16.mxu0 0
      %3830 = vmatpush1.bf16.msra.mxu0 %v3822
      %3831 = vmatprep.subr.bf16.mxu0 0
      %3832 = vmatpush1.bf16.msra.mxu0 %v3823
      %3833 = vmatprep.subr.bf16.mxu0 0
      %3834 = vmatpush1.bf16.msra.mxu0 0
      %3835 = vmatprep.subr.bf16.mxu0 0
      %3836 = vmatpush1.bf16.msra.mxu0 0
      %3837 = vmatprep.subr.bf16.mxu0 0
      %3838 = vmatpush1.bf16.msra.mxu0 0
      %3839 = vmatprep.subr.bf16.mxu0 0
      %3840 = vmatpush1.bf16.msra.mxu0 0
      %3841 = vmatprep.subr.bf16.mxu0 0
      %3842 = vmatpush1.bf16.msra.mxu0 0
      %3843 = vmatprep.subr.bf16.mxu0 0
      %3844 = vmatpush1.bf16.msra.mxu0 0
      %3845 = vmatprep.subr.bf16.mxu0 0
      %3846 = vmatpush1.bf16.msra.mxu0 0
      %3847 = vmatprep.subr.bf16.mxu0 0
      %3848 = vmatpush1.bf16.msra.mxu0 0
      %3849 = vmatprep.subr.bf16.mxu0 0
      %3850 = vmatpush1.bf16.msra.mxu0 0
      %3851 = vmatprep.subr.bf16.mxu0 0
      %3852 = vmatpush1.bf16.msra.mxu0 0
      %3853 = vmatprep.subr.bf16.mxu0 0
      %3854 = vmatpush1.bf16.msra.mxu0 0
      %3855 = vmatprep.subr.bf16.mxu0 0
      %3856 = vmatpush1.bf16.msra.mxu0 0
      %3857 = vmatprep.subr.bf16.mxu0 0
      %3858 = vmatpush1.bf16.msra.mxu0 0
      %3859 = vmatprep.subr.bf16.mxu0 0
      %3860 = vmatpush1.bf16.msra.mxu0 0
      %3861 = vmatprep.mubr.bf16.mxu0 0
      %3862 = vmatmul.mubr.bf16.gmra.mrb[0].mxu0 %v3827
      %v3863 = vpop.f32.mrb[0].mxu0
      %v3864 = vadd.f32 %v3812, %v3863
      %v3865 = vpop.f32.mrb[0].mxu0
      %v3866 = vpop.f32.mrb[0].mxu0
      %v3867 = vpop.f32.mrb[0].mxu0
      %3868 = vdwg.mxu0
      %v3869 = vadd.f32 %v3089, %v3864
      %v3870 = vld [vmem:[%s4 + $0x4] sm:$0x1]
      %v3871 = vld [vmem:[%s4 + $0x5] sm:$0x1]
      %v3872 = vsel %vm579, %v3869, 0.0
      %3873 = vadd.xlane.f32.xlu0 %v3872
      %v3874 = vpop.xlane.xlu0 %3873
      %v3875 = vmul.f32 %v3874, %v583
      %v3876 = vsub.f32 %v3869, %v3875
      %v3877 = vmul.f32 %v3876, %v3876
      %v3878 = vsel %vm579, %v3877, 0.0
      %3879 = vadd.xlane.f32.xlu0 %v3878
      %v3880 = vpop.xlane.xlu0 %3879
      %v3881 = vmul.f32 %v3880, %v583
      %v3882 = vadd.f32 %v3881, 1e-05
      %v3883 = vrsqrt.pop %v3882
      %v3884 = vmul.f32 %v3876, %v3883
      %v3885 = vlaneseq
      %v3886 = vshrl.u32 %v3885, 7
      %v3887 = vsub.s32 0, %v3886
      %v3888 = vrot.slane %v3870, %v3887
      %v3889 = vmul.f32 %v3884, %v3888
      %v3890 = vlaneseq
      %v3891 = vshrl.u32 %v3890, 7
      %v3892 = vsub.s32 0, %v3891
      %v3893 = vrot.slane %v3871, %v3892
      %v3894 = vadd.f32 %v3889, %v3893
      %v3895 = vpack.c.bf16 %v3894, %v3894
      %v3896 = vld [vmem:[%s11] sm:$0xf]
      %v3897 = vld [vmem:[%s11 + $0x4] sm:$0xf]
      %v3898 = vld [vmem:[%s11 + $0x8] sm:$0xf]
      %v3899 = vld [vmem:[%s11 + $0xc] sm:$0xf]
      %v3900 = vld [vmem:[%s12] sm:$0x1]
      %v3902 = vlaneseq
      %v3903 = vshrl.u32 %v3902, 7
      %v3904 = vsub.s32 0, %v3903
      %v3905 = vrot.slane %v3900, %v3904
      %v3911 = vunpack.c.l.b16 %v3896
      %v3912 = vunpack.c.l.b16 %v3897
      %v3913 = vunpack.c.l.b16 %v3898
      %v3914 = vunpack.c.l.b16 %v3899
      %v3915 = vpack.c.b16 %v3912, %v3911
      %v3916 = vpack.c.b16 %v3914, %v3913
      %v3920 = vsel %vm579, %v3895, 0
      %3922 = vmatprep.subr.bf16.mxu0 0
      %3923 = vmatpush1.bf16.msra.mxu0 %v3915
      %3924 = vmatprep.subr.bf16.mxu0 0
      %3925 = vmatpush1.bf16.msra.mxu0 %v3916
      %3926 = vmatprep.subr.bf16.mxu0 0
      %3927 = vmatpush1.bf16.msra.mxu0 0
      %3928 = vmatprep.subr.bf16.mxu0 0
      %3929 = vmatpush1.bf16.msra.mxu0 0
      %3930 = vmatprep.subr.bf16.mxu0 0
      %3931 = vmatpush1.bf16.msra.mxu0 0
      %3932 = vmatprep.subr.bf16.mxu0 0
      %3933 = vmatpush1.bf16.msra.mxu0 0
      %3934 = vmatprep.subr.bf16.mxu0 0
      %3935 = vmatpush1.bf16.msra.mxu0 0
      %3936 = vmatprep.subr.bf16.mxu0 0
      %3937 = vmatpush1.bf16.msra.mxu0 0
      %3938 = vmatprep.subr.bf16.mxu0 0
      %3939 = vmatpush1.bf16.msra.mxu0 0
      %3940 = vmatprep.subr.bf16.mxu0 0
      %3941 = vmatpush1.bf16.msra.mxu0 0
      %3942 = vmatprep.subr.bf16.mxu0 0
      %3943 = vmatpush1.bf16.msra.mxu0 0
      %3944 = vmatprep.subr.bf16.mxu0 0
      %3945 = vmatpush1.bf16.msra.mxu0 0
      %3946 = vmatprep.subr.bf16.mxu0 0
      %3947 = vmatpush1.bf16.msra.mxu0 0
      %3948 = vmatprep.subr.bf16.mxu0 0
      %3949 = vmatpush1.bf16.msra.mxu0 0
      %3950 = vmatprep.subr.bf16.mxu0 0
      %3951 = vmatpush1.bf16.msra.mxu0 0
      %3952 = vmatprep.subr.bf16.mxu0 0
      %3953 = vmatpush1.bf16.msra.mxu0 0
      %3954 = vmatprep.mubr.bf16.mxu0 0
      %3955 = vmatmul.mubr.bf16.gmra.mrb[0].mxu0 %v3920
      %v3956 = vpop.f32.mrb[0].mxu0
      %v3957 = vadd.f32 %v3905, %v3956
      %v3958 = vpop.f32.mrb[0].mxu0
      %v3959 = vpop.f32.mrb[0].mxu0
      %v3960 = vpop.f32.mrb[0].mxu0
      %3961 = vdwg.mxu0
      %v3962 = vmax.f32 %v3957, 0.0
      %v3963 = vpack.c.bf16 %v3962, %v3962
      %v3964 = vld [vmem:[%s13] sm:$0xf]
      %v3965 = vld [vmem:[%s13 + $0x4] sm:$0xf]
      %v3966 = vld [vmem:[%s13 + $0x8] sm:$0xf]
      %v3967 = vld [vmem:[%s13 + $0xc] sm:$0xf]
      %v3968 = vld [vmem:[%s13 + $0x10] sm:$0xf]
      %v3969 = vld [vmem:[%s13 + $0x14] sm:$0xf]
      %v3970 = vld [vmem:[%s13 + $0x18] sm:$0xf]
      %v3971 = vld [vmem:[%s13 + $0x1c] sm:$0xf]
      %v3972 = vld [vmem:[%s14] sm:$0x1]
      %v3974 = vlaneseq
      %v3975 = vshrl.u32 %v3974, 7
      %v3976 = vsub.s32 0, %v3975
      %v3977 = vrot.slane %v3972, %v3976
      %v3987 = vunpack.c.l.b16 %v3964
      %v3988 = vunpack.c.l.b16 %v3965
      %v3989 = vunpack.c.l.b16 %v3966
      %v3990 = vunpack.c.l.b16 %v3967
      %v3991 = vunpack.c.l.b16 %v3968
      %v3992 = vunpack.c.l.b16 %v3969
      %v3993 = vunpack.c.l.b16 %v3970
      %v3994 = vunpack.c.l.b16 %v3971
      %v3995 = vpack.c.b16 %v3988, %v3987
      %v3996 = vpack.c.b16 %v3990, %v3989
      %v3997 = vpack.c.b16 %v3992, %v3991
      %v3998 = vpack.c.b16 %v3994, %v3993
      %v4004 = vsel %vm2270, %v3963, 0
      %4006 = vmatprep.subr.bf16.mxu0 0
      %4007 = vmatpush1.bf16.msra.mxu0 %v3995
      %4008 = vmatprep.subr.bf16.mxu0 0
      %4009 = vmatpush1.bf16.msra.mxu0 %v3996
      %4010 = vmatprep.subr.bf16.mxu0 0
      %4011 = vmatpush1.bf16.msra.mxu0 %v3997
      %4012 = vmatprep.subr.bf16.mxu0 0
      %4013 = vmatpush1.bf16.msra.mxu0 %v3998
      %4014 = vmatprep.subr.bf16.mxu0 0
      %4015 = vmatpush1.bf16.msra.mxu0 0
      %4016 = vmatprep.subr.bf16.mxu0 0
      %4017 = vmatpush1.bf16.msra.mxu0 0
      %4018 = vmatprep.subr.bf16.mxu0 0
      %4019 = vmatpush1.bf16.msra.mxu0 0
      %4020 = vmatprep.subr.bf16.mxu0 0
      %4021 = vmatpush1.bf16.msra.mxu0 0
      %4022 = vmatprep.subr.bf16.mxu0 0
      %4023 = vmatpush1.bf16.msra.mxu0 0
      %4024 = vmatprep.subr.bf16.mxu0 0
      %4025 = vmatpush1.bf16.msra.mxu0 0
      %4026 = vmatprep.subr.bf16.mxu0 0
      %4027 = vmatpush1.bf16.msra.mxu0 0
      %4028 = vmatprep.subr.bf16.mxu0 0
      %4029 = vmatpush1.bf16.msra.mxu0 0
      %4030 = vmatprep.subr.bf16.mxu0 0
      %4031 = vmatpush1.bf16.msra.mxu0 0
      %4032 = vmatprep.subr.bf16.mxu0 0
      %4033 = vmatpush1.bf16.msra.mxu0 0
      %4034 = vmatprep.subr.bf16.mxu0 0
      %4035 = vmatpush1.bf16.msra.mxu0 0
      %4036 = vmatprep.subr.bf16.mxu0 0
      %4037 = vmatpush1.bf16.msra.mxu0 0
      %4038 = vmatprep.mubr.bf16.mxu0 0
      %4039 = vmatmul.mubr.bf16.gmra.mrb[0].mxu0 %v4004
      %v4040 = vpop.f32.mrb[0].mxu0
      %v4041 = vadd.f32 %v3977, %v4040
      %v4042 = vpop.f32.mrb[0].mxu0
      %v4043 = vpop.f32.mrb[0].mxu0
      %v4044 = vpop.f32.mrb[0].mxu0
      %4045 = vdwg.mxu0
      %v4046 = vadd.f32 %v4041, %v3869
      %s4047 = scalar_lea.vmem %s568, 8
      %4048 = vst.msk [vmem:[%s4047] sm:$0xff] %vm579, %v4046
      %s4049 = smul.u32 2, %s26
      %p4050 = scmp.lt.s32.totalorder %s4049, 3
      %s4051 = scalar_select %p4050, %s4049, 3
      %s4052 = smul.addr %s4051, 8
      %s4053 = scalar_lea.vmem %s15, %s4052
      // Predicated region
      $region81: #{decoder_layer_forward.1} parent=79 // pred_check
        %p4054 = pneg %p379
      $region82: #{decoder_layer_forward.1} parent=79 // pred_check_branch
        %4056 = sbr.rel (%p4054) target = $region84
      $region83: #{decoder_layer_forward.1} parent=79 // pred_region
        %s4057 = smul.u32 2, %s26
      $region84: #{decoder_layer_forward.1} parent=79 // pred_fallthru
        _
    $region80: #{decoder_layer_forward.1} parent=5 // pred_fallthru
      _
    %p4058 = scmp.le.s32.totalorder 2, %s21
    // Predicated region
    $region85: #{decoder_layer_forward.1} parent=5 // pred_check
      %p4059 = pneg %p4058
    $region86: #{decoder_layer_forward.1} parent=5 // pred_check_branch
      %4061 = sbr.rel (%p4059) target = $region88
    $region87: #{decoder_layer_forward.1} parent=5 // pred_region
      %s4062 = ssub.s32 %s21, 2
      // Predicated region
      $region89: #{decoder_layer_forward.1} parent=87 // pred_check
        %p4063 = pneg %p385
      $region90: #{decoder_layer_forward.1} parent=87 // pred_check_branch
        %4065 = sbr.rel (%p4063) target = $region92
      $region91: #{decoder_layer_forward.1} parent=87 // pred_region
        %s4066 = smul.u32 2, %s27
        %p4067 = scmp.lt.s32.totalorder %s4066, 3
        %s4068 = scalar_select %p4067, %s4066, 3
        %s4069 = smul.addr %s4068, 8
        %s4070 = scalar_lea.vmem %s15, %s4069
      $region92: #{decoder_layer_forward.1} parent=87 // pred_fallthru
        _
    $region88: #{decoder_layer_forward.1} parent=5 // pred_fallthru
      _
  $region6: #{decoder_layer_forward.1} parent=0 // loop_footer
    %s25 = sadd.s32 1, %s21
  $region7: #{decoder_layer_forward.1} parent=0 // loop_footer_branch
    %20 = sbr.rel target = $region3
  $region8: #{decoder_layer_forward.1} parent=0 // loop_exit
    _

</llo_original>
